<compile_context>
chip_gen: v7x
topology: tpu7x:2x2x1
jax: 0.10.0
libtpu: 0.0.40
codegen_flags: <defaults>
</compile_context>

<pallas_src>
import functools

import jax
import jax.numpy as jnp
from jax.experimental import pallas as pl
from jax.experimental.pallas import tpu as pltpu

BN_EPS = 1e-5
KSIZE = 4  # deconv kernel size (stride=2, padding=1)


def _round_up(x, m):
    return (x + m - 1) // m * m


def _pick_tile_m(m_padded, *, cap=512, split_threshold=256):
    """M-tile: grid=(1,) for small layers; >=2 steps for large layers so the
    'parallel' grid axis can be sharded across v7x's two TensorCores."""
    if m_padded < split_threshold:
        return m_padded
    return min(cap, _round_up((m_padded + 1) // 2, 8))


def _vmem_limit(need_bytes):
    """Actual buffer need + 2x headroom, clamped to [16 MiB, 96 MiB]."""
    return int(min(96 * 1024 * 1024, max(16 * 1024 * 1024, 2 * need_bytes)))


# ----------------------------------------------------------------------------
# Pallas kernel 1: fused (A @ W) + bias, optional ReLU epilogue
# ----------------------------------------------------------------------------
def _matmul_bias_act_kernel(a_ref, b_ref, c_ref, o_ref, *, activation):
    acc = jnp.dot(a_ref[...], b_ref[...], preferred_element_type=jnp.float32)
    acc = acc + c_ref[...]                      # (1, Np) bias broadcast over rows
    if activation == "relu":
        acc = jnp.maximum(acc, 0.0)
    o_ref[...] = acc.astype(o_ref.dtype)


def fused_matmul(a, w_p, b_p, *, n_real, activation="none", out_dtype=jnp.float32):
    """a: (M, K) activations; w_p: (Kp, Np) bf16 PRE-padded weight;
    b_p: (1, Np) f32 PRE-padded bias.  Returns (M, n_real)."""
    M, K = a.shape
    Kp, Np = w_p.shape
    assert K <= Kp and n_real <= Np
    Mp8 = _round_up(max(M, 8), 8)
    tm = _pick_tile_m(Mp8)
    Mp = _round_up(Mp8, tm)

    a_p = jnp.pad(a.astype(jnp.bfloat16), ((0, Mp - M), (0, Kp - K)))
    out_itemsize = jnp.dtype(out_dtype).itemsize
    need = (2 * tm * Kp * 2            # double-buffered bf16 activation tiles
            + Kp * Np * 2 + Np * 4     # resident weight + bias
            + 2 * tm * Np * out_itemsize)

    # NOTE: pipeline_mode=pl.Buffered(3) on the activation spec is only worth it
    # for large-batch im2col streams; at these sizes two buffers suffice.
    kernel = functools.partial(_matmul_bias_act_kernel, activation=activation)
    out = pl.pallas_call(
        kernel,
        out_shape=jax.ShapeDtypeStruct((Mp, Np), out_dtype),
        grid=(Mp // tm,),
        in_specs=[
            pl.BlockSpec((tm, Kp), lambda i: (i, 0)),   # activations: streamed over M
            pl.BlockSpec((Kp, Np), lambda i: (0, 0)),   # weight: resident
            pl.BlockSpec((1, Np), lambda i: (0, 0)),    # bias: resident
        ],
        out_specs=pl.BlockSpec((tm, Np), lambda i: (i, 0)),
        compiler_params=pltpu.CompilerParams(
            dimension_semantics=("parallel",),          # shard M across TCs (v7x)
            vmem_limit_bytes=_vmem_limit(need),
        ),
        cost_estimate=pl.CostEstimate(
            flops=2 * Mp * Np * Kp,
            transcendentals=0,
            bytes_accessed=Mp * Kp * 2 + Kp * Np * 2 + Np * 4 + Mp * Np * out_itemsize,
        ),
    )(a_p, w_p, b_p)
    return out[:M, :n_real]


# ----------------------------------------------------------------------------
# Pallas kernel 2: fused fc1 -> fc2 (hidden activation never leaves VMEM)
# ----------------------------------------------------------------------------
def _fc_fused_kernel(x_ref, w1_ref, b1_ref, w2_ref, b2_ref, o_ref):
    h = jnp.dot(x_ref[...], w1_ref[...], preferred_element_type=jnp.float32)
    h = (h + b1_ref[...]).astype(jnp.bfloat16)
    y = jnp.dot(h, w2_ref[...], preferred_element_type=jnp.float32)
    o_ref[...] = (y + b2_ref[...]).astype(o_ref.dtype)


def fused_fc1_fc2(z, w1_p, b1_p, w2_p, b2_p, n_out):
    """(z @ w1 + b1) @ w2 + b2 without writing the hidden layer to HBM.
    Weights/biases are pre-padded + pre-cast at init."""
    M, K1 = z.shape
    K1p, Hh = w1_p.shape
    _, Np = w2_p.shape
    Mp8 = _round_up(max(M, 8), 8)
    tm = _pick_tile_m(Mp8)
    Mp = _round_up(Mp8, tm)

    x_p = jnp.pad(z.astype(jnp.bfloat16), ((0, Mp - M), (0, K1p - K1)))
    need = (2 * tm * K1p * 2                    # double-buffered input tiles
            + K1p * Hh * 2 + Hh * 4             # resident w1 + b1
            + Hh * Np * 2 + Np * 4              # resident w2 + b2
            + tm * Hh * 4                       # hidden activation (f32, in VMEM)
            + 2 * tm * Np * 4)                  # output tiles

    out = pl.pallas_call(
        _fc_fused_kernel,
        out_shape=jax.ShapeDtypeStruct((Mp, Np), jnp.float32),
        grid=(Mp // tm,),
        in_specs=[
            pl.BlockSpec((tm, K1p), lambda i: (i, 0)),
            pl.BlockSpec((K1p, Hh), lambda i: (0, 0)),
            pl.BlockSpec((1, Hh), lambda i: (0, 0)),
            pl.BlockSpec((Hh, Np), lambda i: (0, 0)),
            pl.BlockSpec((1, Np), lambda i: (0, 0)),
        ],
        out_specs=pl.BlockSpec((tm, Np), lambda i: (i, 0)),
        compiler_params=pltpu.CompilerParams(
            dimension_semantics=("parallel",),
            vmem_limit_bytes=_vmem_limit(need),
        ),
        cost_estimate=pl.CostEstimate(
            flops=2 * Mp * Hh * K1p + 2 * Mp * Np * Hh,
            transcendentals=0,
            bytes_accessed=(Mp * K1p * 2 + K1p * Hh * 2 + Hh * 4
                            + Hh * Np * 2 + Np * 4 + Mp * Np * 4),
        ),
    )(x_p, w1_p, b1_p, w2_p, b2_p)
    return out[:M, :n_out]


# ----------------------------------------------------------------------------
# Sub-pixel (4-phase) ConvTranspose2d(k=4, s=2, p=1): 2x2 windows of the
# 1-padded input -> one fused matmul -> depth-to-space interleave + crop.
#
# Derivation: out[2a-1+rh_ofs...] — for window a over padded rows {a, a+1}
# (i.e. input rows {a-1, a}), output row 2a-1 (rh=0) uses kernel rows (2, 0)
# and output row 2a (rh=1) uses kernel rows (3, 1):   kh = 2 + rh - 2*dh.
# ----------------------------------------------------------------------------
def deconv_subpixel(x_nhwc, w_p, b_p, cout, *, activation, out_dtype):
    N, H, W, C = x_nhwc.shape
    xp = jnp.pad(x_nhwc.astype(jnp.bfloat16), ((0, 0), (1, 1), (1, 1), (0, 0)))
    Hw, Ww = H + 1, W + 1
    # cols[(n,a,b), (dh,dw,ci)] = xp[n, a+dh, b+dw, ci]
    patches = [xp[:, dh:dh + Hw, dw:dw + Ww, :] for dh in (0, 1) for dw in (0, 1)]
    cols = jnp.stack(patches, axis=3).reshape(N * Hw * Ww, 4 * C)
    y = fused_matmul(cols, w_p, b_p, n_real=4 * cout,
                     activation=activation, out_dtype=out_dtype)
    # depth-to-space: columns are ordered (rh, rw, co)
    y = y.reshape(N, Hw, Ww, 2, 2, cout)
    y = jnp.transpose(y, (0, 1, 3, 2, 4, 5)).reshape(N, 2 * Hw, 2 * Ww, cout)
    return y[:, 1:2 * H + 1, 1:2 * W + 1, :]        # crop the boundary phases


# ----------------------------------------------------------------------------
# Parameter init (deterministic, synthetic). Weight reshape for the sub-pixel
# matmul, BN folding, bf16 cast and lane padding all happen HERE (once).
# ----------------------------------------------------------------------------
def init_params(key, z_size, conv_dim):
    params = {}
    C8 = conv_dim * 8
    n_fc_out = 2 * 2 * C8

    key, k1, k1b, k2, k2b = jax.random.split(key, 5)
    fc1_w = jax.random.normal(k1, (z_size, 2048), jnp.float32) / jnp.sqrt(z_size)
    fc1_b = 0.01 * jax.random.normal(k1b, (2048,), jnp.float32)
    fc2_w = jax.random.normal(k2, (2048, n_fc_out), jnp.float32) / jnp.sqrt(2048.0)
    fc2_b = 0.01 * jax.random.normal(k2b, (n_fc_out,), jnp.float32)

    K1p = _round_up(z_size, 128)
    Np_fc = _round_up(n_fc_out, 128)
    params["fc"] = dict(
        w1=jnp.pad(fc1_w, ((0, K1p - z_size), (0, 0))).astype(jnp.bfloat16),
        b1=fc1_b.reshape(1, 2048).astype(jnp.float32),
        w2=jnp.pad(fc2_w, ((0, 0), (0, Np_fc - n_fc_out))).astype(jnp.bfloat16),
        b2=jnp.pad(fc2_b.reshape(1, n_fc_out),
                   ((0, 0), (0, Np_fc - n_fc_out))).astype(jnp.float32),
    )

    deconv_cfg = [
        ("t_conv1", C8, conv_dim * 4, True),
        ("t_conv2", conv_dim * 4, conv_dim * 2, True),
        ("t_conv3", conv_dim * 2, conv_dim, True),
        ("t_conv4", conv_dim, 3, False),
    ]
    kidx = jnp.array([[2, 3], [0, 1]], dtype=jnp.int32)   # [dh, rh] -> kh = 2+rh-2*dh
    for name, cin, cout, has_bn in deconv_cfg:
        key, kw_, kg, kb = jax.random.split(key, 4)
        # PyTorch ConvTranspose2d weight layout: (Cin, Cout, kh, kw), bias=False.
        w_t = jax.random.normal(kw_, (cin, cout, KSIZE, KSIZE), jnp.float32)
        w_t = w_t / jnp.sqrt(cin * KSIZE * KSIZE)
        # Sub-pixel matmul weight: W[(dh,dw,ci),(rh,rw,co)] = w_t[ci,co,2+rh-2dh,2+rw-2dw]
        w_sub = w_t[:, :, kidx, :]          # (ci, co, dh, rh, kw)
        w_sub = w_sub[:, :, :, :, kidx]     # (ci, co, dh, rh, dw, rw)
        w_mat = jnp.transpose(w_sub, (2, 4, 0, 3, 5, 1)).reshape(4 * cin, 4 * cout)
        if has_bn:
            gamma = 1.0 + 0.1 * jax.random.normal(kg, (cout,), jnp.float32)
            beta = 0.1 * jax.random.normal(kb, (cout,), jnp.float32)
            running_mean = jnp.zeros((cout,), jnp.float32)
            running_var = jnp.ones((cout,), jnp.float32)
            scale = gamma / jnp.sqrt(running_var + BN_EPS)
            shift = beta - running_mean * scale
            w_mat = w_mat * jnp.tile(scale, 4)[None, :]   # fold BN scale (per co, x4 phases)
            bias = jnp.tile(shift, 4)
        else:
            bias = jnp.zeros((4 * cout,), jnp.float32)
        Kp = _round_up(4 * cin, 128)
        Np = _round_up(4 * cout, 128)
        params[name] = dict(
            w=jnp.pad(w_mat, ((0, Kp - 4 * cin), (0, Np - 4 * cout))).astype(jnp.bfloat16),
            b=jnp.pad(bias.reshape(1, 4 * cout),
                      ((0, 0), (0, Np - 4 * cout))).astype(jnp.float32),
        )
    return params


# ----------------------------------------------------------------------------
# Forward pass (matches Generator.forward)
# ----------------------------------------------------------------------------
def generator_forward(params, z, *, conv_dim):
    N = z.shape[0]
    C8 = conv_dim * 8
    fc = params["fc"]
    # fc1 -> fc2 (no activation between them in the reference forward), fused.
    h = fused_fc1_fc2(z, fc["w1"], fc["b1"], fc["w2"], fc["b2"], n_out=2 * 2 * C8)
    x = h.reshape(N, C8, 2, 2)             # PyTorch .view(-1, C8, 2, 2) (NCHW order)
    x = jnp.transpose(x, (0, 2, 3, 1))     # -> NHWC

    layer_cfg = [("t_conv1", conv_dim * 4, "relu", jnp.bfloat16),
                 ("t_conv2", conv_dim * 2, "relu", jnp.bfloat16),
                 ("t_conv3", conv_dim, "relu", jnp.bfloat16),
                 ("t_conv4", 3, "none", jnp.float32)]
    for name, cout, act, out_dtype in layer_cfg:
        layer = params[name]
        x = deconv_subpixel(x, layer["w"], layer["b"], cout,
                            activation=act, out_dtype=out_dtype)

    x = jnp.tanh(x)                        # tanh on the real (N, 32, 32, 3) slab
    return jnp.transpose(x, (0, 3, 1, 2))  # NCHW: (N, 3, 32, 32) in [-1, 1]


if __name__ == "__main__":
    z_size = 32
    conv_dim = 8          # depth of the input to the *last* deconv layer
    batch = 2

    key = jax.random.PRNGKey(0)
    kp, kz = jax.random.split(key)
    params = init_params(kp, z_size, conv_dim)
    z = jax.random.normal(kz, (batch, z_size), jnp.float32)

    fwd = jax.jit(functools.partial(generator_forward, conv_dim=conv_dim))
    out = fwd(params, z)
    out = jax.block_until_ready(out)

    assert out.shape == (batch, 3, 32, 32), out.shape
    assert bool(jnp.all(jnp.isfinite(out))), "non-finite output"
    assert bool(jnp.all(jnp.abs(out) <= 1.0 + 1e-5)), "tanh range violated"
    print("KERNEL_OK")
</pallas_src>

<mosaic_0001>
module attributes {stable_mosaic.version = 11 : i64} {
  func.func @_fc_fused_kernel(%arg0: i32, %arg1: memref<8x128xbf16, #tpu.memory_space<vmem>>, %arg2: memref<128x2048xbf16, #tpu.memory_space<vmem>>, %arg3: memref<1x2048xf32, #tpu.memory_space<vmem>>, %arg4: memref<2048x256xbf16, #tpu.memory_space<vmem>>, %arg5: memref<1x256xf32, #tpu.memory_space<vmem>>, %arg6: memref<8x256xf32, #tpu.memory_space<vmem>>) attributes {dimension_semantics = [#tpu.dimension_semantics<parallel>], iteration_bounds = array<i64: 1>, scalar_prefetch = 0 : i64, scratch_operands = 0 : i64, tpu.core_type = #tpu.core_type<tc>, window_params = [{transform_indices = @transform_0, window_bounds = array<i64: 8, 128>}, {pipeline_mode = #tpu.pipeline_mode<synchronous>, transform_indices = @transform_1, window_bounds = array<i64: 128, 2048>}, {pipeline_mode = #tpu.pipeline_mode<synchronous>, transform_indices = @transform_2, window_bounds = array<i64: 1, 2048>}, {pipeline_mode = #tpu.pipeline_mode<synchronous>, transform_indices = @transform_3, window_bounds = array<i64: 2048, 256>}, {pipeline_mode = #tpu.pipeline_mode<synchronous>, transform_indices = @transform_4, window_bounds = array<i64: 1, 256>}, {transform_indices = @transform_5, window_bounds = array<i64: 8, 256>}]} {
    %c0 = arith.constant 0 : index
    %c0_0 = arith.constant 0 : index
    %0 = vector.load %arg1[%c0, %c0_0] : memref<8x128xbf16, #tpu.memory_space<vmem>>, vector<8x128xbf16>
    %c0_1 = arith.constant 0 : index
    %c0_2 = arith.constant 0 : index
    %1 = vector.load %arg2[%c0_1, %c0_2] : memref<128x2048xbf16, #tpu.memory_space<vmem>>, vector<128x2048xbf16>
    %cst = arith.constant dense<0.000000e+00> : vector<8x2048xf32>
    %2 = tpu.matmul %0, %1, %cst {dimension_numbers = #tpu.dot_dimension_numbers<[1], [0], [0], [1], [0, 0, 1, 1], [], []>} : vector<8x128xbf16>, vector<128x2048xbf16>, vector<8x2048xf32> -> vector<8x2048xf32>
    %c0_3 = arith.constant 0 : index
    %c0_4 = arith.constant 0 : index
    %3 = vector.load %arg3[%c0_3, %c0_4] : memref<1x2048xf32, #tpu.memory_space<vmem>>, vector<1x2048xf32>
    %4 = vector.broadcast %3 : vector<1x2048xf32> to vector<8x2048xf32>
    %5 = arith.addf %2, %4 : vector<8x2048xf32>
    %6 = arith.truncf %5 : vector<8x2048xf32> to vector<8x2048xbf16>
    %c0_5 = arith.constant 0 : index
    %c0_6 = arith.constant 0 : index
    %7 = vector.load %arg4[%c0_5, %c0_6] : memref<2048x256xbf16, #tpu.memory_space<vmem>>, vector<2048x256xbf16>
    %cst_7 = arith.constant dense<0.000000e+00> : vector<8x256xf32>
    %8 = tpu.matmul %6, %7, %cst_7 {dimension_numbers = #tpu.dot_dimension_numbers<[1], [0], [0], [1], [0, 0, 1, 1], [], []>} : vector<8x2048xbf16>, vector<2048x256xbf16>, vector<8x256xf32> -> vector<8x256xf32>
    %c0_8 = arith.constant 0 : index
    %c0_9 = arith.constant 0 : index
    %9 = vector.load %arg5[%c0_8, %c0_9] : memref<1x256xf32, #tpu.memory_space<vmem>>, vector<1x256xf32>
    %10 = vector.broadcast %9 : vector<1x256xf32> to vector<8x256xf32>
    %11 = arith.addf %8, %10 : vector<8x256xf32>
    %c0_10 = arith.constant 0 : index
    %c0_11 = arith.constant 0 : index
    %12 = vector.load %arg6[%c0_10, %c0_11] : memref<8x256xf32, #tpu.memory_space<vmem>>, vector<8x256xf32>
    tpu.vector_store %arg6[%c0_10, %c0_11], %11 {strides = array<i32>} : memref<8x256xf32, #tpu.memory_space<vmem>>, vector<8x256xf32>,
    return
  }
  func.func @transform_0(%arg0: i32) -> (i32, i32) {
    %c0_i32 = arith.constant 0 : i32
    %c0_i32_0 = arith.constant 0 : i32
    return %arg0, %c0_i32 : i32, i32
  }
  func.func @transform_1(%arg0: i32) -> (i32, i32) {
    %c0_i32 = arith.constant 0 : i32
    %c0_i32_0 = arith.constant 0 : i32
    %c0_i32_1 = arith.constant 0 : i32
    return %c0_i32, %c0_i32_0 : i32, i32
  }
  func.func @transform_2(%arg0: i32) -> (i32, i32) {
    %c0_i32 = arith.constant 0 : i32
    %c0_i32_0 = arith.constant 0 : i32
    %c0_i32_1 = arith.constant 0 : i32
    return %c0_i32, %c0_i32_0 : i32, i32
  }
  func.func @transform_3(%arg0: i32) -> (i32, i32) {
    %c0_i32 = arith.constant 0 : i32
    %c0_i32_0 = arith.constant 0 : i32
    %c0_i32_1 = arith.constant 0 : i32
    return %c0_i32, %c0_i32_0 : i32, i32
  }
  func.func @transform_4(%arg0: i32) -> (i32, i32) {
    %c0_i32 = arith.constant 0 : i32
    %c0_i32_0 = arith.constant 0 : i32
    %c0_i32_1 = arith.constant 0 : i32
    return %c0_i32, %c0_i32_0 : i32, i32
  }
  func.func @transform_5(%arg0: i32) -> (i32, i32) {
    %c0_i32 = arith.constant 0 : i32
    %c0_i32_0 = arith.constant 0 : i32
    return %arg0, %c0_i32 : i32, i32
  }
}

module attributes {stable_mosaic.version = 11 : i64} {
  func.func @_matmul_bias_act_kernel(%arg0: i32, %arg1: memref<24x256xbf16, #tpu.memory_space<vmem>>, %arg2: memref<256x128xbf16, #tpu.memory_space<vmem>>, %arg3: memref<1x128xf32, #tpu.memory_space<vmem>>, %arg4: memref<24x128xbf16, #tpu.memory_space<vmem>>) attributes {dimension_semantics = [#tpu.dimension_semantics<parallel>], iteration_bounds = array<i64: 1>, scalar_prefetch = 0 : i64, scratch_operands = 0 : i64, tpu.core_type = #tpu.core_type<tc>, window_params = [{transform_indices = @transform_0, window_bounds = array<i64: 24, 256>}, {pipeline_mode = #tpu.pipeline_mode<synchronous>, transform_indices = @transform_1, window_bounds = array<i64: 256, 128>}, {pipeline_mode = #tpu.pipeline_mode<synchronous>, transform_indices = @transform_2, window_bounds = array<i64: 1, 128>}, {transform_indices = @transform_3, window_bounds = array<i64: 24, 128>}]} {
    %c0 = arith.constant 0 : index
    %c0_0 = arith.constant 0 : index
    %0 = vector.load %arg1[%c0, %c0_0] : memref<24x256xbf16, #tpu.memory_space<vmem>>, vector<24x256xbf16>
    %c0_1 = arith.constant 0 : index
    %c0_2 = arith.constant 0 : index
    %1 = vector.load %arg2[%c0_1, %c0_2] : memref<256x128xbf16, #tpu.memory_space<vmem>>, vector<256x128xbf16>
    %cst = arith.constant dense<0.000000e+00> : vector<24x128xf32>
    %2 = tpu.matmul %0, %1, %cst {dimension_numbers = #tpu.dot_dimension_numbers<[1], [0], [0], [1], [0, 0, 1, 1], [], []>} : vector<24x256xbf16>, vector<256x128xbf16>, vector<24x128xf32> -> vector<24x128xf32>
    %c0_3 = arith.constant 0 : index
    %c0_4 = arith.constant 0 : index
    %3 = vector.load %arg3[%c0_3, %c0_4] : memref<1x128xf32, #tpu.memory_space<vmem>>, vector<1x128xf32>
    %4 = vector.broadcast %3 : vector<1x128xf32> to vector<24x128xf32>
    %5 = arith.addf %2, %4 : vector<24x128xf32>
    %cst_5 = arith.constant 0.000000e+00 : f32
    %6 = vector.broadcast %cst_5 : f32 to vector<24x128xf32>
    %7 = arith.maximumf %5, %6 : vector<24x128xf32>
    %8 = arith.truncf %7 : vector<24x128xf32> to vector<24x128xbf16>
    %c0_6 = arith.constant 0 : index
    %c0_7 = arith.constant 0 : index
    %9 = vector.load %arg4[%c0_6, %c0_7] : memref<24x128xbf16, #tpu.memory_space<vmem>>, vector<24x128xbf16>
    tpu.vector_store %arg4[%c0_6, %c0_7], %8 {strides = array<i32>} : memref<24x128xbf16, #tpu.memory_space<vmem>>, vector<24x128xbf16>,
    return
  }
  func.func @transform_0(%arg0: i32) -> (i32, i32) {
    %c0_i32 = arith.constant 0 : i32
    %c0_i32_0 = arith.constant 0 : i32
    return %arg0, %c0_i32 : i32, i32
  }
  func.func @transform_1(%arg0: i32) -> (i32, i32) {
    %c0_i32 = arith.constant 0 : i32
    %c0_i32_0 = arith.constant 0 : i32
    %c0_i32_1 = arith.constant 0 : i32
    return %c0_i32, %c0_i32_0 : i32, i32
  }
  func.func @transform_2(%arg0: i32) -> (i32, i32) {
    %c0_i32 = arith.constant 0 : i32
    %c0_i32_0 = arith.constant 0 : i32
    %c0_i32_1 = arith.constant 0 : i32
    return %c0_i32, %c0_i32_0 : i32, i32
  }
  func.func @transform_3(%arg0: i32) -> (i32, i32) {
    %c0_i32 = arith.constant 0 : i32
    %c0_i32_0 = arith.constant 0 : i32
    return %arg0, %c0_i32 : i32, i32
  }
}

module attributes {stable_mosaic.version = 11 : i64} {
  func.func @_matmul_bias_act_kernel(%arg0: i32, %arg1: memref<56x128xbf16, #tpu.memory_space<vmem>>, %arg2: memref<128x128xbf16, #tpu.memory_space<vmem>>, %arg3: memref<1x128xf32, #tpu.memory_space<vmem>>, %arg4: memref<56x128xbf16, #tpu.memory_space<vmem>>) attributes {dimension_semantics = [#tpu.dimension_semantics<parallel>], iteration_bounds = array<i64: 1>, scalar_prefetch = 0 : i64, scratch_operands = 0 : i64, tpu.core_type = #tpu.core_type<tc>, window_params = [{transform_indices = @transform_0, window_bounds = array<i64: 56, 128>}, {pipeline_mode = #tpu.pipeline_mode<synchronous>, transform_indices = @transform_1, window_bounds = array<i64: 128, 128>}, {pipeline_mode = #tpu.pipeline_mode<synchronous>, transform_indices = @transform_2, window_bounds = array<i64: 1, 128>}, {transform_indices = @transform_3, window_bounds = array<i64: 56, 128>}]} {
    %c0 = arith.constant 0 : index
    %c0_0 = arith.constant 0 : index
    %0 = vector.load %arg1[%c0, %c0_0] : memref<56x128xbf16, #tpu.memory_space<vmem>>, vector<56x128xbf16>
    %c0_1 = arith.constant 0 : index
    %c0_2 = arith.constant 0 : index
    %1 = vector.load %arg2[%c0_1, %c0_2] : memref<128x128xbf16, #tpu.memory_space<vmem>>, vector<128x128xbf16>
    %cst = arith.constant dense<0.000000e+00> : vector<56x128xf32>
    %2 = tpu.matmul %0, %1, %cst {dimension_numbers = #tpu.dot_dimension_numbers<[1], [0], [0], [1], [0, 0, 1, 1], [], []>} : vector<56x128xbf16>, vector<128x128xbf16>, vector<56x128xf32> -> vector<56x128xf32>
    %c0_3 = arith.constant 0 : index
    %c0_4 = arith.constant 0 : index
    %3 = vector.load %arg3[%c0_3, %c0_4] : memref<1x128xf32, #tpu.memory_space<vmem>>, vector<1x128xf32>
    %4 = vector.broadcast %3 : vector<1x128xf32> to vector<56x128xf32>
    %5 = arith.addf %2, %4 : vector<56x128xf32>
    %cst_5 = arith.constant 0.000000e+00 : f32
    %6 = vector.broadcast %cst_5 : f32 to vector<56x128xf32>
    %7 = arith.maximumf %5, %6 : vector<56x128xf32>
    %8 = arith.truncf %7 : vector<56x128xf32> to vector<56x128xbf16>
    %c0_6 = arith.constant 0 : index
    %c0_7 = arith.constant 0 : index
    %9 = vector.load %arg4[%c0_6, %c0_7] : memref<56x128xbf16, #tpu.memory_space<vmem>>, vector<56x128xbf16>
    tpu.vector_store %arg4[%c0_6, %c0_7], %8 {strides = array<i32>} : memref<56x128xbf16, #tpu.memory_space<vmem>>, vector<56x128xbf16>,
    return
  }
  func.func @transform_0(%arg0: i32) -> (i32, i32) {
    %c0_i32 = arith.constant 0 : i32
    %c0_i32_0 = arith.constant 0 : i32
    return %arg0, %c0_i32 : i32, i32
  }
  func.func @transform_1(%arg0: i32) -> (i32, i32) {
    %c0_i32 = arith.constant 0 : i32
    %c0_i32_0 = arith.constant 0 : i32
    %c0_i32_1 = arith.constant 0 : i32
    return %c0_i32, %c0_i32_0 : i32, i32
  }
  func.func @transform_2(%arg0: i32) -> (i32, i32) {
    %c0_i32 = arith.constant 0 : i32
    %c0_i32_0 = arith.constant 0 : i32
    %c0_i32_1 = arith.constant 0 : i32
    return %c0_i32, %c0_i32_0 : i32, i32
  }
  func.func @transform_3(%arg0: i32) -> (i32, i32) {
    %c0_i32 = arith.constant 0 : i32
    %c0_i32_0 = arith.constant 0 : i32
    return %arg0, %c0_i32 : i32, i32
  }
}

module attributes {stable_mosaic.version = 11 : i64} {
  func.func @_matmul_bias_act_kernel(%arg0: i32, %arg1: memref<168x128xbf16, #tpu.memory_space<vmem>>, %arg2: memref<128x128xbf16, #tpu.memory_space<vmem>>, %arg3: memref<1x128xf32, #tpu.memory_space<vmem>>, %arg4: memref<168x128xbf16, #tpu.memory_space<vmem>>) attributes {dimension_semantics = [#tpu.dimension_semantics<parallel>], iteration_bounds = array<i64: 1>, scalar_prefetch = 0 : i64, scratch_operands = 0 : i64, tpu.core_type = #tpu.core_type<tc>, window_params = [{transform_indices = @transform_0, window_bounds = array<i64: 168, 128>}, {pipeline_mode = #tpu.pipeline_mode<synchronous>, transform_indices = @transform_1, window_bounds = array<i64: 128, 128>}, {pipeline_mode = #tpu.pipeline_mode<synchronous>, transform_indices = @transform_2, window_bounds = array<i64: 1, 128>}, {transform_indices = @transform_3, window_bounds = array<i64: 168, 128>}]} {
    %c0 = arith.constant 0 : index
    %c0_0 = arith.constant 0 : index
    %0 = vector.load %arg1[%c0, %c0_0] : memref<168x128xbf16, #tpu.memory_space<vmem>>, vector<168x128xbf16>
    %c0_1 = arith.constant 0 : index
    %c0_2 = arith.constant 0 : index
    %1 = vector.load %arg2[%c0_1, %c0_2] : memref<128x128xbf16, #tpu.memory_space<vmem>>, vector<128x128xbf16>
    %cst = arith.constant dense<0.000000e+00> : vector<168x128xf32>
    %2 = tpu.matmul %0, %1, %cst {dimension_numbers = #tpu.dot_dimension_numbers<[1], [0], [0], [1], [0, 0, 1, 1], [], []>} : vector<168x128xbf16>, vector<128x128xbf16>, vector<168x128xf32> -> vector<168x128xf32>
    %c0_3 = arith.constant 0 : index
    %c0_4 = arith.constant 0 : index
    %3 = vector.load %arg3[%c0_3, %c0_4] : memref<1x128xf32, #tpu.memory_space<vmem>>, vector<1x128xf32>
    %4 = vector.broadcast %3 : vector<1x128xf32> to vector<168x128xf32>
    %5 = arith.addf %2, %4 : vector<168x128xf32>
    %cst_5 = arith.constant 0.000000e+00 : f32
    %6 = vector.broadcast %cst_5 : f32 to vector<168x128xf32>
    %7 = arith.maximumf %5, %6 : vector<168x128xf32>
    %8 = arith.truncf %7 : vector<168x128xf32> to vector<168x128xbf16>
    %c0_6 = arith.constant 0 : index
    %c0_7 = arith.constant 0 : index
    %9 = vector.load %arg4[%c0_6, %c0_7] : memref<168x128xbf16, #tpu.memory_space<vmem>>, vector<168x128xbf16>
    tpu.vector_store %arg4[%c0_6, %c0_7], %8 {strides = array<i32>} : memref<168x128xbf16, #tpu.memory_space<vmem>>, vector<168x128xbf16>,
    return
  }
  func.func @transform_0(%arg0: i32) -> (i32, i32) {
    %c0_i32 = arith.constant 0 : i32
    %c0_i32_0 = arith.constant 0 : i32
    return %arg0, %c0_i32 : i32, i32
  }
  func.func @transform_1(%arg0: i32) -> (i32, i32) {
    %c0_i32 = arith.constant 0 : i32
    %c0_i32_0 = arith.constant 0 : i32
    %c0_i32_1 = arith.constant 0 : i32
    return %c0_i32, %c0_i32_0 : i32, i32
  }
  func.func @transform_2(%arg0: i32) -> (i32, i32) {
    %c0_i32 = arith.constant 0 : i32
    %c0_i32_0 = arith.constant 0 : i32
    %c0_i32_1 = arith.constant 0 : i32
    return %c0_i32, %c0_i32_0 : i32, i32
  }
  func.func @transform_3(%arg0: i32) -> (i32, i32) {
    %c0_i32 = arith.constant 0 : i32
    %c0_i32_0 = arith.constant 0 : i32
    return %arg0, %c0_i32 : i32, i32
  }
}

module attributes {stable_mosaic.version = 11 : i64} {
  func.func @_matmul_bias_act_kernel(%arg0: i32, %arg1: memref<296x128xbf16, #tpu.memory_space<vmem>>, %arg2: memref<128x128xbf16, #tpu.memory_space<vmem>>, %arg3: memref<1x128xf32, #tpu.memory_space<vmem>>, %arg4: memref<296x128xf32, #tpu.memory_space<vmem>>) attributes {dimension_semantics = [#tpu.dimension_semantics<parallel>], iteration_bounds = array<i64: 2>, scalar_prefetch = 0 : i64, scratch_operands = 0 : i64, tpu.core_type = #tpu.core_type<tc>, window_params = [{transform_indices = @transform_0, window_bounds = array<i64: 296, 128>}, {pipeline_mode = #tpu.pipeline_mode<synchronous>, transform_indices = @transform_1, window_bounds = array<i64: 128, 128>}, {pipeline_mode = #tpu.pipeline_mode<synchronous>, transform_indices = @transform_2, window_bounds = array<i64: 1, 128>}, {transform_indices = @transform_3, window_bounds = array<i64: 296, 128>}]} {
    %c0 = arith.constant 0 : index
    %c0_0 = arith.constant 0 : index
    %0 = vector.load %arg1[%c0, %c0_0] : memref<296x128xbf16, #tpu.memory_space<vmem>>, vector<296x128xbf16>
    %c0_1 = arith.constant 0 : index
    %c0_2 = arith.constant 0 : index
    %1 = vector.load %arg2[%c0_1, %c0_2] : memref<128x128xbf16, #tpu.memory_space<vmem>>, vector<128x128xbf16>
    %cst = arith.constant dense<0.000000e+00> : vector<296x128xf32>
    %2 = tpu.matmul %0, %1, %cst {dimension_numbers = #tpu.dot_dimension_numbers<[1], [0], [0], [1], [0, 0, 1, 1], [], []>} : vector<296x128xbf16>, vector<128x128xbf16>, vector<296x128xf32> -> vector<296x128xf32>
    %c0_3 = arith.constant 0 : index
    %c0_4 = arith.constant 0 : index
    %3 = vector.load %arg3[%c0_3, %c0_4] : memref<1x128xf32, #tpu.memory_space<vmem>>, vector<1x128xf32>
    %4 = vector.broadcast %3 : vector<1x128xf32> to vector<296x128xf32>
    %5 = arith.addf %2, %4 : vector<296x128xf32>
    %c0_5 = arith.constant 0 : index
    %c0_6 = arith.constant 0 : index
    %6 = vector.load %arg4[%c0_5, %c0_6] : memref<296x128xf32, #tpu.memory_space<vmem>>, vector<296x128xf32>
    tpu.vector_store %arg4[%c0_5, %c0_6], %5 {strides = array<i32>} : memref<296x128xf32, #tpu.memory_space<vmem>>, vector<296x128xf32>,
    return
  }
  func.func @transform_0(%arg0: i32) -> (i32, i32) {
    %c0_i32 = arith.constant 0 : i32
    %c0_i32_0 = arith.constant 0 : i32
    return %arg0, %c0_i32 : i32, i32
  }
  func.func @transform_1(%arg0: i32) -> (i32, i32) {
    %c0_i32 = arith.constant 0 : i32
    %c0_i32_0 = arith.constant 0 : i32
    %c0_i32_1 = arith.constant 0 : i32
    return %c0_i32, %c0_i32_0 : i32, i32
  }
  func.func @transform_2(%arg0: i32) -> (i32, i32) {
    %c0_i32 = arith.constant 0 : i32
    %c0_i32_0 = arith.constant 0 : i32
    %c0_i32_1 = arith.constant 0 : i32
    return %c0_i32, %c0_i32_0 : i32, i32
  }
  func.func @transform_3(%arg0: i32) -> (i32, i32) {
    %c0_i32 = arith.constant 0 : i32
    %c0_i32_0 = arith.constant 0 : i32
    return %arg0, %c0_i32 : i32, i32
  }
}

</mosaic_0001>

<llo_original>
// kernel: generator_forward.6
$region0: #{generator_forward.6}
  #allocation0 [shape = 'u32[]', space=smem, size = 0x4, offset = 0x4, fixed_abs, tag = 'smem constant byte address 0x4 - core index']
  #allocation1 [shape = 'u32[144,128]{1,0:T(1,128)}', space=vmem, size = 0x12000, scoped, tag = 'internal scratch']
  %s0 = inlined_call_operand.vmem [shape: bf16[24,256], index: 0, kind: input, shape index: {}]
  %s1 = inlined_call_operand.vmem [shape: bf16[256,128], index: 1, kind: input, shape index: {}]
  %s2 = inlined_call_operand.vmem [shape: f32[1,128], index: 2, kind: input, shape index: {}]
  %s3 = inlined_call_operand.vmem [shape: bf16[24,128], index: 3, kind: output, shape index: {}]
  %s4 = sld [smem:[#allocation0]]
  $region22: #{generator_forward.6} parent=0
    _
  %s6 = ssub.s32 1, %s4
  %s7 = scalar_select 0, %s6, %s4
  // Predicated region
  $region2: #{generator_forward.6} parent=0 // pred_check
    _
  $region3: #{generator_forward.6} parent=0 // pred_check_branch
    %9 = sbr.rel (0) target = $region5
  $region4: #{generator_forward.6} parent=0 // pred_region
    _
  $region5: #{generator_forward.6} parent=0 // pred_fallthru
    _
  // Predicated region
  $region6: #{generator_forward.6} parent=0 // pred_check
    _
  $region7: #{generator_forward.6} parent=0 // pred_check_branch
    %11 = sbr.rel (0) target = $region9
  $region8: #{generator_forward.6} parent=0 // pred_region
    _
  $region9: #{generator_forward.6} parent=0 // pred_fallthru
    _
  // Predicated region
  $region10: #{generator_forward.6} parent=0 // pred_check
    _
  $region11: #{generator_forward.6} parent=0 // pred_check_branch
    %13 = sbr.rel (0) target = $region13
  $region12: #{generator_forward.6} parent=0 // pred_region
    _
  $region13: #{generator_forward.6} parent=0 // pred_fallthru
    _
  %v15 = vld [vmem:[%s0] sm:$0xff]
  %v16 = vld [vmem:[%s0 + $0x8] sm:$0xff]
  %v17 = vld [vmem:[%s0 + $0x10] sm:$0xff]
  %v18 = vld [vmem:[%s1] sm:$0xf]
  %v19 = vld [vmem:[%s1 + $0x4] sm:$0xf]
  %v20 = vld [vmem:[%s1 + $0x8] sm:$0xf]
  %v21 = vld [vmem:[%s1 + $0xc] sm:$0xf]
  %v22 = vld [vmem:[%s1 + $0x10] sm:$0xf]
  %v23 = vld [vmem:[%s1 + $0x14] sm:$0xf]
  %v24 = vld [vmem:[%s1 + $0x18] sm:$0xf]
  %v25 = vld [vmem:[%s1 + $0x1c] sm:$0xf]
  %v26 = vld [vmem:[%s1 + $0x20] sm:$0xf]
  %v27 = vld [vmem:[%s1 + $0x24] sm:$0xf]
  %v28 = vld [vmem:[%s1 + $0x28] sm:$0xf]
  %v29 = vld [vmem:[%s1 + $0x2c] sm:$0xf]
  %v30 = vld [vmem:[%s1 + $0x30] sm:$0xf]
  %v31 = vld [vmem:[%s1 + $0x34] sm:$0xf]
  %v32 = vld [vmem:[%s1 + $0x38] sm:$0xf]
  %v33 = vld [vmem:[%s1 + $0x3c] sm:$0xf]
  %v34 = vld [vmem:[%s1 + $0x40] sm:$0xf]
  %v35 = vld [vmem:[%s1 + $0x44] sm:$0xf]
  %v36 = vld [vmem:[%s1 + $0x48] sm:$0xf]
  %v37 = vld [vmem:[%s1 + $0x4c] sm:$0xf]
  %v38 = vld [vmem:[%s1 + $0x50] sm:$0xf]
  %v39 = vld [vmem:[%s1 + $0x54] sm:$0xf]
  %v40 = vld [vmem:[%s1 + $0x58] sm:$0xf]
  %v41 = vld [vmem:[%s1 + $0x5c] sm:$0xf]
  %v42 = vld [vmem:[%s1 + $0x60] sm:$0xf]
  %v43 = vld [vmem:[%s1 + $0x64] sm:$0xf]
  %v44 = vld [vmem:[%s1 + $0x68] sm:$0xf]
  %v45 = vld [vmem:[%s1 + $0x6c] sm:$0xf]
  %v46 = vld [vmem:[%s1 + $0x70] sm:$0xf]
  %v47 = vld [vmem:[%s1 + $0x74] sm:$0xf]
  %v48 = vld [vmem:[%s1 + $0x78] sm:$0xf]
  %v49 = vld [vmem:[%s1 + $0x7c] sm:$0xf]
  %v50 = vld [vmem:[%s2] sm:$0x1]
  %v52 = vlaneseq
  %v53 = vshrl.u32 %v52, 7
  %v54 = vsub.s32 0, %v53
  %v55 = vrot.slane %v50, %v54
  %v60 = vunpack.c.l.b16 %v15
  %v61 = vunpack.c.h.b16 %v15
  %v62 = vunpack.c.l.b16 %v16
  %v63 = vunpack.c.h.b16 %v16
  %v64 = vunpack.c.l.b16 %v17
  %v65 = vunpack.c.h.b16 %v17
  %v66 = vpack.c.b16 %v62, %v60
  %v67 = vpack.c.b16 %v63, %v61
  %v68 = vpack.c.b16 %v64, %v64
  %v69 = vpack.c.b16 %v65, %v65
  %v106 = vunpack.c.l.b16 %v18
  %v107 = vunpack.c.l.b16 %v19
  %v108 = vunpack.c.l.b16 %v20
  %v109 = vunpack.c.l.b16 %v21
  %v110 = vunpack.c.l.b16 %v22
  %v111 = vunpack.c.l.b16 %v23
  %v112 = vunpack.c.l.b16 %v24
  %v113 = vunpack.c.l.b16 %v25
  %v114 = vunpack.c.l.b16 %v26
  %v115 = vunpack.c.l.b16 %v27
  %v116 = vunpack.c.l.b16 %v28
  %v117 = vunpack.c.l.b16 %v29
  %v118 = vunpack.c.l.b16 %v30
  %v119 = vunpack.c.l.b16 %v31
  %v120 = vunpack.c.l.b16 %v32
  %v121 = vunpack.c.l.b16 %v33
  %v122 = vunpack.c.l.b16 %v34
  %v123 = vunpack.c.l.b16 %v35
  %v124 = vunpack.c.l.b16 %v36
  %v125 = vunpack.c.l.b16 %v37
  %v126 = vunpack.c.l.b16 %v38
  %v127 = vunpack.c.l.b16 %v39
  %v128 = vunpack.c.l.b16 %v40
  %v129 = vunpack.c.l.b16 %v41
  %v130 = vunpack.c.l.b16 %v42
  %v131 = vunpack.c.l.b16 %v43
  %v132 = vunpack.c.l.b16 %v44
  %v133 = vunpack.c.l.b16 %v45
  %v134 = vunpack.c.l.b16 %v46
  %v135 = vunpack.c.l.b16 %v47
  %v136 = vunpack.c.l.b16 %v48
  %v137 = vunpack.c.l.b16 %v49
  %v138 = vpack.c.b16 %v107, %v106
  %v139 = vpack.c.b16 %v109, %v108
  %v140 = vpack.c.b16 %v111, %v110
  %v141 = vpack.c.b16 %v113, %v112
  %v142 = vpack.c.b16 %v115, %v114
  %v143 = vpack.c.b16 %v117, %v116
  %v144 = vpack.c.b16 %v119, %v118
  %v145 = vpack.c.b16 %v121, %v120
  %v146 = vpack.c.b16 %v123, %v122
  %v147 = vpack.c.b16 %v125, %v124
  %v148 = vpack.c.b16 %v127, %v126
  %v149 = vpack.c.b16 %v129, %v128
  %v150 = vpack.c.b16 %v131, %v130
  %v151 = vpack.c.b16 %v133, %v132
  %v152 = vpack.c.b16 %v135, %v134
  %v153 = vpack.c.b16 %v137, %v136
  %170 = vmatprep.subr.bf16.mxu0 0
  %171 = vmatpush1.bf16.msra.mxu0 %v138
  %172 = vmatprep.subr.bf16.mxu0 0
  %173 = vmatpush1.bf16.msra.mxu0 %v139
  %174 = vmatprep.subr.bf16.mxu0 0
  %175 = vmatpush1.bf16.msra.mxu0 %v140
  %176 = vmatprep.subr.bf16.mxu0 0
  %177 = vmatpush1.bf16.msra.mxu0 %v141
  %178 = vmatprep.subr.bf16.mxu0 0
  %179 = vmatpush1.bf16.msra.mxu0 %v142
  %180 = vmatprep.subr.bf16.mxu0 0
  %181 = vmatpush1.bf16.msra.mxu0 %v143
  %182 = vmatprep.subr.bf16.mxu0 0
  %183 = vmatpush1.bf16.msra.mxu0 %v144
  %184 = vmatprep.subr.bf16.mxu0 0
  %185 = vmatpush1.bf16.msra.mxu0 %v145
  %186 = vmatprep.subr.bf16.mxu0 0
  %187 = vmatpush1.bf16.msra.mxu0 %v146
  %188 = vmatprep.subr.bf16.mxu0 0
  %189 = vmatpush1.bf16.msra.mxu0 %v147
  %190 = vmatprep.subr.bf16.mxu0 0
  %191 = vmatpush1.bf16.msra.mxu0 %v148
  %192 = vmatprep.subr.bf16.mxu0 0
  %193 = vmatpush1.bf16.msra.mxu0 %v149
  %194 = vmatprep.subr.bf16.mxu0 0
  %195 = vmatpush1.bf16.msra.mxu0 %v150
  %196 = vmatprep.subr.bf16.mxu0 0
  %197 = vmatpush1.bf16.msra.mxu0 %v151
  %198 = vmatprep.subr.bf16.mxu0 0
  %199 = vmatpush1.bf16.msra.mxu0 %v152
  %200 = vmatprep.subr.bf16.mxu0 0
  %201 = vmatpush1.bf16.msra.mxu0 %v153
  %202 = vmatprep.mubr.bf16.mxu0 %v67
  %203 = vmatmul.mubr.bf16.gmra.mrb[0].mxu0 %v66
  %v204 = vpop.f32.mrb[0].mxu0
  %v205 = vadd.f32 %v55, %v204
  %v206 = vpop.f32.mrb[0].mxu0
  %v207 = vpop.f32.mrb[0].mxu0
  %v208 = vadd.f32 %v55, %v207
  %v209 = vpop.f32.mrb[0].mxu0
  %210 = vmatprep.mubr.bf16.mxu0 %v69
  %211 = vmatmul.mubr.bf16.gmra.mrb[0].mxu0 %v68
  %v212 = vpop.f32.mrb[0].mxu0
  %v213 = vadd.f32 %v55, %v212
  %v214 = vpop.f32.mrb[0].mxu0
  %v215 = vpop.f32.mrb[0].mxu0
  %v216 = vpop.f32.mrb[0].mxu0
  %217 = vdwg.mxu0
  %v218 = vmax.f32 %v205, 0.0
  %v219 = vmax.f32 %v208, 0.0
  %v220 = vmax.f32 %v213, 0.0
  %v221 = vpack.c.bf16 %v219, %v218
  %v222 = vpack.c.bf16 %v220, %v220
  %v225 = vunpack.c.l.b16 %v221
  %v226 = vunpack.c.h.b16 %v221
  %v227 = vunpack.c.l.b16 %v222
  %v228 = vpack.c.b16 %v225, %v225
  %v229 = vpack.c.b16 %v226, %v226
  %v230 = vpack.c.b16 %v227, %v227
  %234 = vst [vmem:[%s3] sm:$0xf] %v228
  %235 = vst [vmem:[%s3 + $0x4] sm:$0xf] %v229
  %236 = vst [vmem:[%s3 + $0x8] sm:$0xf] %v230
  // Predicated region
  $region14: #{generator_forward.6} parent=0 // pred_check
    _
  $region15: #{generator_forward.6} parent=0 // pred_check_branch
    %238 = sbr.rel (0) target = $region17
  $region16: #{generator_forward.6} parent=0 // pred_region
    _
  $region17: #{generator_forward.6} parent=0 // pred_fallthru
    _
  // Predicated region
  $region18: #{generator_forward.6} parent=0 // pred_check
    _
  $region19: #{generator_forward.6} parent=0 // pred_check_branch
    %240 = sbr.rel (0) target = $region21
  $region20: #{generator_forward.6} parent=0 // pred_region
    _
  $region21: #{generator_forward.6} parent=0 // pred_fallthru
    _

// kernel: generator_forward.5
$region0: #{generator_forward.5}
  #allocation0 [shape = 'u32[]', space=smem, size = 0x4, offset = 0x4, fixed_abs, tag = 'smem constant byte address 0x4 - core index']
  #allocation1 [shape = 'u32[144,128]{1,0:T(1,128)}', space=vmem, size = 0x12000, scoped, tag = 'internal scratch']
  %s0 = inlined_call_operand.vmem [shape: bf16[8,128], index: 0, kind: input, shape index: {}]
  %s1 = inlined_call_operand.hbm [shape: bf16[128,2048], index: 1, kind: input, shape index: {}]
  %s2 = inlined_call_operand.hbm [shape: f32[1,2048], index: 2, kind: input, shape index: {}]
  %s3 = inlined_call_operand.hbm [shape: bf16[2048,256], index: 3, kind: input, shape index: {}]
  %s4 = inlined_call_operand.hbm [shape: f32[1,256], index: 4, kind: input, shape index: {}]
  %s5 = inlined_call_operand.vmem [shape: f32[8,256], index: 5, kind: output, shape index: {}]
  %s6 = sld [smem:[#allocation0]]
  $region46: #{generator_forward.5} parent=0
    _
  %s8 = ssub.s32 1, %s6
  %s9 = scalar_select 0, %s8, %s6
  $region1: #{generator_forward.5} parent=0
    #allocation2 [shape = 'u8[524288]{0}', space=vmem, size = 0x80000, scoped, tag = 'input window, operand 1, single buffered']
    #allocation3 [shape = 's32[1]{0}', space=sflag, size = 0x4, scoped, tag = 'scoped memory for generator_forward.5']
    #allocation4 [shape = 'u8[8192]{0}', space=vmem, size = 0x2000, scoped, tag = 'input window, operand 2, single buffered']
    #allocation5 [shape = 's32[1]{0}', space=sflag, size = 0x4, scoped, tag = 'scoped memory for generator_forward.5']
    #allocation6 [shape = 'u8[1048576]{0}', space=vmem, size = 0x100000, scoped, tag = 'input window, operand 3, single buffered']
    #allocation7 [shape = 'u8[1024]{0}', space=vmem, size = 0x400, scoped, tag = 'input window, operand 4, single buffered']
    #allocation8 [shape = 's32[1]{0}', space=sflag, size = 0x4, scoped, tag = 'scoped memory for generator_forward.5']
    %10 = vsyncpa [#allocation3], 0
    %11 = vsyncpa [#allocation5], 0
    %12 = vsyncpa [#allocation8], 0
    // Predicated region
    $region2: #{generator_forward.5} parent=1 // pred_check
      _
    $region3: #{generator_forward.5} parent=1 // pred_check_branch
      %14 = sbr.rel (0) target = $region5
    $region4: #{generator_forward.5} parent=1 // pred_region
      _
    $region5: #{generator_forward.5} parent=1 // pred_fallthru
      _
    // Predicated region
    $region6: #{generator_forward.5} parent=1 // pred_check
      _
    $region7: #{generator_forward.5} parent=1 // pred_check_branch
      %16 = sbr.rel (0) target = $region9
    $region8: #{generator_forward.5} parent=1 // pred_region
      %s18 = ssub.s32 16384, 16384
      %19 = vsyncadd [#allocation3], %s18
      %s20 = sshll.u32 [#allocation2], 4
      %s21 = int_to_ptr.vmem [resolvable:$true] %s20
      %26 = dma.hbm_to_vmem [thread:$0]  %s1, 16384, %s21, [#allocation3], 1024, 1024, 64
    $region9: #{generator_forward.5} parent=1 // pred_fallthru
      _
    // Predicated region
    $region10: #{generator_forward.5} parent=1 // pred_check
      _
    $region11: #{generator_forward.5} parent=1 // pred_check_branch
      %28 = sbr.rel (0) target = $region13
    $region12: #{generator_forward.5} parent=1 // pred_region
      %s30 = ssub.s32 256, 256
      %31 = vsyncadd [#allocation5], %s30
      %s33 = sshll.u32 [#allocation4], 4
      %s34 = int_to_ptr.vmem [resolvable:$true] %s33
      %36 = dma.hbm_to_vmem [thread:$0]  %s2, 256, %s34, [#allocation5]
    $region13: #{generator_forward.5} parent=1 // pred_fallthru
      _
    // Predicated region
    $region14: #{generator_forward.5} parent=1 // pred_check
      _
    $region15: #{generator_forward.5} parent=1 // pred_check_branch
      %38 = sbr.rel (0) target = $region17
    $region16: #{generator_forward.5} parent=1 // pred_region
      %s40 = ssub.s32 32768, 32768
      %41 = vsyncadd [#allocation5], %s40
      %s42 = sshll.u32 [#allocation6], 4
      %s43 = int_to_ptr.vmem [resolvable:$true] %s42
      %48 = dma.hbm_to_vmem [thread:$0]  %s3, 32768, %s43, [#allocation5], 128, 128, 8
    $region17: #{generator_forward.5} parent=1 // pred_fallthru
      _
    // Predicated region
    $region18: #{generator_forward.5} parent=1 // pred_check
      _
    $region19: #{generator_forward.5} parent=1 // pred_check_branch
      %50 = sbr.rel (0) target = $region21
    $region20: #{generator_forward.5} parent=1 // pred_region
      %s52 = ssub.s32 32, 32
      %53 = vsyncadd [#allocation8], %s52
      %s55 = sshll.u32 [#allocation7], 4
      %s56 = int_to_ptr.vmem [resolvable:$true] %s55
      %58 = dma.hbm_to_vmem [thread:$0]  %s4, 32, %s56, [#allocation8]
    $region21: #{generator_forward.5} parent=1 // pred_fallthru
      _
    // Predicated region
    $region22: #{generator_forward.5} parent=1 // pred_check
      _
    $region23: #{generator_forward.5} parent=1 // pred_check_branch
      %60 = sbr.rel (0) target = $region25
    $region24: #{generator_forward.5} parent=1 // pred_region
      %61 = dma.done [#allocation3], 16384
    $region25: #{generator_forward.5} parent=1 // pred_fallthru
      _
    // Predicated region
    $region26: #{generator_forward.5} parent=1 // pred_check
      _
    $region27: #{generator_forward.5} parent=1 // pred_check_branch
      %63 = sbr.rel (0) target = $region29
    $region28: #{generator_forward.5} parent=1 // pred_region
      %64 = dma.done [#allocation5], 256
    $region29: #{generator_forward.5} parent=1 // pred_fallthru
      _
    // Predicated region
    $region30: #{generator_forward.5} parent=1 // pred_check
      _
    $region31: #{generator_forward.5} parent=1 // pred_check_branch
      %66 = sbr.rel (0) target = $region33
    $region32: #{generator_forward.5} parent=1 // pred_region
      %67 = dma.done [#allocation5], 32768
    $region33: #{generator_forward.5} parent=1 // pred_fallthru
      _
    // Predicated region
    $region34: #{generator_forward.5} parent=1 // pred_check
      _
    $region35: #{generator_forward.5} parent=1 // pred_check_branch
      %69 = sbr.rel (0) target = $region37
    $region36: #{generator_forward.5} parent=1 // pred_region
      %70 = dma.done [#allocation8], 32
    $region37: #{generator_forward.5} parent=1 // pred_fallthru
      _
    %v72 = vld [vmem:[%s0] sm:$0xf]
    %v73 = vld [vmem:[#allocation2] sm:$0xff]
    %v74 = vld [vmem:[#allocation2 + $0x8] sm:$0xff]
    %v75 = vld [vmem:[#allocation2 + $0x10] sm:$0xff]
    %v76 = vld [vmem:[#allocation2 + $0x18] sm:$0xff]
    %v77 = vld [vmem:[#allocation2 + $0x20] sm:$0xff]
    %v78 = vld [vmem:[#allocation2 + $0x28] sm:$0xff]
    %v79 = vld [vmem:[#allocation2 + $0x30] sm:$0xff]
    %v80 = vld [vmem:[#allocation2 + $0x38] sm:$0xff]
    %v81 = vld [vmem:[#allocation2 + $0x40] sm:$0xff]
    %v82 = vld [vmem:[#allocation2 + $0x48] sm:$0xff]
    %v83 = vld [vmem:[#allocation2 + $0x50] sm:$0xff]
    %v84 = vld [vmem:[#allocation2 + $0x58] sm:$0xff]
    %v85 = vld [vmem:[#allocation2 + $0x60] sm:$0xff]
    %v86 = vld [vmem:[#allocation2 + $0x68] sm:$0xff]
    %v87 = vld [vmem:[#allocation2 + $0x70] sm:$0xff]
    %v88 = vld [vmem:[#allocation2 + $0x78] sm:$0xff]
    %v89 = vld [vmem:[#allocation2 + $0x80] sm:$0xff]
    %v90 = vld [vmem:[#allocation2 + $0x88] sm:$0xff]
    %v91 = vld [vmem:[#allocation2 + $0x90] sm:$0xff]
    %v92 = vld [vmem:[#allocation2 + $0x98] sm:$0xff]
    %v93 = vld [vmem:[#allocation2 + $0xa0] sm:$0xff]
    %v94 = vld [vmem:[#allocation2 + $0xa8] sm:$0xff]
    %v95 = vld [vmem:[#allocation2 + $0xb0] sm:$0xff]
    %v96 = vld [vmem:[#allocation2 + $0xb8] sm:$0xff]
    %v97 = vld [vmem:[#allocation2 + $0xc0] sm:$0xff]
    %v98 = vld [vmem:[#allocation2 + $0xc8] sm:$0xff]
    %v99 = vld [vmem:[#allocation2 + $0xd0] sm:$0xff]
    %v100 = vld [vmem:[#allocation2 + $0xd8] sm:$0xff]
    %v101 = vld [vmem:[#allocation2 + $0xe0] sm:$0xff]
    %v102 = vld [vmem:[#allocation2 + $0xe8] sm:$0xff]
    %v103 = vld [vmem:[#allocation2 + $0xf0] sm:$0xff]
    %v104 = vld [vmem:[#allocation2 + $0xf8] sm:$0xff]
    %v105 = vld [vmem:[#allocation2 + $0x100] sm:$0xff]
    %v106 = vld [vmem:[#allocation2 + $0x108] sm:$0xff]
    %v107 = vld [vmem:[#allocation2 + $0x110] sm:$0xff]
    %v108 = vld [vmem:[#allocation2 + $0x118] sm:$0xff]
    %v109 = vld [vmem:[#allocation2 + $0x120] sm:$0xff]
    %v110 = vld [vmem:[#allocation2 + $0x128] sm:$0xff]
    %v111 = vld [vmem:[#allocation2 + $0x130] sm:$0xff]
    %v112 = vld [vmem:[#allocation2 + $0x138] sm:$0xff]
    %v113 = vld [vmem:[#allocation2 + $0x140] sm:$0xff]
    %v114 = vld [vmem:[#allocation2 + $0x148] sm:$0xff]
    %v115 = vld [vmem:[#allocation2 + $0x150] sm:$0xff]
    %v116 = vld [vmem:[#allocation2 + $0x158] sm:$0xff]
    %v117 = vld [vmem:[#allocation2 + $0x160] sm:$0xff]
    %v118 = vld [vmem:[#allocation2 + $0x168] sm:$0xff]
    %v119 = vld [vmem:[#allocation2 + $0x170] sm:$0xff]
    %v120 = vld [vmem:[#allocation2 + $0x178] sm:$0xff]
    %v121 = vld [vmem:[#allocation2 + $0x180] sm:$0xff]
    %v122 = vld [vmem:[#allocation2 + $0x188] sm:$0xff]
    %v123 = vld [vmem:[#allocation2 + $0x190] sm:$0xff]
    %v124 = vld [vmem:[#allocation2 + $0x198] sm:$0xff]
    %v125 = vld [vmem:[#allocation2 + $0x1a0] sm:$0xff]
    %v126 = vld [vmem:[#allocation2 + $0x1a8] sm:$0xff]
    %v127 = vld [vmem:[#allocation2 + $0x1b0] sm:$0xff]
    %v128 = vld [vmem:[#allocation2 + $0x1b8] sm:$0xff]
    %v129 = vld [vmem:[#allocation2 + $0x1c0] sm:$0xff]
    %v130 = vld [vmem:[#allocation2 + $0x1c8] sm:$0xff]
    %v131 = vld [vmem:[#allocation2 + $0x1d0] sm:$0xff]
    %v132 = vld [vmem:[#allocation2 + $0x1d8] sm:$0xff]
    %v133 = vld [vmem:[#allocation2 + $0x1e0] sm:$0xff]
    %v134 = vld [vmem:[#allocation2 + $0x1e8] sm:$0xff]
    %v135 = vld [vmem:[#allocation2 + $0x1f0] sm:$0xff]
    %v136 = vld [vmem:[#allocation2 + $0x1f8] sm:$0xff]
    %v137 = vld [vmem:[#allocation2 + $0x200] sm:$0xff]
    %v138 = vld [vmem:[#allocation2 + $0x208] sm:$0xff]
    %v139 = vld [vmem:[#allocation2 + $0x210] sm:$0xff]
    %v140 = vld [vmem:[#allocation2 + $0x218] sm:$0xff]
    %v141 = vld [vmem:[#allocation2 + $0x220] sm:$0xff]
    %v142 = vld [vmem:[#allocation2 + $0x228] sm:$0xff]
    %v143 = vld [vmem:[#allocation2 + $0x230] sm:$0xff]
    %v144 = vld [vmem:[#allocation2 + $0x238] sm:$0xff]
    %v145 = vld [vmem:[#allocation2 + $0x240] sm:$0xff]
    %v146 = vld [vmem:[#allocation2 + $0x248] sm:$0xff]
    %v147 = vld [vmem:[#allocation2 + $0x250] sm:$0xff]
    %v148 = vld [vmem:[#allocation2 + $0x258] sm:$0xff]
    %v149 = vld [vmem:[#allocation2 + $0x260] sm:$0xff]
    %v150 = vld [vmem:[#allocation2 + $0x268] sm:$0xff]
    %v151 = vld [vmem:[#allocation2 + $0x270] sm:$0xff]
    %v152 = vld [vmem:[#allocation2 + $0x278] sm:$0xff]
    %v153 = vld [vmem:[#allocation2 + $0x280] sm:$0xff]
    %v154 = vld [vmem:[#allocation2 + $0x288] sm:$0xff]
    %v155 = vld [vmem:[#allocation2 + $0x290] sm:$0xff]
    %v156 = vld [vmem:[#allocation2 + $0x298] sm:$0xff]
    %v157 = vld [vmem:[#allocation2 + $0x2a0] sm:$0xff]
    %v158 = vld [vmem:[#allocation2 + $0x2a8] sm:$0xff]
    %v159 = vld [vmem:[#allocation2 + $0x2b0] sm:$0xff]
    %v160 = vld [vmem:[#allocation2 + $0x2b8] sm:$0xff]
    %v161 = vld [vmem:[#allocation2 + $0x2c0] sm:$0xff]
    %v162 = vld [vmem:[#allocation2 + $0x2c8] sm:$0xff]
    %v163 = vld [vmem:[#allocation2 + $0x2d0] sm:$0xff]
    %v164 = vld [vmem:[#allocation2 + $0x2d8] sm:$0xff]
    %v165 = vld [vmem:[#allocation2 + $0x2e0] sm:$0xff]
    %v166 = vld [vmem:[#allocation2 + $0x2e8] sm:$0xff]
    %v167 = vld [vmem:[#allocation2 + $0x2f0] sm:$0xff]
    %v168 = vld [vmem:[#allocation2 + $0x2f8] sm:$0xff]
    %v169 = vld [vmem:[#allocation2 + $0x300] sm:$0xff]
    %v170 = vld [vmem:[#allocation2 + $0x308] sm:$0xff]
    %v171 = vld [vmem:[#allocation2 + $0x310] sm:$0xff]
    %v172 = vld [vmem:[#allocation2 + $0x318] sm:$0xff]
    %v173 = vld [vmem:[#allocation2 + $0x320] sm:$0xff]
    %v174 = vld [vmem:[#allocation2 + $0x328] sm:$0xff]
    %v175 = vld [vmem:[#allocation2 + $0x330] sm:$0xff]
    %v176 = vld [vmem:[#allocation2 + $0x338] sm:$0xff]
    %v177 = vld [vmem:[#allocation2 + $0x340] sm:$0xff]
    %v178 = vld [vmem:[#allocation2 + $0x348] sm:$0xff]
    %v179 = vld [vmem:[#allocation2 + $0x350] sm:$0xff]
    %v180 = vld [vmem:[#allocation2 + $0x358] sm:$0xff]
    %v181 = vld [vmem:[#allocation2 + $0x360] sm:$0xff]
    %v182 = vld [vmem:[#allocation2 + $0x368] sm:$0xff]
    %v183 = vld [vmem:[#allocation2 + $0x370] sm:$0xff]
    %v184 = vld [vmem:[#allocation2 + $0x378] sm:$0xff]
    %v185 = vld [vmem:[#allocation2 + $0x380] sm:$0xff]
    %v186 = vld [vmem:[#allocation2 + $0x388] sm:$0xff]
    %v187 = vld [vmem:[#allocation2 + $0x390] sm:$0xff]
    %v188 = vld [vmem:[#allocation2 + $0x398] sm:$0xff]
    %v189 = vld [vmem:[#allocation2 + $0x3a0] sm:$0xff]
    %v190 = vld [vmem:[#allocation2 + $0x3a8] sm:$0xff]
    %v191 = vld [vmem:[#allocation2 + $0x3b0] sm:$0xff]
    %v192 = vld [vmem:[#allocation2 + $0x3b8] sm:$0xff]
    %v193 = vld [vmem:[#allocation2 + $0x3c0] sm:$0xff]
    %v194 = vld [vmem:[#allocation2 + $0x3c8] sm:$0xff]
    %v195 = vld [vmem:[#allocation2 + $0x3d0] sm:$0xff]
    %v196 = vld [vmem:[#allocation2 + $0x3d8] sm:$0xff]
    %v197 = vld [vmem:[#allocation2 + $0x3e0] sm:$0xff]
    %v198 = vld [vmem:[#allocation2 + $0x3e8] sm:$0xff]
    %v199 = vld [vmem:[#allocation2 + $0x3f0] sm:$0xff]
    %v200 = vld [vmem:[#allocation2 + $0x3f8] sm:$0xff]
    %v201 = vld [vmem:[#allocation4] sm:$0xff]
    %v202 = vld [vmem:[#allocation4 + $0x8] sm:$0xff]
    %v205 = vlaneseq
    %v206 = vshrl.u32 %v205, 7
    %v207 = vsub.s32 0, %v206
    %v208 = vrot.slane %v201, %v207
    %v209 = vlaneseq
    %v210 = vshrl.u32 %v209, 7
    %v211 = vsub.s32 1, %v210
    %v212 = vrot.slane %v201, %v211
    %v213 = vlaneseq
    %v214 = vshrl.u32 %v213, 7
    %v215 = vsub.s32 2, %v214
    %v216 = vrot.slane %v201, %v215
    %v217 = vlaneseq
    %v218 = vshrl.u32 %v217, 7
    %v219 = vsub.s32 3, %v218
    %v220 = vrot.slane %v201, %v219
    %v221 = vlaneseq
    %v222 = vshrl.u32 %v221, 7
    %v223 = vsub.s32 4, %v222
    %v224 = vrot.slane %v201, %v223
    %v225 = vlaneseq
    %v226 = vshrl.u32 %v225, 7
    %v227 = vsub.s32 5, %v226
    %v228 = vrot.slane %v201, %v227
    %v229 = vlaneseq
    %v230 = vshrl.u32 %v229, 7
    %v231 = vsub.s32 6, %v230
    %v232 = vrot.slane %v201, %v231
    %v233 = vlaneseq
    %v234 = vshrl.u32 %v233, 7
    %v235 = vsub.s32 7, %v234
    %v236 = vrot.slane %v201, %v235
    %v237 = vlaneseq
    %v238 = vshrl.u32 %v237, 7
    %v239 = vsub.s32 0, %v238
    %v240 = vrot.slane %v202, %v239
    %v241 = vlaneseq
    %v242 = vshrl.u32 %v241, 7
    %v243 = vsub.s32 1, %v242
    %v244 = vrot.slane %v202, %v243
    %v245 = vlaneseq
    %v246 = vshrl.u32 %v245, 7
    %v247 = vsub.s32 2, %v246
    %v248 = vrot.slane %v202, %v247
    %v249 = vlaneseq
    %v250 = vshrl.u32 %v249, 7
    %v251 = vsub.s32 3, %v250
    %v252 = vrot.slane %v202, %v251
    %v253 = vlaneseq
    %v254 = vshrl.u32 %v253, 7
    %v255 = vsub.s32 4, %v254
    %v256 = vrot.slane %v202, %v255
    %v257 = vlaneseq
    %v258 = vshrl.u32 %v257, 7
    %v259 = vsub.s32 5, %v258
    %v260 = vrot.slane %v202, %v259
    %v261 = vlaneseq
    %v262 = vshrl.u32 %v261, 7
    %v263 = vsub.s32 6, %v262
    %v264 = vrot.slane %v202, %v263
    %v265 = vlaneseq
    %v266 = vshrl.u32 %v265, 7
    %v267 = vsub.s32 7, %v266
    %v268 = vrot.slane %v202, %v267
    %v413 = vunpack.c.l.b16 %v73
    %v414 = vunpack.c.h.b16 %v73
    %v415 = vunpack.c.l.b16 %v74
    %v416 = vunpack.c.h.b16 %v74
    %v417 = vunpack.c.l.b16 %v75
    %v418 = vunpack.c.h.b16 %v75
    %v419 = vunpack.c.l.b16 %v76
    %v420 = vunpack.c.h.b16 %v76
    %v421 = vunpack.c.l.b16 %v77
    %v422 = vunpack.c.h.b16 %v77
    %v423 = vunpack.c.l.b16 %v78
    %v424 = vunpack.c.h.b16 %v78
    %v425 = vunpack.c.l.b16 %v79
    %v426 = vunpack.c.h.b16 %v79
    %v427 = vunpack.c.l.b16 %v80
    %v428 = vunpack.c.h.b16 %v80
    %v429 = vunpack.c.l.b16 %v81
    %v430 = vunpack.c.h.b16 %v81
    %v431 = vunpack.c.l.b16 %v82
    %v432 = vunpack.c.h.b16 %v82
    %v433 = vunpack.c.l.b16 %v83
    %v434 = vunpack.c.h.b16 %v83
    %v435 = vunpack.c.l.b16 %v84
    %v436 = vunpack.c.h.b16 %v84
    %v437 = vunpack.c.l.b16 %v85
    %v438 = vunpack.c.h.b16 %v85
    %v439 = vunpack.c.l.b16 %v86
    %v440 = vunpack.c.h.b16 %v86
    %v441 = vunpack.c.l.b16 %v87
    %v442 = vunpack.c.h.b16 %v87
    %v443 = vunpack.c.l.b16 %v88
    %v444 = vunpack.c.h.b16 %v88
    %v445 = vunpack.c.l.b16 %v89
    %v446 = vunpack.c.h.b16 %v89
    %v447 = vunpack.c.l.b16 %v90
    %v448 = vunpack.c.h.b16 %v90
    %v449 = vunpack.c.l.b16 %v91
    %v450 = vunpack.c.h.b16 %v91
    %v451 = vunpack.c.l.b16 %v92
    %v452 = vunpack.c.h.b16 %v92
    %v453 = vunpack.c.l.b16 %v93
    %v454 = vunpack.c.h.b16 %v93
    %v455 = vunpack.c.l.b16 %v94
    %v456 = vunpack.c.h.b16 %v94
    %v457 = vunpack.c.l.b16 %v95
    %v458 = vunpack.c.h.b16 %v95
    %v459 = vunpack.c.l.b16 %v96
    %v460 = vunpack.c.h.b16 %v96
    %v461 = vunpack.c.l.b16 %v97
    %v462 = vunpack.c.h.b16 %v97
    %v463 = vunpack.c.l.b16 %v98
    %v464 = vunpack.c.h.b16 %v98
    %v465 = vunpack.c.l.b16 %v99
    %v466 = vunpack.c.h.b16 %v99
    %v467 = vunpack.c.l.b16 %v100
    %v468 = vunpack.c.h.b16 %v100
    %v469 = vunpack.c.l.b16 %v101
    %v470 = vunpack.c.h.b16 %v101
    %v471 = vunpack.c.l.b16 %v102
    %v472 = vunpack.c.h.b16 %v102
    %v473 = vunpack.c.l.b16 %v103
    %v474 = vunpack.c.h.b16 %v103
    %v475 = vunpack.c.l.b16 %v104
    %v476 = vunpack.c.h.b16 %v104
    %v477 = vunpack.c.l.b16 %v105
    %v478 = vunpack.c.h.b16 %v105
    %v479 = vunpack.c.l.b16 %v106
    %v480 = vunpack.c.h.b16 %v106
    %v481 = vunpack.c.l.b16 %v107
    %v482 = vunpack.c.h.b16 %v107
    %v483 = vunpack.c.l.b16 %v108
    %v484 = vunpack.c.h.b16 %v108
    %v485 = vunpack.c.l.b16 %v109
    %v486 = vunpack.c.h.b16 %v109
    %v487 = vunpack.c.l.b16 %v110
    %v488 = vunpack.c.h.b16 %v110
    %v489 = vunpack.c.l.b16 %v111
    %v490 = vunpack.c.h.b16 %v111
    %v491 = vunpack.c.l.b16 %v112
    %v492 = vunpack.c.h.b16 %v112
    %v493 = vunpack.c.l.b16 %v113
    %v494 = vunpack.c.h.b16 %v113
    %v495 = vunpack.c.l.b16 %v114
    %v496 = vunpack.c.h.b16 %v114
    %v497 = vunpack.c.l.b16 %v115
    %v498 = vunpack.c.h.b16 %v115
    %v499 = vunpack.c.l.b16 %v116
    %v500 = vunpack.c.h.b16 %v116
    %v501 = vunpack.c.l.b16 %v117
    %v502 = vunpack.c.h.b16 %v117
    %v503 = vunpack.c.l.b16 %v118
    %v504 = vunpack.c.h.b16 %v118
    %v505 = vunpack.c.l.b16 %v119
    %v506 = vunpack.c.h.b16 %v119
    %v507 = vunpack.c.l.b16 %v120
    %v508 = vunpack.c.h.b16 %v120
    %v509 = vunpack.c.l.b16 %v121
    %v510 = vunpack.c.h.b16 %v121
    %v511 = vunpack.c.l.b16 %v122
    %v512 = vunpack.c.h.b16 %v122
    %v513 = vunpack.c.l.b16 %v123
    %v514 = vunpack.c.h.b16 %v123
    %v515 = vunpack.c.l.b16 %v124
    %v516 = vunpack.c.h.b16 %v124
    %v517 = vunpack.c.l.b16 %v125
    %v518 = vunpack.c.h.b16 %v125
    %v519 = vunpack.c.l.b16 %v126
    %v520 = vunpack.c.h.b16 %v126
    %v521 = vunpack.c.l.b16 %v127
    %v522 = vunpack.c.h.b16 %v127
    %v523 = vunpack.c.l.b16 %v128
    %v524 = vunpack.c.h.b16 %v128
    %v525 = vunpack.c.l.b16 %v129
    %v526 = vunpack.c.h.b16 %v129
    %v527 = vunpack.c.l.b16 %v130
    %v528 = vunpack.c.h.b16 %v130
    %v529 = vunpack.c.l.b16 %v131
    %v530 = vunpack.c.h.b16 %v131
    %v531 = vunpack.c.l.b16 %v132
    %v532 = vunpack.c.h.b16 %v132
    %v533 = vunpack.c.l.b16 %v133
    %v534 = vunpack.c.h.b16 %v133
    %v535 = vunpack.c.l.b16 %v134
    %v536 = vunpack.c.h.b16 %v134
    %v537 = vunpack.c.l.b16 %v135
    %v538 = vunpack.c.h.b16 %v135
    %v539 = vunpack.c.l.b16 %v136
    %v540 = vunpack.c.h.b16 %v136
    %v541 = vunpack.c.l.b16 %v137
    %v542 = vunpack.c.h.b16 %v137
    %v543 = vunpack.c.l.b16 %v138
    %v544 = vunpack.c.h.b16 %v138
    %v545 = vunpack.c.l.b16 %v139
    %v546 = vunpack.c.h.b16 %v139
    %v547 = vunpack.c.l.b16 %v140
    %v548 = vunpack.c.h.b16 %v140
    %v549 = vunpack.c.l.b16 %v141
    %v550 = vunpack.c.h.b16 %v141
    %v551 = vunpack.c.l.b16 %v142
    %v552 = vunpack.c.h.b16 %v142
    %v553 = vunpack.c.l.b16 %v143
    %v554 = vunpack.c.h.b16 %v143
    %v555 = vunpack.c.l.b16 %v144
    %v556 = vunpack.c.h.b16 %v144
    %v557 = vunpack.c.l.b16 %v145
    %v558 = vunpack.c.h.b16 %v145
    %v559 = vunpack.c.l.b16 %v146
    %v560 = vunpack.c.h.b16 %v146
    %v561 = vunpack.c.l.b16 %v147
    %v562 = vunpack.c.h.b16 %v147
    %v563 = vunpack.c.l.b16 %v148
    %v564 = vunpack.c.h.b16 %v148
    %v565 = vunpack.c.l.b16 %v149
    %v566 = vunpack.c.h.b16 %v149
    %v567 = vunpack.c.l.b16 %v150
    %v568 = vunpack.c.h.b16 %v150
    %v569 = vunpack.c.l.b16 %v151
    %v570 = vunpack.c.h.b16 %v151
    %v571 = vunpack.c.l.b16 %v152
    %v572 = vunpack.c.h.b16 %v152
    %v573 = vunpack.c.l.b16 %v153
    %v574 = vunpack.c.h.b16 %v153
    %v575 = vunpack.c.l.b16 %v154
    %v576 = vunpack.c.h.b16 %v154
    %v577 = vunpack.c.l.b16 %v155
    %v578 = vunpack.c.h.b16 %v155
    %v579 = vunpack.c.l.b16 %v156
    %v580 = vunpack.c.h.b16 %v156
    %v581 = vunpack.c.l.b16 %v157
    %v582 = vunpack.c.h.b16 %v157
    %v583 = vunpack.c.l.b16 %v158
    %v584 = vunpack.c.h.b16 %v158
    %v585 = vunpack.c.l.b16 %v159
    %v586 = vunpack.c.h.b16 %v159
    %v587 = vunpack.c.l.b16 %v160
    %v588 = vunpack.c.h.b16 %v160
    %v589 = vunpack.c.l.b16 %v161
    %v590 = vunpack.c.h.b16 %v161
    %v591 = vunpack.c.l.b16 %v162
    %v592 = vunpack.c.h.b16 %v162
    %v593 = vunpack.c.l.b16 %v163
    %v594 = vunpack.c.h.b16 %v163
    %v595 = vunpack.c.l.b16 %v164
    %v596 = vunpack.c.h.b16 %v164
    %v597 = vunpack.c.l.b16 %v165
    %v598 = vunpack.c.h.b16 %v165
    %v599 = vunpack.c.l.b16 %v166
    %v600 = vunpack.c.h.b16 %v166
    %v601 = vunpack.c.l.b16 %v167
    %v602 = vunpack.c.h.b16 %v167
    %v603 = vunpack.c.l.b16 %v168
    %v604 = vunpack.c.h.b16 %v168
    %v605 = vunpack.c.l.b16 %v169
    %v606 = vunpack.c.h.b16 %v169
    %v607 = vunpack.c.l.b16 %v170
    %v608 = vunpack.c.h.b16 %v170
    %v609 = vunpack.c.l.b16 %v171
    %v610 = vunpack.c.h.b16 %v171
    %v611 = vunpack.c.l.b16 %v172
    %v612 = vunpack.c.h.b16 %v172
    %v613 = vunpack.c.l.b16 %v173
    %v614 = vunpack.c.h.b16 %v173
    %v615 = vunpack.c.l.b16 %v174
    %v616 = vunpack.c.h.b16 %v174
    %v617 = vunpack.c.l.b16 %v175
    %v618 = vunpack.c.h.b16 %v175
    %v619 = vunpack.c.l.b16 %v176
    %v620 = vunpack.c.h.b16 %v176
    %v621 = vunpack.c.l.b16 %v177
    %v622 = vunpack.c.h.b16 %v177
    %v623 = vunpack.c.l.b16 %v178
    %v624 = vunpack.c.h.b16 %v178
    %v625 = vunpack.c.l.b16 %v179
    %v626 = vunpack.c.h.b16 %v179
    %v627 = vunpack.c.l.b16 %v180
    %v628 = vunpack.c.h.b16 %v180
    %v629 = vunpack.c.l.b16 %v181
    %v630 = vunpack.c.h.b16 %v181
    %v631 = vunpack.c.l.b16 %v182
    %v632 = vunpack.c.h.b16 %v182
    %v633 = vunpack.c.l.b16 %v183
    %v634 = vunpack.c.h.b16 %v183
    %v635 = vunpack.c.l.b16 %v184
    %v636 = vunpack.c.h.b16 %v184
    %v637 = vunpack.c.l.b16 %v185
    %v638 = vunpack.c.h.b16 %v185
    %v639 = vunpack.c.l.b16 %v186
    %v640 = vunpack.c.h.b16 %v186
    %v641 = vunpack.c.l.b16 %v187
    %v642 = vunpack.c.h.b16 %v187
    %v643 = vunpack.c.l.b16 %v188
    %v644 = vunpack.c.h.b16 %v188
    %v645 = vunpack.c.l.b16 %v189
    %v646 = vunpack.c.h.b16 %v189
    %v647 = vunpack.c.l.b16 %v190
    %v648 = vunpack.c.h.b16 %v190
    %v649 = vunpack.c.l.b16 %v191
    %v650 = vunpack.c.h.b16 %v191
    %v651 = vunpack.c.l.b16 %v192
    %v652 = vunpack.c.h.b16 %v192
    %v653 = vunpack.c.l.b16 %v193
    %v654 = vunpack.c.h.b16 %v193
    %v655 = vunpack.c.l.b16 %v194
    %v656 = vunpack.c.h.b16 %v194
    %v657 = vunpack.c.l.b16 %v195
    %v658 = vunpack.c.h.b16 %v195
    %v659 = vunpack.c.l.b16 %v196
    %v660 = vunpack.c.h.b16 %v196
    %v661 = vunpack.c.l.b16 %v197
    %v662 = vunpack.c.h.b16 %v197
    %v663 = vunpack.c.l.b16 %v198
    %v664 = vunpack.c.h.b16 %v198
    %v665 = vunpack.c.l.b16 %v199
    %v666 = vunpack.c.h.b16 %v199
    %v667 = vunpack.c.l.b16 %v200
    %v668 = vunpack.c.h.b16 %v200
    %v669 = vpack.c.b16 %v429, %v413
    %v670 = vpack.c.b16 %v430, %v414
    %v671 = vpack.c.b16 %v431, %v415
    %v672 = vpack.c.b16 %v432, %v416
    %v673 = vpack.c.b16 %v433, %v417
    %v674 = vpack.c.b16 %v434, %v418
    %v675 = vpack.c.b16 %v435, %v419
    %v676 = vpack.c.b16 %v436, %v420
    %v677 = vpack.c.b16 %v437, %v421
    %v678 = vpack.c.b16 %v438, %v422
    %v679 = vpack.c.b16 %v439, %v423
    %v680 = vpack.c.b16 %v440, %v424
    %v681 = vpack.c.b16 %v441, %v425
    %v682 = vpack.c.b16 %v442, %v426
    %v683 = vpack.c.b16 %v443, %v427
    %v684 = vpack.c.b16 %v444, %v428
    %v685 = vpack.c.b16 %v461, %v445
    %v686 = vpack.c.b16 %v462, %v446
    %v687 = vpack.c.b16 %v463, %v447
    %v688 = vpack.c.b16 %v464, %v448
    %v689 = vpack.c.b16 %v465, %v449
    %v690 = vpack.c.b16 %v466, %v450
    %v691 = vpack.c.b16 %v467, %v451
    %v692 = vpack.c.b16 %v468, %v452
    %v693 = vpack.c.b16 %v469, %v453
    %v694 = vpack.c.b16 %v470, %v454
    %v695 = vpack.c.b16 %v471, %v455
    %v696 = vpack.c.b16 %v472, %v456
    %v697 = vpack.c.b16 %v473, %v457
    %v698 = vpack.c.b16 %v474, %v458
    %v699 = vpack.c.b16 %v475, %v459
    %v700 = vpack.c.b16 %v476, %v460
    %v701 = vpack.c.b16 %v493, %v477
    %v702 = vpack.c.b16 %v494, %v478
    %v703 = vpack.c.b16 %v495, %v479
    %v704 = vpack.c.b16 %v496, %v480
    %v705 = vpack.c.b16 %v497, %v481
    %v706 = vpack.c.b16 %v498, %v482
    %v707 = vpack.c.b16 %v499, %v483
    %v708 = vpack.c.b16 %v500, %v484
    %v709 = vpack.c.b16 %v501, %v485
    %v710 = vpack.c.b16 %v502, %v486
    %v711 = vpack.c.b16 %v503, %v487
    %v712 = vpack.c.b16 %v504, %v488
    %v713 = vpack.c.b16 %v505, %v489
    %v714 = vpack.c.b16 %v506, %v490
    %v715 = vpack.c.b16 %v507, %v491
    %v716 = vpack.c.b16 %v508, %v492
    %v717 = vpack.c.b16 %v525, %v509
    %v718 = vpack.c.b16 %v526, %v510
    %v719 = vpack.c.b16 %v527, %v511
    %v720 = vpack.c.b16 %v528, %v512
    %v721 = vpack.c.b16 %v529, %v513
    %v722 = vpack.c.b16 %v530, %v514
    %v723 = vpack.c.b16 %v531, %v515
    %v724 = vpack.c.b16 %v532, %v516
    %v725 = vpack.c.b16 %v533, %v517
    %v726 = vpack.c.b16 %v534, %v518
    %v727 = vpack.c.b16 %v535, %v519
    %v728 = vpack.c.b16 %v536, %v520
    %v729 = vpack.c.b16 %v537, %v521
    %v730 = vpack.c.b16 %v538, %v522
    %v731 = vpack.c.b16 %v539, %v523
    %v732 = vpack.c.b16 %v540, %v524
    %v733 = vpack.c.b16 %v557, %v541
    %v734 = vpack.c.b16 %v558, %v542
    %v735 = vpack.c.b16 %v559, %v543
    %v736 = vpack.c.b16 %v560, %v544
    %v737 = vpack.c.b16 %v561, %v545
    %v738 = vpack.c.b16 %v562, %v546
    %v739 = vpack.c.b16 %v563, %v547
    %v740 = vpack.c.b16 %v564, %v548
    %v741 = vpack.c.b16 %v565, %v549
    %v742 = vpack.c.b16 %v566, %v550
    %v743 = vpack.c.b16 %v567, %v551
    %v744 = vpack.c.b16 %v568, %v552
    %v745 = vpack.c.b16 %v569, %v553
    %v746 = vpack.c.b16 %v570, %v554
    %v747 = vpack.c.b16 %v571, %v555
    %v748 = vpack.c.b16 %v572, %v556
    %v749 = vpack.c.b16 %v589, %v573
    %v750 = vpack.c.b16 %v590, %v574
    %v751 = vpack.c.b16 %v591, %v575
    %v752 = vpack.c.b16 %v592, %v576
    %v753 = vpack.c.b16 %v593, %v577
    %v754 = vpack.c.b16 %v594, %v578
    %v755 = vpack.c.b16 %v595, %v579
    %v756 = vpack.c.b16 %v596, %v580
    %v757 = vpack.c.b16 %v597, %v581
    %v758 = vpack.c.b16 %v598, %v582
    %v759 = vpack.c.b16 %v599, %v583
    %v760 = vpack.c.b16 %v600, %v584
    %v761 = vpack.c.b16 %v601, %v585
    %v762 = vpack.c.b16 %v602, %v586
    %v763 = vpack.c.b16 %v603, %v587
    %v764 = vpack.c.b16 %v604, %v588
    %v765 = vpack.c.b16 %v621, %v605
    %v766 = vpack.c.b16 %v622, %v606
    %v767 = vpack.c.b16 %v623, %v607
    %v768 = vpack.c.b16 %v624, %v608
    %v769 = vpack.c.b16 %v625, %v609
    %v770 = vpack.c.b16 %v626, %v610
    %v771 = vpack.c.b16 %v627, %v611
    %v772 = vpack.c.b16 %v628, %v612
    %v773 = vpack.c.b16 %v629, %v613
    %v774 = vpack.c.b16 %v630, %v614
    %v775 = vpack.c.b16 %v631, %v615
    %v776 = vpack.c.b16 %v632, %v616
    %v777 = vpack.c.b16 %v633, %v617
    %v778 = vpack.c.b16 %v634, %v618
    %v779 = vpack.c.b16 %v635, %v619
    %v780 = vpack.c.b16 %v636, %v620
    %v781 = vpack.c.b16 %v653, %v637
    %v782 = vpack.c.b16 %v654, %v638
    %v783 = vpack.c.b16 %v655, %v639
    %v784 = vpack.c.b16 %v656, %v640
    %v785 = vpack.c.b16 %v657, %v641
    %v786 = vpack.c.b16 %v658, %v642
    %v787 = vpack.c.b16 %v659, %v643
    %v788 = vpack.c.b16 %v660, %v644
    %v789 = vpack.c.b16 %v661, %v645
    %v790 = vpack.c.b16 %v662, %v646
    %v791 = vpack.c.b16 %v663, %v647
    %v792 = vpack.c.b16 %v664, %v648
    %v793 = vpack.c.b16 %v665, %v649
    %v794 = vpack.c.b16 %v666, %v650
    %v795 = vpack.c.b16 %v667, %v651
    %v796 = vpack.c.b16 %v668, %v652
    %925 = vmatprep.subr.bf16.mxu0 %v670
    %926 = vmatpush1.bf16.msra.mxu0 %v669
    %927 = vmatprep.subr.bf16.mxu0 %v686
    %928 = vmatpush1.bf16.msra.mxu0 %v685
    %929 = vmatprep.subr.bf16.mxu0 %v702
    %930 = vmatpush1.bf16.msra.mxu0 %v701
    %931 = vmatprep.subr.bf16.mxu0 %v718
    %932 = vmatpush1.bf16.msra.mxu0 %v717
    %933 = vmatprep.subr.bf16.mxu0 %v734
    %934 = vmatpush1.bf16.msra.mxu0 %v733
    %935 = vmatprep.subr.bf16.mxu0 %v750
    %936 = vmatpush1.bf16.msra.mxu0 %v749
    %937 = vmatprep.subr.bf16.mxu0 %v766
    %938 = vmatpush1.bf16.msra.mxu0 %v765
    %939 = vmatprep.subr.bf16.mxu0 %v782
    %940 = vmatpush1.bf16.msra.mxu0 %v781
    %941 = vmatprep.subr.bf16.mxu0 0
    %942 = vmatpush1.bf16.msra.mxu0 0
    %943 = vmatprep.subr.bf16.mxu0 0
    %944 = vmatpush1.bf16.msra.mxu0 0
    %945 = vmatprep.subr.bf16.mxu0 0
    %946 = vmatpush1.bf16.msra.mxu0 0
    %947 = vmatprep.subr.bf16.mxu0 0
    %948 = vmatpush1.bf16.msra.mxu0 0
    %949 = vmatprep.subr.bf16.mxu0 0
    %950 = vmatpush1.bf16.msra.mxu0 0
    %951 = vmatprep.subr.bf16.mxu0 0
    %952 = vmatpush1.bf16.msra.mxu0 0
    %953 = vmatprep.subr.bf16.mxu0 0
    %954 = vmatpush1.bf16.msra.mxu0 0
    %955 = vmatprep.subr.bf16.mxu0 0
    %956 = vmatpush1.bf16.msra.mxu0 0
    %957 = vmatprep.mubr.bf16.mxu0 0
    %958 = vmatmul.mubr.bf16.gmra.mrb[0].mxu0 %v72
    %v959 = vpop.f32.mrb[0].mxu0
    %v960 = vadd.f32 %v208, %v959
    %v961 = vpop.f32.mrb[0].mxu0
    %v962 = vadd.f32 %v212, %v961
    %v963 = vpop.f32.mrb[0].mxu0
    %v964 = vpop.f32.mrb[0].mxu0
    %965 = vdwg.mxu0
    %966 = vmatprep.subr.bf16.mxu0 %v672
    %967 = vmatpush1.bf16.msra.mxu0 %v671
    %968 = vmatprep.subr.bf16.mxu0 %v688
    %969 = vmatpush1.bf16.msra.mxu0 %v687
    %970 = vmatprep.subr.bf16.mxu0 %v704
    %971 = vmatpush1.bf16.msra.mxu0 %v703
    %972 = vmatprep.subr.bf16.mxu0 %v720
    %973 = vmatpush1.bf16.msra.mxu0 %v719
    %974 = vmatprep.subr.bf16.mxu0 %v736
    %975 = vmatpush1.bf16.msra.mxu0 %v735
    %976 = vmatprep.subr.bf16.mxu0 %v752
    %977 = vmatpush1.bf16.msra.mxu0 %v751
    %978 = vmatprep.subr.bf16.mxu0 %v768
    %979 = vmatpush1.bf16.msra.mxu0 %v767
    %980 = vmatprep.subr.bf16.mxu0 %v784
    %981 = vmatpush1.bf16.msra.mxu0 %v783
    %982 = vmatprep.subr.bf16.mxu0 0
    %983 = vmatpush1.bf16.msra.mxu0 0
    %984 = vmatprep.subr.bf16.mxu0 0
    %985 = vmatpush1.bf16.msra.mxu0 0
    %986 = vmatprep.subr.bf16.mxu0 0
    %987 = vmatpush1.bf16.msra.mxu0 0
    %988 = vmatprep.subr.bf16.mxu0 0
    %989 = vmatpush1.bf16.msra.mxu0 0
    %990 = vmatprep.subr.bf16.mxu0 0
    %991 = vmatpush1.bf16.msra.mxu0 0
    %992 = vmatprep.subr.bf16.mxu0 0
    %993 = vmatpush1.bf16.msra.mxu0 0
    %994 = vmatprep.subr.bf16.mxu0 0
    %995 = vmatpush1.bf16.msra.mxu0 0
    %996 = vmatprep.subr.bf16.mxu0 0
    %997 = vmatpush1.bf16.msra.mxu0 0
    %998 = vmatprep.mubr.bf16.mxu0 0
    %999 = vmatmul.mubr.bf16.gmra.mrb[0].mxu0 %v72
    %v1000 = vpop.f32.mrb[0].mxu0
    %v1001 = vadd.f32 %v216, %v1000
    %v1002 = vpop.f32.mrb[0].mxu0
    %v1003 = vadd.f32 %v220, %v1002
    %v1004 = vpop.f32.mrb[0].mxu0
    %v1005 = vpop.f32.mrb[0].mxu0
    %1006 = vdwg.mxu0
    %1007 = vmatprep.subr.bf16.mxu0 %v674
    %1008 = vmatpush1.bf16.msra.mxu0 %v673
    %1009 = vmatprep.subr.bf16.mxu0 %v690
    %1010 = vmatpush1.bf16.msra.mxu0 %v689
    %1011 = vmatprep.subr.bf16.mxu0 %v706
    %1012 = vmatpush1.bf16.msra.mxu0 %v705
    %1013 = vmatprep.subr.bf16.mxu0 %v722
    %1014 = vmatpush1.bf16.msra.mxu0 %v721
    %1015 = vmatprep.subr.bf16.mxu0 %v738
    %1016 = vmatpush1.bf16.msra.mxu0 %v737
    %1017 = vmatprep.subr.bf16.mxu0 %v754
    %1018 = vmatpush1.bf16.msra.mxu0 %v753
    %1019 = vmatprep.subr.bf16.mxu0 %v770
    %1020 = vmatpush1.bf16.msra.mxu0 %v769
    %1021 = vmatprep.subr.bf16.mxu0 %v786
    %1022 = vmatpush1.bf16.msra.mxu0 %v785
    %1023 = vmatprep.subr.bf16.mxu0 0
    %1024 = vmatpush1.bf16.msra.mxu0 0
    %1025 = vmatprep.subr.bf16.mxu0 0
    %1026 = vmatpush1.bf16.msra.mxu0 0
    %1027 = vmatprep.subr.bf16.mxu0 0
    %1028 = vmatpush1.bf16.msra.mxu0 0
    %1029 = vmatprep.subr.bf16.mxu0 0
    %1030 = vmatpush1.bf16.msra.mxu0 0
    %1031 = vmatprep.subr.bf16.mxu0 0
    %1032 = vmatpush1.bf16.msra.mxu0 0
    %1033 = vmatprep.subr.bf16.mxu0 0
    %1034 = vmatpush1.bf16.msra.mxu0 0
    %1035 = vmatprep.subr.bf16.mxu0 0
    %1036 = vmatpush1.bf16.msra.mxu0 0
    %1037 = vmatprep.subr.bf16.mxu0 0
    %1038 = vmatpush1.bf16.msra.mxu0 0
    %1039 = vmatprep.mubr.bf16.mxu0 0
    %1040 = vmatmul.mubr.bf16.gmra.mrb[0].mxu0 %v72
    %v1041 = vpop.f32.mrb[0].mxu0
    %v1042 = vadd.f32 %v224, %v1041
    %v1043 = vpop.f32.mrb[0].mxu0
    %v1044 = vadd.f32 %v228, %v1043
    %v1045 = vpop.f32.mrb[0].mxu0
    %v1046 = vpop.f32.mrb[0].mxu0
    %1047 = vdwg.mxu0
    %1048 = vmatprep.subr.bf16.mxu0 %v676
    %1049 = vmatpush1.bf16.msra.mxu0 %v675
    %1050 = vmatprep.subr.bf16.mxu0 %v692
    %1051 = vmatpush1.bf16.msra.mxu0 %v691
    %1052 = vmatprep.subr.bf16.mxu0 %v708
    %1053 = vmatpush1.bf16.msra.mxu0 %v707
    %1054 = vmatprep.subr.bf16.mxu0 %v724
    %1055 = vmatpush1.bf16.msra.mxu0 %v723
    %1056 = vmatprep.subr.bf16.mxu0 %v740
    %1057 = vmatpush1.bf16.msra.mxu0 %v739
    %1058 = vmatprep.subr.bf16.mxu0 %v756
    %1059 = vmatpush1.bf16.msra.mxu0 %v755
    %1060 = vmatprep.subr.bf16.mxu0 %v772
    %1061 = vmatpush1.bf16.msra.mxu0 %v771
    %1062 = vmatprep.subr.bf16.mxu0 %v788
    %1063 = vmatpush1.bf16.msra.mxu0 %v787
    %1064 = vmatprep.subr.bf16.mxu0 0
    %1065 = vmatpush1.bf16.msra.mxu0 0
    %1066 = vmatprep.subr.bf16.mxu0 0
    %1067 = vmatpush1.bf16.msra.mxu0 0
    %1068 = vmatprep.subr.bf16.mxu0 0
    %1069 = vmatpush1.bf16.msra.mxu0 0
    %1070 = vmatprep.subr.bf16.mxu0 0
    %1071 = vmatpush1.bf16.msra.mxu0 0
    %1072 = vmatprep.subr.bf16.mxu0 0
    %1073 = vmatpush1.bf16.msra.mxu0 0
    %1074 = vmatprep.subr.bf16.mxu0 0
    %1075 = vmatpush1.bf16.msra.mxu0 0
    %1076 = vmatprep.subr.bf16.mxu0 0
    %1077 = vmatpush1.bf16.msra.mxu0 0
    %1078 = vmatprep.subr.bf16.mxu0 0
    %1079 = vmatpush1.bf16.msra.mxu0 0
    %1080 = vmatprep.mubr.bf16.mxu0 0
    %1081 = vmatmul.mubr.bf16.gmra.mrb[0].mxu0 %v72
    %v1082 = vpop.f32.mrb[0].mxu0
    %v1083 = vadd.f32 %v232, %v1082
    %v1084 = vpop.f32.mrb[0].mxu0
    %v1085 = vadd.f32 %v236, %v1084
    %v1086 = vpop.f32.mrb[0].mxu0
    %v1087 = vpop.f32.mrb[0].mxu0
    %1088 = vdwg.mxu0
    %1089 = vmatprep.subr.bf16.mxu0 %v678
    %1090 = vmatpush1.bf16.msra.mxu0 %v677
    %1091 = vmatprep.subr.bf16.mxu0 %v694
    %1092 = vmatpush1.bf16.msra.mxu0 %v693
    %1093 = vmatprep.subr.bf16.mxu0 %v710
    %1094 = vmatpush1.bf16.msra.mxu0 %v709
    %1095 = vmatprep.subr.bf16.mxu0 %v726
    %1096 = vmatpush1.bf16.msra.mxu0 %v725
    %1097 = vmatprep.subr.bf16.mxu0 %v742
    %1098 = vmatpush1.bf16.msra.mxu0 %v741
    %1099 = vmatprep.subr.bf16.mxu0 %v758
    %1100 = vmatpush1.bf16.msra.mxu0 %v757
    %1101 = vmatprep.subr.bf16.mxu0 %v774
    %1102 = vmatpush1.bf16.msra.mxu0 %v773
    %1103 = vmatprep.subr.bf16.mxu0 %v790
    %1104 = vmatpush1.bf16.msra.mxu0 %v789
    %1105 = vmatprep.subr.bf16.mxu0 0
    %1106 = vmatpush1.bf16.msra.mxu0 0
    %1107 = vmatprep.subr.bf16.mxu0 0
    %1108 = vmatpush1.bf16.msra.mxu0 0
    %1109 = vmatprep.subr.bf16.mxu0 0
    %1110 = vmatpush1.bf16.msra.mxu0 0
    %1111 = vmatprep.subr.bf16.mxu0 0
    %1112 = vmatpush1.bf16.msra.mxu0 0
    %1113 = vmatprep.subr.bf16.mxu0 0
    %1114 = vmatpush1.bf16.msra.mxu0 0
    %1115 = vmatprep.subr.bf16.mxu0 0
    %1116 = vmatpush1.bf16.msra.mxu0 0
    %1117 = vmatprep.subr.bf16.mxu0 0
    %1118 = vmatpush1.bf16.msra.mxu0 0
    %1119 = vmatprep.subr.bf16.mxu0 0
    %1120 = vmatpush1.bf16.msra.mxu0 0
    %1121 = vmatprep.mubr.bf16.mxu0 0
    %1122 = vmatmul.mubr.bf16.gmra.mrb[0].mxu0 %v72
    %v1123 = vpop.f32.mrb[0].mxu0
    %v1124 = vadd.f32 %v240, %v1123
    %v1125 = vpop.f32.mrb[0].mxu0
    %v1126 = vadd.f32 %v244, %v1125
    %v1127 = vpop.f32.mrb[0].mxu0
    %v1128 = vpop.f32.mrb[0].mxu0
    %1129 = vdwg.mxu0
    %1130 = vmatprep.subr.bf16.mxu0 %v680
    %1131 = vmatpush1.bf16.msra.mxu0 %v679
    %1132 = vmatprep.subr.bf16.mxu0 %v696
    %1133 = vmatpush1.bf16.msra.mxu0 %v695
    %1134 = vmatprep.subr.bf16.mxu0 %v712
    %1135 = vmatpush1.bf16.msra.mxu0 %v711
    %1136 = vmatprep.subr.bf16.mxu0 %v728
    %1137 = vmatpush1.bf16.msra.mxu0 %v727
    %1138 = vmatprep.subr.bf16.mxu0 %v744
    %1139 = vmatpush1.bf16.msra.mxu0 %v743
    %1140 = vmatprep.subr.bf16.mxu0 %v760
    %1141 = vmatpush1.bf16.msra.mxu0 %v759
    %1142 = vmatprep.subr.bf16.mxu0 %v776
    %1143 = vmatpush1.bf16.msra.mxu0 %v775
    %1144 = vmatprep.subr.bf16.mxu0 %v792
    %1145 = vmatpush1.bf16.msra.mxu0 %v791
    %1146 = vmatprep.subr.bf16.mxu0 0
    %1147 = vmatpush1.bf16.msra.mxu0 0
    %1148 = vmatprep.subr.bf16.mxu0 0
    %1149 = vmatpush1.bf16.msra.mxu0 0
    %1150 = vmatprep.subr.bf16.mxu0 0
    %1151 = vmatpush1.bf16.msra.mxu0 0
    %1152 = vmatprep.subr.bf16.mxu0 0
    %1153 = vmatpush1.bf16.msra.mxu0 0
    %1154 = vmatprep.subr.bf16.mxu0 0
    %1155 = vmatpush1.bf16.msra.mxu0 0
    %1156 = vmatprep.subr.bf16.mxu0 0
    %1157 = vmatpush1.bf16.msra.mxu0 0
    %1158 = vmatprep.subr.bf16.mxu0 0
    %1159 = vmatpush1.bf16.msra.mxu0 0
    %1160 = vmatprep.subr.bf16.mxu0 0
    %1161 = vmatpush1.bf16.msra.mxu0 0
    %1162 = vmatprep.mubr.bf16.mxu0 0
    %1163 = vmatmul.mubr.bf16.gmra.mrb[0].mxu0 %v72
    %v1164 = vpop.f32.mrb[0].mxu0
    %v1165 = vadd.f32 %v248, %v1164
    %v1166 = vpop.f32.mrb[0].mxu0
    %v1167 = vadd.f32 %v252, %v1166
    %v1168 = vpop.f32.mrb[0].mxu0
    %v1169 = vpop.f32.mrb[0].mxu0
    %1170 = vdwg.mxu0
    %1171 = vmatprep.subr.bf16.mxu0 %v682
    %1172 = vmatpush1.bf16.msra.mxu0 %v681
    %1173 = vmatprep.subr.bf16.mxu0 %v698
    %1174 = vmatpush1.bf16.msra.mxu0 %v697
    %1175 = vmatprep.subr.bf16.mxu0 %v714
    %1176 = vmatpush1.bf16.msra.mxu0 %v713
    %1177 = vmatprep.subr.bf16.mxu0 %v730
    %1178 = vmatpush1.bf16.msra.mxu0 %v729
    %1179 = vmatprep.subr.bf16.mxu0 %v746
    %1180 = vmatpush1.bf16.msra.mxu0 %v745
    %1181 = vmatprep.subr.bf16.mxu0 %v762
    %1182 = vmatpush1.bf16.msra.mxu0 %v761
    %1183 = vmatprep.subr.bf16.mxu0 %v778
    %1184 = vmatpush1.bf16.msra.mxu0 %v777
    %1185 = vmatprep.subr.bf16.mxu0 %v794
    %1186 = vmatpush1.bf16.msra.mxu0 %v793
    %1187 = vmatprep.subr.bf16.mxu0 0
    %1188 = vmatpush1.bf16.msra.mxu0 0
    %1189 = vmatprep.subr.bf16.mxu0 0
    %1190 = vmatpush1.bf16.msra.mxu0 0
    %1191 = vmatprep.subr.bf16.mxu0 0
    %1192 = vmatpush1.bf16.msra.mxu0 0
    %1193 = vmatprep.subr.bf16.mxu0 0
    %1194 = vmatpush1.bf16.msra.mxu0 0
    %1195 = vmatprep.subr.bf16.mxu0 0
    %1196 = vmatpush1.bf16.msra.mxu0 0
    %1197 = vmatprep.subr.bf16.mxu0 0
    %1198 = vmatpush1.bf16.msra.mxu0 0
    %1199 = vmatprep.subr.bf16.mxu0 0
    %1200 = vmatpush1.bf16.msra.mxu0 0
    %1201 = vmatprep.subr.bf16.mxu0 0
    %1202 = vmatpush1.bf16.msra.mxu0 0
    %1203 = vmatprep.mubr.bf16.mxu0 0
    %1204 = vmatmul.mubr.bf16.gmra.mrb[0].mxu0 %v72
    %v1205 = vpop.f32.mrb[0].mxu0
    %v1206 = vadd.f32 %v256, %v1205
    %v1207 = vpop.f32.mrb[0].mxu0
    %v1208 = vadd.f32 %v260, %v1207
    %v1209 = vpop.f32.mrb[0].mxu0
    %v1210 = vpop.f32.mrb[0].mxu0
    %1211 = vdwg.mxu0
    %1212 = vmatprep.subr.bf16.mxu0 %v684
    %1213 = vmatpush1.bf16.msra.mxu0 %v683
    %1214 = vmatprep.subr.bf16.mxu0 %v700
    %1215 = vmatpush1.bf16.msra.mxu0 %v699
    %1216 = vmatprep.subr.bf16.mxu0 %v716
    %1217 = vmatpush1.bf16.msra.mxu0 %v715
    %1218 = vmatprep.subr.bf16.mxu0 %v732
    %1219 = vmatpush1.bf16.msra.mxu0 %v731
    %1220 = vmatprep.subr.bf16.mxu0 %v748
    %1221 = vmatpush1.bf16.msra.mxu0 %v747
    %1222 = vmatprep.subr.bf16.mxu0 %v764
    %1223 = vmatpush1.bf16.msra.mxu0 %v763
    %1224 = vmatprep.subr.bf16.mxu0 %v780
    %1225 = vmatpush1.bf16.msra.mxu0 %v779
    %1226 = vmatprep.subr.bf16.mxu0 %v796
    %1227 = vmatpush1.bf16.msra.mxu0 %v795
    %1228 = vmatprep.subr.bf16.mxu0 0
    %1229 = vmatpush1.bf16.msra.mxu0 0
    %1230 = vmatprep.subr.bf16.mxu0 0
    %1231 = vmatpush1.bf16.msra.mxu0 0
    %1232 = vmatprep.subr.bf16.mxu0 0
    %1233 = vmatpush1.bf16.msra.mxu0 0
    %1234 = vmatprep.subr.bf16.mxu0 0
    %1235 = vmatpush1.bf16.msra.mxu0 0
    %1236 = vmatprep.subr.bf16.mxu0 0
    %1237 = vmatpush1.bf16.msra.mxu0 0
    %1238 = vmatprep.subr.bf16.mxu0 0
    %1239 = vmatpush1.bf16.msra.mxu0 0
    %1240 = vmatprep.subr.bf16.mxu0 0
    %1241 = vmatpush1.bf16.msra.mxu0 0
    %1242 = vmatprep.subr.bf16.mxu0 0
    %1243 = vmatpush1.bf16.msra.mxu0 0
    %1244 = vmatprep.mubr.bf16.mxu0 0
    %1245 = vmatmul.mubr.bf16.gmra.mrb[0].mxu0 %v72
    %v1246 = vpop.f32.mrb[0].mxu0
    %v1247 = vadd.f32 %v264, %v1246
    %v1248 = vpop.f32.mrb[0].mxu0
    %v1249 = vadd.f32 %v268, %v1248
    %v1250 = vpop.f32.mrb[0].mxu0
    %v1251 = vpop.f32.mrb[0].mxu0
    %1252 = vdwg.mxu0
    %v1253 = vpack.c.bf16 %v960, %v960
    %v1254 = vpack.c.bf16 %v962, %v962
    %v1255 = vpack.c.bf16 %v1001, %v1001
    %v1256 = vpack.c.bf16 %v1003, %v1003
    %v1257 = vpack.c.bf16 %v1042, %v1042
    %v1258 = vpack.c.bf16 %v1044, %v1044
    %v1259 = vpack.c.bf16 %v1083, %v1083
    %v1260 = vpack.c.bf16 %v1085, %v1085
    %v1261 = vpack.c.bf16 %v1124, %v1124
    %v1262 = vpack.c.bf16 %v1126, %v1126
    %v1263 = vpack.c.bf16 %v1165, %v1165
    %v1264 = vpack.c.bf16 %v1167, %v1167
    %v1265 = vpack.c.bf16 %v1206, %v1206
    %v1266 = vpack.c.bf16 %v1208, %v1208
    %v1267 = vpack.c.bf16 %v1247, %v1247
    %v1268 = vpack.c.bf16 %v1249, %v1249
    %v1269 = vld [vmem:[#allocation6] sm:$0xff]
    %v1270 = vld [vmem:[#allocation6 + $0x8] sm:$0xff]
    %v1271 = vld [vmem:[#allocation6 + $0x10] sm:$0xff]
    %v1272 = vld [vmem:[#allocation6 + $0x18] sm:$0xff]
    %v1273 = vld [vmem:[#allocation6 + $0x20] sm:$0xff]
    %v1274 = vld [vmem:[#allocation6 + $0x28] sm:$0xff]
    %v1275 = vld [vmem:[#allocation6 + $0x30] sm:$0xff]
    %v1276 = vld [vmem:[#allocation6 + $0x38] sm:$0xff]
    %v1277 = vld [vmem:[#allocation6 + $0x40] sm:$0xff]
    %v1278 = vld [vmem:[#allocation6 + $0x48] sm:$0xff]
    %v1279 = vld [vmem:[#allocation6 + $0x50] sm:$0xff]
    %v1280 = vld [vmem:[#allocation6 + $0x58] sm:$0xff]
    %v1281 = vld [vmem:[#allocation6 + $0x60] sm:$0xff]
    %v1282 = vld [vmem:[#allocation6 + $0x68] sm:$0xff]
    %v1283 = vld [vmem:[#allocation6 + $0x70] sm:$0xff]
    %v1284 = vld [vmem:[#allocation6 + $0x78] sm:$0xff]
    %v1285 = vld [vmem:[#allocation6 + $0x80] sm:$0xff]
    %v1286 = vld [vmem:[#allocation6 + $0x88] sm:$0xff]
    %v1287 = vld [vmem:[#allocation6 + $0x90] sm:$0xff]
    %v1288 = vld [vmem:[#allocation6 + $0x98] sm:$0xff]
    %v1289 = vld [vmem:[#allocation6 + $0xa0] sm:$0xff]
    %v1290 = vld [vmem:[#allocation6 + $0xa8] sm:$0xff]
    %v1291 = vld [vmem:[#allocation6 + $0xb0] sm:$0xff]
    %v1292 = vld [vmem:[#allocation6 + $0xb8] sm:$0xff]
    %v1293 = vld [vmem:[#allocation6 + $0xc0] sm:$0xff]
    %v1294 = vld [vmem:[#allocation6 + $0xc8] sm:$0xff]
    %v1295 = vld [vmem:[#allocation6 + $0xd0] sm:$0xff]
    %v1296 = vld [vmem:[#allocation6 + $0xd8] sm:$0xff]
    %v1297 = vld [vmem:[#allocation6 + $0xe0] sm:$0xff]
    %v1298 = vld [vmem:[#allocation6 + $0xe8] sm:$0xff]
    %v1299 = vld [vmem:[#allocation6 + $0xf0] sm:$0xff]
    %v1300 = vld [vmem:[#allocation6 + $0xf8] sm:$0xff]
    %v1301 = vld [vmem:[#allocation6 + $0x100] sm:$0xff]
    %v1302 = vld [vmem:[#allocation6 + $0x108] sm:$0xff]
    %v1303 = vld [vmem:[#allocation6 + $0x110] sm:$0xff]
    %v1304 = vld [vmem:[#allocation6 + $0x118] sm:$0xff]
    %v1305 = vld [vmem:[#allocation6 + $0x120] sm:$0xff]
    %v1306 = vld [vmem:[#allocation6 + $0x128] sm:$0xff]
    %v1307 = vld [vmem:[#allocation6 + $0x130] sm:$0xff]
    %v1308 = vld [vmem:[#allocation6 + $0x138] sm:$0xff]
    %v1309 = vld [vmem:[#allocation6 + $0x140] sm:$0xff]
    %v1310 = vld [vmem:[#allocation6 + $0x148] sm:$0xff]
    %v1311 = vld [vmem:[#allocation6 + $0x150] sm:$0xff]
    %v1312 = vld [vmem:[#allocation6 + $0x158] sm:$0xff]
    %v1313 = vld [vmem:[#allocation6 + $0x160] sm:$0xff]
    %v1314 = vld [vmem:[#allocation6 + $0x168] sm:$0xff]
    %v1315 = vld [vmem:[#allocation6 + $0x170] sm:$0xff]
    %v1316 = vld [vmem:[#allocation6 + $0x178] sm:$0xff]
    %v1317 = vld [vmem:[#allocation6 + $0x180] sm:$0xff]
    %v1318 = vld [vmem:[#allocation6 + $0x188] sm:$0xff]
    %v1319 = vld [vmem:[#allocation6 + $0x190] sm:$0xff]
    %v1320 = vld [vmem:[#allocation6 + $0x198] sm:$0xff]
    %v1321 = vld [vmem:[#allocation6 + $0x1a0] sm:$0xff]
    %v1322 = vld [vmem:[#allocation6 + $0x1a8] sm:$0xff]
    %v1323 = vld [vmem:[#allocation6 + $0x1b0] sm:$0xff]
    %v1324 = vld [vmem:[#allocation6 + $0x1b8] sm:$0xff]
    %v1325 = vld [vmem:[#allocation6 + $0x1c0] sm:$0xff]
    %v1326 = vld [vmem:[#allocation6 + $0x1c8] sm:$0xff]
    %v1327 = vld [vmem:[#allocation6 + $0x1d0] sm:$0xff]
    %v1328 = vld [vmem:[#allocation6 + $0x1d8] sm:$0xff]
    %v1329 = vld [vmem:[#allocation6 + $0x1e0] sm:$0xff]
    %v1330 = vld [vmem:[#allocation6 + $0x1e8] sm:$0xff]
    %v1331 = vld [vmem:[#allocation6 + $0x1f0] sm:$0xff]
    %v1332 = vld [vmem:[#allocation6 + $0x1f8] sm:$0xff]
    %v1333 = vld [vmem:[#allocation6 + $0x200] sm:$0xff]
    %v1334 = vld [vmem:[#allocation6 + $0x208] sm:$0xff]
    %v1335 = vld [vmem:[#allocation6 + $0x210] sm:$0xff]
    %v1336 = vld [vmem:[#allocation6 + $0x218] sm:$0xff]
    %v1337 = vld [vmem:[#allocation6 + $0x220] sm:$0xff]
    %v1338 = vld [vmem:[#allocation6 + $0x228] sm:$0xff]
    %v1339 = vld [vmem:[#allocation6 + $0x230] sm:$0xff]
    %v1340 = vld [vmem:[#allocation6 + $0x238] sm:$0xff]
    %v1341 = vld [vmem:[#allocation6 + $0x240] sm:$0xff]
    %v1342 = vld [vmem:[#allocation6 + $0x248] sm:$0xff]
    %v1343 = vld [vmem:[#allocation6 + $0x250] sm:$0xff]
    %v1344 = vld [vmem:[#allocation6 + $0x258] sm:$0xff]
    %v1345 = vld [vmem:[#allocation6 + $0x260] sm:$0xff]
    %v1346 = vld [vmem:[#allocation6 + $0x268] sm:$0xff]
    %v1347 = vld [vmem:[#allocation6 + $0x270] sm:$0xff]
    %v1348 = vld [vmem:[#allocation6 + $0x278] sm:$0xff]
    %v1349 = vld [vmem:[#allocation6 + $0x280] sm:$0xff]
    %v1350 = vld [vmem:[#allocation6 + $0x288] sm:$0xff]
    %v1351 = vld [vmem:[#allocation6 + $0x290] sm:$0xff]
    %v1352 = vld [vmem:[#allocation6 + $0x298] sm:$0xff]
    %v1353 = vld [vmem:[#allocation6 + $0x2a0] sm:$0xff]
    %v1354 = vld [vmem:[#allocation6 + $0x2a8] sm:$0xff]
    %v1355 = vld [vmem:[#allocation6 + $0x2b0] sm:$0xff]
    %v1356 = vld [vmem:[#allocation6 + $0x2b8] sm:$0xff]
    %v1357 = vld [vmem:[#allocation6 + $0x2c0] sm:$0xff]
    %v1358 = vld [vmem:[#allocation6 + $0x2c8] sm:$0xff]
    %v1359 = vld [vmem:[#allocation6 + $0x2d0] sm:$0xff]
    %v1360 = vld [vmem:[#allocation6 + $0x2d8] sm:$0xff]
    %v1361 = vld [vmem:[#allocation6 + $0x2e0] sm:$0xff]
    %v1362 = vld [vmem:[#allocation6 + $0x2e8] sm:$0xff]
    %v1363 = vld [vmem:[#allocation6 + $0x2f0] sm:$0xff]
    %v1364 = vld [vmem:[#allocation6 + $0x2f8] sm:$0xff]
    %v1365 = vld [vmem:[#allocation6 + $0x300] sm:$0xff]
    %v1366 = vld [vmem:[#allocation6 + $0x308] sm:$0xff]
    %v1367 = vld [vmem:[#allocation6 + $0x310] sm:$0xff]
    %v1368 = vld [vmem:[#allocation6 + $0x318] sm:$0xff]
    %v1369 = vld [vmem:[#allocation6 + $0x320] sm:$0xff]
    %v1370 = vld [vmem:[#allocation6 + $0x328] sm:$0xff]
    %v1371 = vld [vmem:[#allocation6 + $0x330] sm:$0xff]
    %v1372 = vld [vmem:[#allocation6 + $0x338] sm:$0xff]
    %v1373 = vld [vmem:[#allocation6 + $0x340] sm:$0xff]
    %v1374 = vld [vmem:[#allocation6 + $0x348] sm:$0xff]
    %v1375 = vld [vmem:[#allocation6 + $0x350] sm:$0xff]
    %v1376 = vld [vmem:[#allocation6 + $0x358] sm:$0xff]
    %v1377 = vld [vmem:[#allocation6 + $0x360] sm:$0xff]
    %v1378 = vld [vmem:[#allocation6 + $0x368] sm:$0xff]
    %v1379 = vld [vmem:[#allocation6 + $0x370] sm:$0xff]
    %v1380 = vld [vmem:[#allocation6 + $0x378] sm:$0xff]
    %v1381 = vld [vmem:[#allocation6 + $0x380] sm:$0xff]
    %v1382 = vld [vmem:[#allocation6 + $0x388] sm:$0xff]
    %v1383 = vld [vmem:[#allocation6 + $0x390] sm:$0xff]
    %v1384 = vld [vmem:[#allocation6 + $0x398] sm:$0xff]
    %v1385 = vld [vmem:[#allocation6 + $0x3a0] sm:$0xff]
    %v1386 = vld [vmem:[#allocation6 + $0x3a8] sm:$0xff]
    %v1387 = vld [vmem:[#allocation6 + $0x3b0] sm:$0xff]
    %v1388 = vld [vmem:[#allocation6 + $0x3b8] sm:$0xff]
    %v1389 = vld [vmem:[#allocation6 + $0x3c0] sm:$0xff]
    %v1390 = vld [vmem:[#allocation6 + $0x3c8] sm:$0xff]
    %v1391 = vld [vmem:[#allocation6 + $0x3d0] sm:$0xff]
    %v1392 = vld [vmem:[#allocation6 + $0x3d8] sm:$0xff]
    %v1393 = vld [vmem:[#allocation6 + $0x3e0] sm:$0xff]
    %v1394 = vld [vmem:[#allocation6 + $0x3e8] sm:$0xff]
    %v1395 = vld [vmem:[#allocation6 + $0x3f0] sm:$0xff]
    %v1396 = vld [vmem:[#allocation6 + $0x3f8] sm:$0xff]
    %v1397 = vld [vmem:[#allocation6 + $0x400] sm:$0xff]
    %v1398 = vld [vmem:[#allocation6 + $0x408] sm:$0xff]
    %v1399 = vld [vmem:[#allocation6 + $0x410] sm:$0xff]
    %v1400 = vld [vmem:[#allocation6 + $0x418] sm:$0xff]
    %v1401 = vld [vmem:[#allocation6 + $0x420] sm:$0xff]
    %v1402 = vld [vmem:[#allocation6 + $0x428] sm:$0xff]
    %v1403 = vld [vmem:[#allocation6 + $0x430] sm:$0xff]
    %v1404 = vld [vmem:[#allocation6 + $0x438] sm:$0xff]
    %v1405 = vld [vmem:[#allocation6 + $0x440] sm:$0xff]
    %v1406 = vld [vmem:[#allocation6 + $0x448] sm:$0xff]
    %v1407 = vld [vmem:[#allocation6 + $0x450] sm:$0xff]
    %v1408 = vld [vmem:[#allocation6 + $0x458] sm:$0xff]
    %v1409 = vld [vmem:[#allocation6 + $0x460] sm:$0xff]
    %v1410 = vld [vmem:[#allocation6 + $0x468] sm:$0xff]
    %v1411 = vld [vmem:[#allocation6 + $0x470] sm:$0xff]
    %v1412 = vld [vmem:[#allocation6 + $0x478] sm:$0xff]
    %v1413 = vld [vmem:[#allocation6 + $0x480] sm:$0xff]
    %v1414 = vld [vmem:[#allocation6 + $0x488] sm:$0xff]
    %v1415 = vld [vmem:[#allocation6 + $0x490] sm:$0xff]
    %v1416 = vld [vmem:[#allocation6 + $0x498] sm:$0xff]
    %v1417 = vld [vmem:[#allocation6 + $0x4a0] sm:$0xff]
    %v1418 = vld [vmem:[#allocation6 + $0x4a8] sm:$0xff]
    %v1419 = vld [vmem:[#allocation6 + $0x4b0] sm:$0xff]
    %v1420 = vld [vmem:[#allocation6 + $0x4b8] sm:$0xff]
    %v1421 = vld [vmem:[#allocation6 + $0x4c0] sm:$0xff]
    %v1422 = vld [vmem:[#allocation6 + $0x4c8] sm:$0xff]
    %v1423 = vld [vmem:[#allocation6 + $0x4d0] sm:$0xff]
    %v1424 = vld [vmem:[#allocation6 + $0x4d8] sm:$0xff]
    %v1425 = vld [vmem:[#allocation6 + $0x4e0] sm:$0xff]
    %v1426 = vld [vmem:[#allocation6 + $0x4e8] sm:$0xff]
    %v1427 = vld [vmem:[#allocation6 + $0x4f0] sm:$0xff]
    %v1428 = vld [vmem:[#allocation6 + $0x4f8] sm:$0xff]
    %v1429 = vld [vmem:[#allocation6 + $0x500] sm:$0xff]
    %v1430 = vld [vmem:[#allocation6 + $0x508] sm:$0xff]
    %v1431 = vld [vmem:[#allocation6 + $0x510] sm:$0xff]
    %v1432 = vld [vmem:[#allocation6 + $0x518] sm:$0xff]
    %v1433 = vld [vmem:[#allocation6 + $0x520] sm:$0xff]
    %v1434 = vld [vmem:[#allocation6 + $0x528] sm:$0xff]
    %v1435 = vld [vmem:[#allocation6 + $0x530] sm:$0xff]
    %v1436 = vld [vmem:[#allocation6 + $0x538] sm:$0xff]
    %v1437 = vld [vmem:[#allocation6 + $0x540] sm:$0xff]
    %v1438 = vld [vmem:[#allocation6 + $0x548] sm:$0xff]
    %v1439 = vld [vmem:[#allocation6 + $0x550] sm:$0xff]
    %v1440 = vld [vmem:[#allocation6 + $0x558] sm:$0xff]
    %v1441 = vld [vmem:[#allocation6 + $0x560] sm:$0xff]
    %v1442 = vld [vmem:[#allocation6 + $0x568] sm:$0xff]
    %v1443 = vld [vmem:[#allocation6 + $0x570] sm:$0xff]
    %v1444 = vld [vmem:[#allocation6 + $0x578] sm:$0xff]
    %v1445 = vld [vmem:[#allocation6 + $0x580] sm:$0xff]
    %v1446 = vld [vmem:[#allocation6 + $0x588] sm:$0xff]
    %v1447 = vld [vmem:[#allocation6 + $0x590] sm:$0xff]
    %v1448 = vld [vmem:[#allocation6 + $0x598] sm:$0xff]
    %v1449 = vld [vmem:[#allocation6 + $0x5a0] sm:$0xff]
    %v1450 = vld [vmem:[#allocation6 + $0x5a8] sm:$0xff]
    %v1451 = vld [vmem:[#allocation6 + $0x5b0] sm:$0xff]
    %v1452 = vld [vmem:[#allocation6 + $0x5b8] sm:$0xff]
    %v1453 = vld [vmem:[#allocation6 + $0x5c0] sm:$0xff]
    %v1454 = vld [vmem:[#allocation6 + $0x5c8] sm:$0xff]
    %v1455 = vld [vmem:[#allocation6 + $0x5d0] sm:$0xff]
    %v1456 = vld [vmem:[#allocation6 + $0x5d8] sm:$0xff]
    %v1457 = vld [vmem:[#allocation6 + $0x5e0] sm:$0xff]
    %v1458 = vld [vmem:[#allocation6 + $0x5e8] sm:$0xff]
    %v1459 = vld [vmem:[#allocation6 + $0x5f0] sm:$0xff]
    %v1460 = vld [vmem:[#allocation6 + $0x5f8] sm:$0xff]
    %v1461 = vld [vmem:[#allocation6 + $0x600] sm:$0xff]
    %v1462 = vld [vmem:[#allocation6 + $0x608] sm:$0xff]
    %v1463 = vld [vmem:[#allocation6 + $0x610] sm:$0xff]
    %v1464 = vld [vmem:[#allocation6 + $0x618] sm:$0xff]
    %v1465 = vld [vmem:[#allocation6 + $0x620] sm:$0xff]
    %v1466 = vld [vmem:[#allocation6 + $0x628] sm:$0xff]
    %v1467 = vld [vmem:[#allocation6 + $0x630] sm:$0xff]
    %v1468 = vld [vmem:[#allocation6 + $0x638] sm:$0xff]
    %v1469 = vld [vmem:[#allocation6 + $0x640] sm:$0xff]
    %v1470 = vld [vmem:[#allocation6 + $0x648] sm:$0xff]
    %v1471 = vld [vmem:[#allocation6 + $0x650] sm:$0xff]
    %v1472 = vld [vmem:[#allocation6 + $0x658] sm:$0xff]
    %v1473 = vld [vmem:[#allocation6 + $0x660] sm:$0xff]
    %v1474 = vld [vmem:[#allocation6 + $0x668] sm:$0xff]
    %v1475 = vld [vmem:[#allocation6 + $0x670] sm:$0xff]
    %v1476 = vld [vmem:[#allocation6 + $0x678] sm:$0xff]
    %v1477 = vld [vmem:[#allocation6 + $0x680] sm:$0xff]
    %v1478 = vld [vmem:[#allocation6 + $0x688] sm:$0xff]
    %v1479 = vld [vmem:[#allocation6 + $0x690] sm:$0xff]
    %v1480 = vld [vmem:[#allocation6 + $0x698] sm:$0xff]
    %v1481 = vld [vmem:[#allocation6 + $0x6a0] sm:$0xff]
    %v1482 = vld [vmem:[#allocation6 + $0x6a8] sm:$0xff]
    %v1483 = vld [vmem:[#allocation6 + $0x6b0] sm:$0xff]
    %v1484 = vld [vmem:[#allocation6 + $0x6b8] sm:$0xff]
    %v1485 = vld [vmem:[#allocation6 + $0x6c0] sm:$0xff]
    %v1486 = vld [vmem:[#allocation6 + $0x6c8] sm:$0xff]
    %v1487 = vld [vmem:[#allocation6 + $0x6d0] sm:$0xff]
    %v1488 = vld [vmem:[#allocation6 + $0x6d8] sm:$0xff]
    %v1489 = vld [vmem:[#allocation6 + $0x6e0] sm:$0xff]
    %v1490 = vld [vmem:[#allocation6 + $0x6e8] sm:$0xff]
    %v1491 = vld [vmem:[#allocation6 + $0x6f0] sm:$0xff]
    %v1492 = vld [vmem:[#allocation6 + $0x6f8] sm:$0xff]
    %v1493 = vld [vmem:[#allocation6 + $0x700] sm:$0xff]
    %v1494 = vld [vmem:[#allocation6 + $0x708] sm:$0xff]
    %v1495 = vld [vmem:[#allocation6 + $0x710] sm:$0xff]
    %v1496 = vld [vmem:[#allocation6 + $0x718] sm:$0xff]
    %v1497 = vld [vmem:[#allocation6 + $0x720] sm:$0xff]
    %v1498 = vld [vmem:[#allocation6 + $0x728] sm:$0xff]
    %v1499 = vld [vmem:[#allocation6 + $0x730] sm:$0xff]
    %v1500 = vld [vmem:[#allocation6 + $0x738] sm:$0xff]
    %v1501 = vld [vmem:[#allocation6 + $0x740] sm:$0xff]
    %v1502 = vld [vmem:[#allocation6 + $0x748] sm:$0xff]
    %v1503 = vld [vmem:[#allocation6 + $0x750] sm:$0xff]
    %v1504 = vld [vmem:[#allocation6 + $0x758] sm:$0xff]
    %v1505 = vld [vmem:[#allocation6 + $0x760] sm:$0xff]
    %v1506 = vld [vmem:[#allocation6 + $0x768] sm:$0xff]
    %v1507 = vld [vmem:[#allocation6 + $0x770] sm:$0xff]
    %v1508 = vld [vmem:[#allocation6 + $0x778] sm:$0xff]
    %v1509 = vld [vmem:[#allocation6 + $0x780] sm:$0xff]
    %v1510 = vld [vmem:[#allocation6 + $0x788] sm:$0xff]
    %v1511 = vld [vmem:[#allocation6 + $0x790] sm:$0xff]
    %v1512 = vld [vmem:[#allocation6 + $0x798] sm:$0xff]
    %v1513 = vld [vmem:[#allocation6 + $0x7a0] sm:$0xff]
    %v1514 = vld [vmem:[#allocation6 + $0x7a8] sm:$0xff]
    %v1515 = vld [vmem:[#allocation6 + $0x7b0] sm:$0xff]
    %v1516 = vld [vmem:[#allocation6 + $0x7b8] sm:$0xff]
    %v1517 = vld [vmem:[#allocation6 + $0x7c0] sm:$0xff]
    %v1518 = vld [vmem:[#allocation6 + $0x7c8] sm:$0xff]
    %v1519 = vld [vmem:[#allocation6 + $0x7d0] sm:$0xff]
    %v1520 = vld [vmem:[#allocation6 + $0x7d8] sm:$0xff]
    %v1521 = vld [vmem:[#allocation6 + $0x7e0] sm:$0xff]
    %v1522 = vld [vmem:[#allocation6 + $0x7e8] sm:$0xff]
    %v1523 = vld [vmem:[#allocation6 + $0x7f0] sm:$0xff]
    %v1524 = vld [vmem:[#allocation6 + $0x7f8] sm:$0xff]
    %v1525 = vld [vmem:[#allocation7] sm:$0x3]
    %v1527 = vlaneseq
    %v1528 = vshrl.u32 %v1527, 7
    %v1529 = vsub.s32 0, %v1528
    %v1530 = vrot.slane %v1525, %v1529
    %v1531 = vlaneseq
    %v1532 = vshrl.u32 %v1531, 7
    %v1533 = vsub.s32 1, %v1532
    %v1534 = vrot.slane %v1525, %v1533
    %v1793 = vunpack.c.l.b16 %v1269
    %v1794 = vunpack.c.h.b16 %v1269
    %v1795 = vunpack.c.l.b16 %v1270
    %v1796 = vunpack.c.h.b16 %v1270
    %v1797 = vunpack.c.l.b16 %v1271
    %v1798 = vunpack.c.h.b16 %v1271
    %v1799 = vunpack.c.l.b16 %v1272
    %v1800 = vunpack.c.h.b16 %v1272
    %v1801 = vunpack.c.l.b16 %v1273
    %v1802 = vunpack.c.h.b16 %v1273
    %v1803 = vunpack.c.l.b16 %v1274
    %v1804 = vunpack.c.h.b16 %v1274
    %v1805 = vunpack.c.l.b16 %v1275
    %v1806 = vunpack.c.h.b16 %v1275
    %v1807 = vunpack.c.l.b16 %v1276
    %v1808 = vunpack.c.h.b16 %v1276
    %v1809 = vunpack.c.l.b16 %v1277
    %v1810 = vunpack.c.h.b16 %v1277
    %v1811 = vunpack.c.l.b16 %v1278
    %v1812 = vunpack.c.h.b16 %v1278
    %v1813 = vunpack.c.l.b16 %v1279
    %v1814 = vunpack.c.h.b16 %v1279
    %v1815 = vunpack.c.l.b16 %v1280
    %v1816 = vunpack.c.h.b16 %v1280
    %v1817 = vunpack.c.l.b16 %v1281
    %v1818 = vunpack.c.h.b16 %v1281
    %v1819 = vunpack.c.l.b16 %v1282
    %v1820 = vunpack.c.h.b16 %v1282
    %v1821 = vunpack.c.l.b16 %v1283
    %v1822 = vunpack.c.h.b16 %v1283
    %v1823 = vunpack.c.l.b16 %v1284
    %v1824 = vunpack.c.h.b16 %v1284
    %v1825 = vunpack.c.l.b16 %v1285
    %v1826 = vunpack.c.h.b16 %v1285
    %v1827 = vunpack.c.l.b16 %v1286
    %v1828 = vunpack.c.h.b16 %v1286
    %v1829 = vunpack.c.l.b16 %v1287
    %v1830 = vunpack.c.h.b16 %v1287
    %v1831 = vunpack.c.l.b16 %v1288
    %v1832 = vunpack.c.h.b16 %v1288
    %v1833 = vunpack.c.l.b16 %v1289
    %v1834 = vunpack.c.h.b16 %v1289
    %v1835 = vunpack.c.l.b16 %v1290
    %v1836 = vunpack.c.h.b16 %v1290
    %v1837 = vunpack.c.l.b16 %v1291
    %v1838 = vunpack.c.h.b16 %v1291
    %v1839 = vunpack.c.l.b16 %v1292
    %v1840 = vunpack.c.h.b16 %v1292
    %v1841 = vunpack.c.l.b16 %v1293
    %v1842 = vunpack.c.h.b16 %v1293
    %v1843 = vunpack.c.l.b16 %v1294
    %v1844 = vunpack.c.h.b16 %v1294
    %v1845 = vunpack.c.l.b16 %v1295
    %v1846 = vunpack.c.h.b16 %v1295
    %v1847 = vunpack.c.l.b16 %v1296
    %v1848 = vunpack.c.h.b16 %v1296
    %v1849 = vunpack.c.l.b16 %v1297
    %v1850 = vunpack.c.h.b16 %v1297
    %v1851 = vunpack.c.l.b16 %v1298
    %v1852 = vunpack.c.h.b16 %v1298
    %v1853 = vunpack.c.l.b16 %v1299
    %v1854 = vunpack.c.h.b16 %v1299
    %v1855 = vunpack.c.l.b16 %v1300
    %v1856 = vunpack.c.h.b16 %v1300
    %v1857 = vunpack.c.l.b16 %v1301
    %v1858 = vunpack.c.h.b16 %v1301
    %v1859 = vunpack.c.l.b16 %v1302
    %v1860 = vunpack.c.h.b16 %v1302
    %v1861 = vunpack.c.l.b16 %v1303
    %v1862 = vunpack.c.h.b16 %v1303
    %v1863 = vunpack.c.l.b16 %v1304
    %v1864 = vunpack.c.h.b16 %v1304
    %v1865 = vunpack.c.l.b16 %v1305
    %v1866 = vunpack.c.h.b16 %v1305
    %v1867 = vunpack.c.l.b16 %v1306
    %v1868 = vunpack.c.h.b16 %v1306
    %v1869 = vunpack.c.l.b16 %v1307
    %v1870 = vunpack.c.h.b16 %v1307
    %v1871 = vunpack.c.l.b16 %v1308
    %v1872 = vunpack.c.h.b16 %v1308
    %v1873 = vunpack.c.l.b16 %v1309
    %v1874 = vunpack.c.h.b16 %v1309
    %v1875 = vunpack.c.l.b16 %v1310
    %v1876 = vunpack.c.h.b16 %v1310
    %v1877 = vunpack.c.l.b16 %v1311
    %v1878 = vunpack.c.h.b16 %v1311
    %v1879 = vunpack.c.l.b16 %v1312
    %v1880 = vunpack.c.h.b16 %v1312
    %v1881 = vunpack.c.l.b16 %v1313
    %v1882 = vunpack.c.h.b16 %v1313
    %v1883 = vunpack.c.l.b16 %v1314
    %v1884 = vunpack.c.h.b16 %v1314
    %v1885 = vunpack.c.l.b16 %v1315
    %v1886 = vunpack.c.h.b16 %v1315
    %v1887 = vunpack.c.l.b16 %v1316
    %v1888 = vunpack.c.h.b16 %v1316
    %v1889 = vunpack.c.l.b16 %v1317
    %v1890 = vunpack.c.h.b16 %v1317
    %v1891 = vunpack.c.l.b16 %v1318
    %v1892 = vunpack.c.h.b16 %v1318
    %v1893 = vunpack.c.l.b16 %v1319
    %v1894 = vunpack.c.h.b16 %v1319
    %v1895 = vunpack.c.l.b16 %v1320
    %v1896 = vunpack.c.h.b16 %v1320
    %v1897 = vunpack.c.l.b16 %v1321
    %v1898 = vunpack.c.h.b16 %v1321
    %v1899 = vunpack.c.l.b16 %v1322
    %v1900 = vunpack.c.h.b16 %v1322
    %v1901 = vunpack.c.l.b16 %v1323
    %v1902 = vunpack.c.h.b16 %v1323
    %v1903 = vunpack.c.l.b16 %v1324
    %v1904 = vunpack.c.h.b16 %v1324
    %v1905 = vunpack.c.l.b16 %v1325
    %v1906 = vunpack.c.h.b16 %v1325
    %v1907 = vunpack.c.l.b16 %v1326
    %v1908 = vunpack.c.h.b16 %v1326
    %v1909 = vunpack.c.l.b16 %v1327
    %v1910 = vunpack.c.h.b16 %v1327
    %v1911 = vunpack.c.l.b16 %v1328
    %v1912 = vunpack.c.h.b16 %v1328
    %v1913 = vunpack.c.l.b16 %v1329
    %v1914 = vunpack.c.h.b16 %v1329
    %v1915 = vunpack.c.l.b16 %v1330
    %v1916 = vunpack.c.h.b16 %v1330
    %v1917 = vunpack.c.l.b16 %v1331
    %v1918 = vunpack.c.h.b16 %v1331
    %v1919 = vunpack.c.l.b16 %v1332
    %v1920 = vunpack.c.h.b16 %v1332
    %v1921 = vunpack.c.l.b16 %v1333
    %v1922 = vunpack.c.h.b16 %v1333
    %v1923 = vunpack.c.l.b16 %v1334
    %v1924 = vunpack.c.h.b16 %v1334
    %v1925 = vunpack.c.l.b16 %v1335
    %v1926 = vunpack.c.h.b16 %v1335
    %v1927 = vunpack.c.l.b16 %v1336
    %v1928 = vunpack.c.h.b16 %v1336
    %v1929 = vunpack.c.l.b16 %v1337
    %v1930 = vunpack.c.h.b16 %v1337
    %v1931 = vunpack.c.l.b16 %v1338
    %v1932 = vunpack.c.h.b16 %v1338
    %v1933 = vunpack.c.l.b16 %v1339
    %v1934 = vunpack.c.h.b16 %v1339
    %v1935 = vunpack.c.l.b16 %v1340
    %v1936 = vunpack.c.h.b16 %v1340
    %v1937 = vunpack.c.l.b16 %v1341
    %v1938 = vunpack.c.h.b16 %v1341
    %v1939 = vunpack.c.l.b16 %v1342
    %v1940 = vunpack.c.h.b16 %v1342
    %v1941 = vunpack.c.l.b16 %v1343
    %v1942 = vunpack.c.h.b16 %v1343
    %v1943 = vunpack.c.l.b16 %v1344
    %v1944 = vunpack.c.h.b16 %v1344
    %v1945 = vunpack.c.l.b16 %v1345
    %v1946 = vunpack.c.h.b16 %v1345
    %v1947 = vunpack.c.l.b16 %v1346
    %v1948 = vunpack.c.h.b16 %v1346
    %v1949 = vunpack.c.l.b16 %v1347
    %v1950 = vunpack.c.h.b16 %v1347
    %v1951 = vunpack.c.l.b16 %v1348
    %v1952 = vunpack.c.h.b16 %v1348
    %v1953 = vunpack.c.l.b16 %v1349
    %v1954 = vunpack.c.h.b16 %v1349
    %v1955 = vunpack.c.l.b16 %v1350
    %v1956 = vunpack.c.h.b16 %v1350
    %v1957 = vunpack.c.l.b16 %v1351
    %v1958 = vunpack.c.h.b16 %v1351
    %v1959 = vunpack.c.l.b16 %v1352
    %v1960 = vunpack.c.h.b16 %v1352
    %v1961 = vunpack.c.l.b16 %v1353
    %v1962 = vunpack.c.h.b16 %v1353
    %v1963 = vunpack.c.l.b16 %v1354
    %v1964 = vunpack.c.h.b16 %v1354
    %v1965 = vunpack.c.l.b16 %v1355
    %v1966 = vunpack.c.h.b16 %v1355
    %v1967 = vunpack.c.l.b16 %v1356
    %v1968 = vunpack.c.h.b16 %v1356
    %v1969 = vunpack.c.l.b16 %v1357
    %v1970 = vunpack.c.h.b16 %v1357
    %v1971 = vunpack.c.l.b16 %v1358
    %v1972 = vunpack.c.h.b16 %v1358
    %v1973 = vunpack.c.l.b16 %v1359
    %v1974 = vunpack.c.h.b16 %v1359
    %v1975 = vunpack.c.l.b16 %v1360
    %v1976 = vunpack.c.h.b16 %v1360
    %v1977 = vunpack.c.l.b16 %v1361
    %v1978 = vunpack.c.h.b16 %v1361
    %v1979 = vunpack.c.l.b16 %v1362
    %v1980 = vunpack.c.h.b16 %v1362
    %v1981 = vunpack.c.l.b16 %v1363
    %v1982 = vunpack.c.h.b16 %v1363
    %v1983 = vunpack.c.l.b16 %v1364
    %v1984 = vunpack.c.h.b16 %v1364
    %v1985 = vunpack.c.l.b16 %v1365
    %v1986 = vunpack.c.h.b16 %v1365
    %v1987 = vunpack.c.l.b16 %v1366
    %v1988 = vunpack.c.h.b16 %v1366
    %v1989 = vunpack.c.l.b16 %v1367
    %v1990 = vunpack.c.h.b16 %v1367
    %v1991 = vunpack.c.l.b16 %v1368
    %v1992 = vunpack.c.h.b16 %v1368
    %v1993 = vunpack.c.l.b16 %v1369
    %v1994 = vunpack.c.h.b16 %v1369
    %v1995 = vunpack.c.l.b16 %v1370
    %v1996 = vunpack.c.h.b16 %v1370
    %v1997 = vunpack.c.l.b16 %v1371
    %v1998 = vunpack.c.h.b16 %v1371
    %v1999 = vunpack.c.l.b16 %v1372
    %v2000 = vunpack.c.h.b16 %v1372
    %v2001 = vunpack.c.l.b16 %v1373
    %v2002 = vunpack.c.h.b16 %v1373
    %v2003 = vunpack.c.l.b16 %v1374
    %v2004 = vunpack.c.h.b16 %v1374
    %v2005 = vunpack.c.l.b16 %v1375
    %v2006 = vunpack.c.h.b16 %v1375
    %v2007 = vunpack.c.l.b16 %v1376
    %v2008 = vunpack.c.h.b16 %v1376
    %v2009 = vunpack.c.l.b16 %v1377
    %v2010 = vunpack.c.h.b16 %v1377
    %v2011 = vunpack.c.l.b16 %v1378
    %v2012 = vunpack.c.h.b16 %v1378
    %v2013 = vunpack.c.l.b16 %v1379
    %v2014 = vunpack.c.h.b16 %v1379
    %v2015 = vunpack.c.l.b16 %v1380
    %v2016 = vunpack.c.h.b16 %v1380
    %v2017 = vunpack.c.l.b16 %v1381
    %v2018 = vunpack.c.h.b16 %v1381
    %v2019 = vunpack.c.l.b16 %v1382
    %v2020 = vunpack.c.h.b16 %v1382
    %v2021 = vunpack.c.l.b16 %v1383
    %v2022 = vunpack.c.h.b16 %v1383
    %v2023 = vunpack.c.l.b16 %v1384
    %v2024 = vunpack.c.h.b16 %v1384
    %v2025 = vunpack.c.l.b16 %v1385
    %v2026 = vunpack.c.h.b16 %v1385
    %v2027 = vunpack.c.l.b16 %v1386
    %v2028 = vunpack.c.h.b16 %v1386
    %v2029 = vunpack.c.l.b16 %v1387
    %v2030 = vunpack.c.h.b16 %v1387
    %v2031 = vunpack.c.l.b16 %v1388
    %v2032 = vunpack.c.h.b16 %v1388
    %v2033 = vunpack.c.l.b16 %v1389
    %v2034 = vunpack.c.h.b16 %v1389
    %v2035 = vunpack.c.l.b16 %v1390
    %v2036 = vunpack.c.h.b16 %v1390
    %v2037 = vunpack.c.l.b16 %v1391
    %v2038 = vunpack.c.h.b16 %v1391
    %v2039 = vunpack.c.l.b16 %v1392
    %v2040 = vunpack.c.h.b16 %v1392
    %v2041 = vunpack.c.l.b16 %v1393
    %v2042 = vunpack.c.h.b16 %v1393
    %v2043 = vunpack.c.l.b16 %v1394
    %v2044 = vunpack.c.h.b16 %v1394
    %v2045 = vunpack.c.l.b16 %v1395
    %v2046 = vunpack.c.h.b16 %v1395
    %v2047 = vunpack.c.l.b16 %v1396
    %v2048 = vunpack.c.h.b16 %v1396
    %v2049 = vunpack.c.l.b16 %v1397
    %v2050 = vunpack.c.h.b16 %v1397
    %v2051 = vunpack.c.l.b16 %v1398
    %v2052 = vunpack.c.h.b16 %v1398
    %v2053 = vunpack.c.l.b16 %v1399
    %v2054 = vunpack.c.h.b16 %v1399
    %v2055 = vunpack.c.l.b16 %v1400
    %v2056 = vunpack.c.h.b16 %v1400
    %v2057 = vunpack.c.l.b16 %v1401
    %v2058 = vunpack.c.h.b16 %v1401
    %v2059 = vunpack.c.l.b16 %v1402
    %v2060 = vunpack.c.h.b16 %v1402
    %v2061 = vunpack.c.l.b16 %v1403
    %v2062 = vunpack.c.h.b16 %v1403
    %v2063 = vunpack.c.l.b16 %v1404
    %v2064 = vunpack.c.h.b16 %v1404
    %v2065 = vunpack.c.l.b16 %v1405
    %v2066 = vunpack.c.h.b16 %v1405
    %v2067 = vunpack.c.l.b16 %v1406
    %v2068 = vunpack.c.h.b16 %v1406
    %v2069 = vunpack.c.l.b16 %v1407
    %v2070 = vunpack.c.h.b16 %v1407
    %v2071 = vunpack.c.l.b16 %v1408
    %v2072 = vunpack.c.h.b16 %v1408
    %v2073 = vunpack.c.l.b16 %v1409
    %v2074 = vunpack.c.h.b16 %v1409
    %v2075 = vunpack.c.l.b16 %v1410
    %v2076 = vunpack.c.h.b16 %v1410
    %v2077 = vunpack.c.l.b16 %v1411
    %v2078 = vunpack.c.h.b16 %v1411
    %v2079 = vunpack.c.l.b16 %v1412
    %v2080 = vunpack.c.h.b16 %v1412
    %v2081 = vunpack.c.l.b16 %v1413
    %v2082 = vunpack.c.h.b16 %v1413
    %v2083 = vunpack.c.l.b16 %v1414
    %v2084 = vunpack.c.h.b16 %v1414
    %v2085 = vunpack.c.l.b16 %v1415
    %v2086 = vunpack.c.h.b16 %v1415
    %v2087 = vunpack.c.l.b16 %v1416
    %v2088 = vunpack.c.h.b16 %v1416
    %v2089 = vunpack.c.l.b16 %v1417
    %v2090 = vunpack.c.h.b16 %v1417
    %v2091 = vunpack.c.l.b16 %v1418
    %v2092 = vunpack.c.h.b16 %v1418
    %v2093 = vunpack.c.l.b16 %v1419
    %v2094 = vunpack.c.h.b16 %v1419
    %v2095 = vunpack.c.l.b16 %v1420
    %v2096 = vunpack.c.h.b16 %v1420
    %v2097 = vunpack.c.l.b16 %v1421
    %v2098 = vunpack.c.h.b16 %v1421
    %v2099 = vunpack.c.l.b16 %v1422
    %v2100 = vunpack.c.h.b16 %v1422
    %v2101 = vunpack.c.l.b16 %v1423
    %v2102 = vunpack.c.h.b16 %v1423
    %v2103 = vunpack.c.l.b16 %v1424
    %v2104 = vunpack.c.h.b16 %v1424
    %v2105 = vunpack.c.l.b16 %v1425
    %v2106 = vunpack.c.h.b16 %v1425
    %v2107 = vunpack.c.l.b16 %v1426
    %v2108 = vunpack.c.h.b16 %v1426
    %v2109 = vunpack.c.l.b16 %v1427
    %v2110 = vunpack.c.h.b16 %v1427
    %v2111 = vunpack.c.l.b16 %v1428
    %v2112 = vunpack.c.h.b16 %v1428
    %v2113 = vunpack.c.l.b16 %v1429
    %v2114 = vunpack.c.h.b16 %v1429
    %v2115 = vunpack.c.l.b16 %v1430
    %v2116 = vunpack.c.h.b16 %v1430
    %v2117 = vunpack.c.l.b16 %v1431
    %v2118 = vunpack.c.h.b16 %v1431
    %v2119 = vunpack.c.l.b16 %v1432
    %v2120 = vunpack.c.h.b16 %v1432
    %v2121 = vunpack.c.l.b16 %v1433
    %v2122 = vunpack.c.h.b16 %v1433
    %v2123 = vunpack.c.l.b16 %v1434
    %v2124 = vunpack.c.h.b16 %v1434
    %v2125 = vunpack.c.l.b16 %v1435
    %v2126 = vunpack.c.h.b16 %v1435
    %v2127 = vunpack.c.l.b16 %v1436
    %v2128 = vunpack.c.h.b16 %v1436
    %v2129 = vunpack.c.l.b16 %v1437
    %v2130 = vunpack.c.h.b16 %v1437
    %v2131 = vunpack.c.l.b16 %v1438
    %v2132 = vunpack.c.h.b16 %v1438
    %v2133 = vunpack.c.l.b16 %v1439
    %v2134 = vunpack.c.h.b16 %v1439
    %v2135 = vunpack.c.l.b16 %v1440
    %v2136 = vunpack.c.h.b16 %v1440
    %v2137 = vunpack.c.l.b16 %v1441
    %v2138 = vunpack.c.h.b16 %v1441
    %v2139 = vunpack.c.l.b16 %v1442
    %v2140 = vunpack.c.h.b16 %v1442
    %v2141 = vunpack.c.l.b16 %v1443
    %v2142 = vunpack.c.h.b16 %v1443
    %v2143 = vunpack.c.l.b16 %v1444
    %v2144 = vunpack.c.h.b16 %v1444
    %v2145 = vunpack.c.l.b16 %v1445
    %v2146 = vunpack.c.h.b16 %v1445
    %v2147 = vunpack.c.l.b16 %v1446
    %v2148 = vunpack.c.h.b16 %v1446
    %v2149 = vunpack.c.l.b16 %v1447
    %v2150 = vunpack.c.h.b16 %v1447
    %v2151 = vunpack.c.l.b16 %v1448
    %v2152 = vunpack.c.h.b16 %v1448
    %v2153 = vunpack.c.l.b16 %v1449
    %v2154 = vunpack.c.h.b16 %v1449
    %v2155 = vunpack.c.l.b16 %v1450
    %v2156 = vunpack.c.h.b16 %v1450
    %v2157 = vunpack.c.l.b16 %v1451
    %v2158 = vunpack.c.h.b16 %v1451
    %v2159 = vunpack.c.l.b16 %v1452
    %v2160 = vunpack.c.h.b16 %v1452
    %v2161 = vunpack.c.l.b16 %v1453
    %v2162 = vunpack.c.h.b16 %v1453
    %v2163 = vunpack.c.l.b16 %v1454
    %v2164 = vunpack.c.h.b16 %v1454
    %v2165 = vunpack.c.l.b16 %v1455
    %v2166 = vunpack.c.h.b16 %v1455
    %v2167 = vunpack.c.l.b16 %v1456
    %v2168 = vunpack.c.h.b16 %v1456
    %v2169 = vunpack.c.l.b16 %v1457
    %v2170 = vunpack.c.h.b16 %v1457
    %v2171 = vunpack.c.l.b16 %v1458
    %v2172 = vunpack.c.h.b16 %v1458
    %v2173 = vunpack.c.l.b16 %v1459
    %v2174 = vunpack.c.h.b16 %v1459
    %v2175 = vunpack.c.l.b16 %v1460
    %v2176 = vunpack.c.h.b16 %v1460
    %v2177 = vunpack.c.l.b16 %v1461
    %v2178 = vunpack.c.h.b16 %v1461
    %v2179 = vunpack.c.l.b16 %v1462
    %v2180 = vunpack.c.h.b16 %v1462
    %v2181 = vunpack.c.l.b16 %v1463
    %v2182 = vunpack.c.h.b16 %v1463
    %v2183 = vunpack.c.l.b16 %v1464
    %v2184 = vunpack.c.h.b16 %v1464
    %v2185 = vunpack.c.l.b16 %v1465
    %v2186 = vunpack.c.h.b16 %v1465
    %v2187 = vunpack.c.l.b16 %v1466
    %v2188 = vunpack.c.h.b16 %v1466
    %v2189 = vunpack.c.l.b16 %v1467
    %v2190 = vunpack.c.h.b16 %v1467
    %v2191 = vunpack.c.l.b16 %v1468
    %v2192 = vunpack.c.h.b16 %v1468
    %v2193 = vunpack.c.l.b16 %v1469
    %v2194 = vunpack.c.h.b16 %v1469
    %v2195 = vunpack.c.l.b16 %v1470
    %v2196 = vunpack.c.h.b16 %v1470
    %v2197 = vunpack.c.l.b16 %v1471
    %v2198 = vunpack.c.h.b16 %v1471
    %v2199 = vunpack.c.l.b16 %v1472
    %v2200 = vunpack.c.h.b16 %v1472
    %v2201 = vunpack.c.l.b16 %v1473
    %v2202 = vunpack.c.h.b16 %v1473
    %v2203 = vunpack.c.l.b16 %v1474
    %v2204 = vunpack.c.h.b16 %v1474
    %v2205 = vunpack.c.l.b16 %v1475
    %v2206 = vunpack.c.h.b16 %v1475
    %v2207 = vunpack.c.l.b16 %v1476
    %v2208 = vunpack.c.h.b16 %v1476
    %v2209 = vunpack.c.l.b16 %v1477
    %v2210 = vunpack.c.h.b16 %v1477
    %v2211 = vunpack.c.l.b16 %v1478
    %v2212 = vunpack.c.h.b16 %v1478
    %v2213 = vunpack.c.l.b16 %v1479
    %v2214 = vunpack.c.h.b16 %v1479
    %v2215 = vunpack.c.l.b16 %v1480
    %v2216 = vunpack.c.h.b16 %v1480
    %v2217 = vunpack.c.l.b16 %v1481
    %v2218 = vunpack.c.h.b16 %v1481
    %v2219 = vunpack.c.l.b16 %v1482
    %v2220 = vunpack.c.h.b16 %v1482
    %v2221 = vunpack.c.l.b16 %v1483
    %v2222 = vunpack.c.h.b16 %v1483
    %v2223 = vunpack.c.l.b16 %v1484
    %v2224 = vunpack.c.h.b16 %v1484
    %v2225 = vunpack.c.l.b16 %v1485
    %v2226 = vunpack.c.h.b16 %v1485
    %v2227 = vunpack.c.l.b16 %v1486
    %v2228 = vunpack.c.h.b16 %v1486
    %v2229 = vunpack.c.l.b16 %v1487
    %v2230 = vunpack.c.h.b16 %v1487
    %v2231 = vunpack.c.l.b16 %v1488
    %v2232 = vunpack.c.h.b16 %v1488
    %v2233 = vunpack.c.l.b16 %v1489
    %v2234 = vunpack.c.h.b16 %v1489
    %v2235 = vunpack.c.l.b16 %v1490
    %v2236 = vunpack.c.h.b16 %v1490
    %v2237 = vunpack.c.l.b16 %v1491
    %v2238 = vunpack.c.h.b16 %v1491
    %v2239 = vunpack.c.l.b16 %v1492
    %v2240 = vunpack.c.h.b16 %v1492
    %v2241 = vunpack.c.l.b16 %v1493
    %v2242 = vunpack.c.h.b16 %v1493
    %v2243 = vunpack.c.l.b16 %v1494
    %v2244 = vunpack.c.h.b16 %v1494
    %v2245 = vunpack.c.l.b16 %v1495
    %v2246 = vunpack.c.h.b16 %v1495
    %v2247 = vunpack.c.l.b16 %v1496
    %v2248 = vunpack.c.h.b16 %v1496
    %v2249 = vunpack.c.l.b16 %v1497
    %v2250 = vunpack.c.h.b16 %v1497
    %v2251 = vunpack.c.l.b16 %v1498
    %v2252 = vunpack.c.h.b16 %v1498
    %v2253 = vunpack.c.l.b16 %v1499
    %v2254 = vunpack.c.h.b16 %v1499
    %v2255 = vunpack.c.l.b16 %v1500
    %v2256 = vunpack.c.h.b16 %v1500
    %v2257 = vunpack.c.l.b16 %v1501
    %v2258 = vunpack.c.h.b16 %v1501
    %v2259 = vunpack.c.l.b16 %v1502
    %v2260 = vunpack.c.h.b16 %v1502
    %v2261 = vunpack.c.l.b16 %v1503
    %v2262 = vunpack.c.h.b16 %v1503
    %v2263 = vunpack.c.l.b16 %v1504
    %v2264 = vunpack.c.h.b16 %v1504
    %v2265 = vunpack.c.l.b16 %v1505
    %v2266 = vunpack.c.h.b16 %v1505
    %v2267 = vunpack.c.l.b16 %v1506
    %v2268 = vunpack.c.h.b16 %v1506
    %v2269 = vunpack.c.l.b16 %v1507
    %v2270 = vunpack.c.h.b16 %v1507
    %v2271 = vunpack.c.l.b16 %v1508
    %v2272 = vunpack.c.h.b16 %v1508
    %v2273 = vunpack.c.l.b16 %v1509
    %v2274 = vunpack.c.h.b16 %v1509
    %v2275 = vunpack.c.l.b16 %v1510
    %v2276 = vunpack.c.h.b16 %v1510
    %v2277 = vunpack.c.l.b16 %v1511
    %v2278 = vunpack.c.h.b16 %v1511
    %v2279 = vunpack.c.l.b16 %v1512
    %v2280 = vunpack.c.h.b16 %v1512
    %v2281 = vunpack.c.l.b16 %v1513
    %v2282 = vunpack.c.h.b16 %v1513
    %v2283 = vunpack.c.l.b16 %v1514
    %v2284 = vunpack.c.h.b16 %v1514
    %v2285 = vunpack.c.l.b16 %v1515
    %v2286 = vunpack.c.h.b16 %v1515
    %v2287 = vunpack.c.l.b16 %v1516
    %v2288 = vunpack.c.h.b16 %v1516
    %v2289 = vunpack.c.l.b16 %v1517
    %v2290 = vunpack.c.h.b16 %v1517
    %v2291 = vunpack.c.l.b16 %v1518
    %v2292 = vunpack.c.h.b16 %v1518
    %v2293 = vunpack.c.l.b16 %v1519
    %v2294 = vunpack.c.h.b16 %v1519
    %v2295 = vunpack.c.l.b16 %v1520
    %v2296 = vunpack.c.h.b16 %v1520
    %v2297 = vunpack.c.l.b16 %v1521
    %v2298 = vunpack.c.h.b16 %v1521
    %v2299 = vunpack.c.l.b16 %v1522
    %v2300 = vunpack.c.h.b16 %v1522
    %v2301 = vunpack.c.l.b16 %v1523
    %v2302 = vunpack.c.h.b16 %v1523
    %v2303 = vunpack.c.l.b16 %v1524
    %v2304 = vunpack.c.h.b16 %v1524
    %v2305 = vpack.c.b16 %v1795, %v1793
    %v2306 = vpack.c.b16 %v1796, %v1794
    %v2307 = vpack.c.b16 %v1799, %v1797
    %v2308 = vpack.c.b16 %v1800, %v1798
    %v2309 = vpack.c.b16 %v1803, %v1801
    %v2310 = vpack.c.b16 %v1804, %v1802
    %v2311 = vpack.c.b16 %v1807, %v1805
    %v2312 = vpack.c.b16 %v1808, %v1806
    %v2313 = vpack.c.b16 %v1811, %v1809
    %v2314 = vpack.c.b16 %v1812, %v1810
    %v2315 = vpack.c.b16 %v1815, %v1813
    %v2316 = vpack.c.b16 %v1816, %v1814
    %v2317 = vpack.c.b16 %v1819, %v1817
    %v2318 = vpack.c.b16 %v1820, %v1818
    %v2319 = vpack.c.b16 %v1823, %v1821
    %v2320 = vpack.c.b16 %v1824, %v1822
    %v2321 = vpack.c.b16 %v1827, %v1825
    %v2322 = vpack.c.b16 %v1828, %v1826
    %v2323 = vpack.c.b16 %v1831, %v1829
    %v2324 = vpack.c.b16 %v1832, %v1830
    %v2325 = vpack.c.b16 %v1835, %v1833
    %v2326 = vpack.c.b16 %v1836, %v1834
    %v2327 = vpack.c.b16 %v1839, %v1837
    %v2328 = vpack.c.b16 %v1840, %v1838
    %v2329 = vpack.c.b16 %v1843, %v1841
    %v2330 = vpack.c.b16 %v1844, %v1842
    %v2331 = vpack.c.b16 %v1847, %v1845
    %v2332 = vpack.c.b16 %v1848, %v1846
    %v2333 = vpack.c.b16 %v1851, %v1849
    %v2334 = vpack.c.b16 %v1852, %v1850
    %v2335 = vpack.c.b16 %v1855, %v1853
    %v2336 = vpack.c.b16 %v1856, %v1854
    %v2337 = vpack.c.b16 %v1859, %v1857
    %v2338 = vpack.c.b16 %v1860, %v1858
    %v2339 = vpack.c.b16 %v1863, %v1861
    %v2340 = vpack.c.b16 %v1864, %v1862
    %v2341 = vpack.c.b16 %v1867, %v1865
    %v2342 = vpack.c.b16 %v1868, %v1866
    %v2343 = vpack.c.b16 %v1871, %v1869
    %v2344 = vpack.c.b16 %v1872, %v1870
    %v2345 = vpack.c.b16 %v1875, %v1873
    %v2346 = vpack.c.b16 %v1876, %v1874
    %v2347 = vpack.c.b16 %v1879, %v1877
    %v2348 = vpack.c.b16 %v1880, %v1878
    %v2349 = vpack.c.b16 %v1883, %v1881
    %v2350 = vpack.c.b16 %v1884, %v1882
    %v2351 = vpack.c.b16 %v1887, %v1885
    %v2352 = vpack.c.b16 %v1888, %v1886
    %v2353 = vpack.c.b16 %v1891, %v1889
    %v2354 = vpack.c.b16 %v1892, %v1890
    %v2355 = vpack.c.b16 %v1895, %v1893
    %v2356 = vpack.c.b16 %v1896, %v1894
    %v2357 = vpack.c.b16 %v1899, %v1897
    %v2358 = vpack.c.b16 %v1900, %v1898
    %v2359 = vpack.c.b16 %v1903, %v1901
    %v2360 = vpack.c.b16 %v1904, %v1902
    %v2361 = vpack.c.b16 %v1907, %v1905
    %v2362 = vpack.c.b16 %v1908, %v1906
    %v2363 = vpack.c.b16 %v1911, %v1909
    %v2364 = vpack.c.b16 %v1912, %v1910
    %v2365 = vpack.c.b16 %v1915, %v1913
    %v2366 = vpack.c.b16 %v1916, %v1914
    %v2367 = vpack.c.b16 %v1919, %v1917
    %v2368 = vpack.c.b16 %v1920, %v1918
    %v2369 = vpack.c.b16 %v1923, %v1921
    %v2370 = vpack.c.b16 %v1924, %v1922
    %v2371 = vpack.c.b16 %v1927, %v1925
    %v2372 = vpack.c.b16 %v1928, %v1926
    %v2373 = vpack.c.b16 %v1931, %v1929
    %v2374 = vpack.c.b16 %v1932, %v1930
    %v2375 = vpack.c.b16 %v1935, %v1933
    %v2376 = vpack.c.b16 %v1936, %v1934
    %v2377 = vpack.c.b16 %v1939, %v1937
    %v2378 = vpack.c.b16 %v1940, %v1938
    %v2379 = vpack.c.b16 %v1943, %v1941
    %v2380 = vpack.c.b16 %v1944, %v1942
    %v2381 = vpack.c.b16 %v1947, %v1945
    %v2382 = vpack.c.b16 %v1948, %v1946
    %v2383 = vpack.c.b16 %v1951, %v1949
    %v2384 = vpack.c.b16 %v1952, %v1950
    %v2385 = vpack.c.b16 %v1955, %v1953
    %v2386 = vpack.c.b16 %v1956, %v1954
    %v2387 = vpack.c.b16 %v1959, %v1957
    %v2388 = vpack.c.b16 %v1960, %v1958
    %v2389 = vpack.c.b16 %v1963, %v1961
    %v2390 = vpack.c.b16 %v1964, %v1962
    %v2391 = vpack.c.b16 %v1967, %v1965
    %v2392 = vpack.c.b16 %v1968, %v1966
    %v2393 = vpack.c.b16 %v1971, %v1969
    %v2394 = vpack.c.b16 %v1972, %v1970
    %v2395 = vpack.c.b16 %v1975, %v1973
    %v2396 = vpack.c.b16 %v1976, %v1974
    %v2397 = vpack.c.b16 %v1979, %v1977
    %v2398 = vpack.c.b16 %v1980, %v1978
    %v2399 = vpack.c.b16 %v1983, %v1981
    %v2400 = vpack.c.b16 %v1984, %v1982
    %v2401 = vpack.c.b16 %v1987, %v1985
    %v2402 = vpack.c.b16 %v1988, %v1986
    %v2403 = vpack.c.b16 %v1991, %v1989
    %v2404 = vpack.c.b16 %v1992, %v1990
    %v2405 = vpack.c.b16 %v1995, %v1993
    %v2406 = vpack.c.b16 %v1996, %v1994
    %v2407 = vpack.c.b16 %v1999, %v1997
    %v2408 = vpack.c.b16 %v2000, %v1998
    %v2409 = vpack.c.b16 %v2003, %v2001
    %v2410 = vpack.c.b16 %v2004, %v2002
    %v2411 = vpack.c.b16 %v2007, %v2005
    %v2412 = vpack.c.b16 %v2008, %v2006
    %v2413 = vpack.c.b16 %v2011, %v2009
    %v2414 = vpack.c.b16 %v2012, %v2010
    %v2415 = vpack.c.b16 %v2015, %v2013
    %v2416 = vpack.c.b16 %v2016, %v2014
    %v2417 = vpack.c.b16 %v2019, %v2017
    %v2418 = vpack.c.b16 %v2020, %v2018
    %v2419 = vpack.c.b16 %v2023, %v2021
    %v2420 = vpack.c.b16 %v2024, %v2022
    %v2421 = vpack.c.b16 %v2027, %v2025
    %v2422 = vpack.c.b16 %v2028, %v2026
    %v2423 = vpack.c.b16 %v2031, %v2029
    %v2424 = vpack.c.b16 %v2032, %v2030
    %v2425 = vpack.c.b16 %v2035, %v2033
    %v2426 = vpack.c.b16 %v2036, %v2034
    %v2427 = vpack.c.b16 %v2039, %v2037
    %v2428 = vpack.c.b16 %v2040, %v2038
    %v2429 = vpack.c.b16 %v2043, %v2041
    %v2430 = vpack.c.b16 %v2044, %v2042
    %v2431 = vpack.c.b16 %v2047, %v2045
    %v2432 = vpack.c.b16 %v2048, %v2046
    %v2433 = vpack.c.b16 %v2051, %v2049
    %v2434 = vpack.c.b16 %v2052, %v2050
    %v2435 = vpack.c.b16 %v2055, %v2053
    %v2436 = vpack.c.b16 %v2056, %v2054
    %v2437 = vpack.c.b16 %v2059, %v2057
    %v2438 = vpack.c.b16 %v2060, %v2058
    %v2439 = vpack.c.b16 %v2063, %v2061
    %v2440 = vpack.c.b16 %v2064, %v2062
    %v2441 = vpack.c.b16 %v2067, %v2065
    %v2442 = vpack.c.b16 %v2068, %v2066
    %v2443 = vpack.c.b16 %v2071, %v2069
    %v2444 = vpack.c.b16 %v2072, %v2070
    %v2445 = vpack.c.b16 %v2075, %v2073
    %v2446 = vpack.c.b16 %v2076, %v2074
    %v2447 = vpack.c.b16 %v2079, %v2077
    %v2448 = vpack.c.b16 %v2080, %v2078
    %v2449 = vpack.c.b16 %v2083, %v2081
    %v2450 = vpack.c.b16 %v2084, %v2082
    %v2451 = vpack.c.b16 %v2087, %v2085
    %v2452 = vpack.c.b16 %v2088, %v2086
    %v2453 = vpack.c.b16 %v2091, %v2089
    %v2454 = vpack.c.b16 %v2092, %v2090
    %v2455 = vpack.c.b16 %v2095, %v2093
    %v2456 = vpack.c.b16 %v2096, %v2094
    %v2457 = vpack.c.b16 %v2099, %v2097
    %v2458 = vpack.c.b16 %v2100, %v2098
    %v2459 = vpack.c.b16 %v2103, %v2101
    %v2460 = vpack.c.b16 %v2104, %v2102
    %v2461 = vpack.c.b16 %v2107, %v2105
    %v2462 = vpack.c.b16 %v2108, %v2106
    %v2463 = vpack.c.b16 %v2111, %v2109
    %v2464 = vpack.c.b16 %v2112, %v2110
    %v2465 = vpack.c.b16 %v2115, %v2113
    %v2466 = vpack.c.b16 %v2116, %v2114
    %v2467 = vpack.c.b16 %v2119, %v2117
    %v2468 = vpack.c.b16 %v2120, %v2118
    %v2469 = vpack.c.b16 %v2123, %v2121
    %v2470 = vpack.c.b16 %v2124, %v2122
    %v2471 = vpack.c.b16 %v2127, %v2125
    %v2472 = vpack.c.b16 %v2128, %v2126
    %v2473 = vpack.c.b16 %v2131, %v2129
    %v2474 = vpack.c.b16 %v2132, %v2130
    %v2475 = vpack.c.b16 %v2135, %v2133
    %v2476 = vpack.c.b16 %v2136, %v2134
    %v2477 = vpack.c.b16 %v2139, %v2137
    %v2478 = vpack.c.b16 %v2140, %v2138
    %v2479 = vpack.c.b16 %v2143, %v2141
    %v2480 = vpack.c.b16 %v2144, %v2142
    %v2481 = vpack.c.b16 %v2147, %v2145
    %v2482 = vpack.c.b16 %v2148, %v2146
    %v2483 = vpack.c.b16 %v2151, %v2149
    %v2484 = vpack.c.b16 %v2152, %v2150
    %v2485 = vpack.c.b16 %v2155, %v2153
    %v2486 = vpack.c.b16 %v2156, %v2154
    %v2487 = vpack.c.b16 %v2159, %v2157
    %v2488 = vpack.c.b16 %v2160, %v2158
    %v2489 = vpack.c.b16 %v2163, %v2161
    %v2490 = vpack.c.b16 %v2164, %v2162
    %v2491 = vpack.c.b16 %v2167, %v2165
    %v2492 = vpack.c.b16 %v2168, %v2166
    %v2493 = vpack.c.b16 %v2171, %v2169
    %v2494 = vpack.c.b16 %v2172, %v2170
    %v2495 = vpack.c.b16 %v2175, %v2173
    %v2496 = vpack.c.b16 %v2176, %v2174
    %v2497 = vpack.c.b16 %v2179, %v2177
    %v2498 = vpack.c.b16 %v2180, %v2178
    %v2499 = vpack.c.b16 %v2183, %v2181
    %v2500 = vpack.c.b16 %v2184, %v2182
    %v2501 = vpack.c.b16 %v2187, %v2185
    %v2502 = vpack.c.b16 %v2188, %v2186
    %v2503 = vpack.c.b16 %v2191, %v2189
    %v2504 = vpack.c.b16 %v2192, %v2190
    %v2505 = vpack.c.b16 %v2195, %v2193
    %v2506 = vpack.c.b16 %v2196, %v2194
    %v2507 = vpack.c.b16 %v2199, %v2197
    %v2508 = vpack.c.b16 %v2200, %v2198
    %v2509 = vpack.c.b16 %v2203, %v2201
    %v2510 = vpack.c.b16 %v2204, %v2202
    %v2511 = vpack.c.b16 %v2207, %v2205
    %v2512 = vpack.c.b16 %v2208, %v2206
    %v2513 = vpack.c.b16 %v2211, %v2209
    %v2514 = vpack.c.b16 %v2212, %v2210
    %v2515 = vpack.c.b16 %v2215, %v2213
    %v2516 = vpack.c.b16 %v2216, %v2214
    %v2517 = vpack.c.b16 %v2219, %v2217
    %v2518 = vpack.c.b16 %v2220, %v2218
    %v2519 = vpack.c.b16 %v2223, %v2221
    %v2520 = vpack.c.b16 %v2224, %v2222
    %v2521 = vpack.c.b16 %v2227, %v2225
    %v2522 = vpack.c.b16 %v2228, %v2226
    %v2523 = vpack.c.b16 %v2231, %v2229
    %v2524 = vpack.c.b16 %v2232, %v2230
    %v2525 = vpack.c.b16 %v2235, %v2233
    %v2526 = vpack.c.b16 %v2236, %v2234
    %v2527 = vpack.c.b16 %v2239, %v2237
    %v2528 = vpack.c.b16 %v2240, %v2238
    %v2529 = vpack.c.b16 %v2243, %v2241
    %v2530 = vpack.c.b16 %v2244, %v2242
    %v2531 = vpack.c.b16 %v2247, %v2245
    %v2532 = vpack.c.b16 %v2248, %v2246
    %v2533 = vpack.c.b16 %v2251, %v2249
    %v2534 = vpack.c.b16 %v2252, %v2250
    %v2535 = vpack.c.b16 %v2255, %v2253
    %v2536 = vpack.c.b16 %v2256, %v2254
    %v2537 = vpack.c.b16 %v2259, %v2257
    %v2538 = vpack.c.b16 %v2260, %v2258
    %v2539 = vpack.c.b16 %v2263, %v2261
    %v2540 = vpack.c.b16 %v2264, %v2262
    %v2541 = vpack.c.b16 %v2267, %v2265
    %v2542 = vpack.c.b16 %v2268, %v2266
    %v2543 = vpack.c.b16 %v2271, %v2269
    %v2544 = vpack.c.b16 %v2272, %v2270
    %v2545 = vpack.c.b16 %v2275, %v2273
    %v2546 = vpack.c.b16 %v2276, %v2274
    %v2547 = vpack.c.b16 %v2279, %v2277
    %v2548 = vpack.c.b16 %v2280, %v2278
    %v2549 = vpack.c.b16 %v2283, %v2281
    %v2550 = vpack.c.b16 %v2284, %v2282
    %v2551 = vpack.c.b16 %v2287, %v2285
    %v2552 = vpack.c.b16 %v2288, %v2286
    %v2553 = vpack.c.b16 %v2291, %v2289
    %v2554 = vpack.c.b16 %v2292, %v2290
    %v2555 = vpack.c.b16 %v2295, %v2293
    %v2556 = vpack.c.b16 %v2296, %v2294
    %v2557 = vpack.c.b16 %v2299, %v2297
    %v2558 = vpack.c.b16 %v2300, %v2298
    %v2559 = vpack.c.b16 %v2303, %v2301
    %v2560 = vpack.c.b16 %v2304, %v2302
    %2817 = vmatprep.subr.bf16.mxu0 %v2306
    %2818 = vmatpush1.bf16.msra.mxu0 %v2305
    %2819 = vmatprep.subr.bf16.mxu0 %v2308
    %2820 = vmatpush1.bf16.msra.mxu0 %v2307
    %2821 = vmatprep.subr.bf16.mxu0 %v2310
    %2822 = vmatpush1.bf16.msra.mxu0 %v2309
    %2823 = vmatprep.subr.bf16.mxu0 %v2312
    %2824 = vmatpush1.bf16.msra.mxu0 %v2311
    %2825 = vmatprep.subr.bf16.mxu0 %v2314
    %2826 = vmatpush1.bf16.msra.mxu0 %v2313
    %2827 = vmatprep.subr.bf16.mxu0 %v2316
    %2828 = vmatpush1.bf16.msra.mxu0 %v2315
    %2829 = vmatprep.subr.bf16.mxu0 %v2318
    %2830 = vmatpush1.bf16.msra.mxu0 %v2317
    %2831 = vmatprep.subr.bf16.mxu0 %v2320
    %2832 = vmatpush1.bf16.msra.mxu0 %v2319
    %2833 = vmatprep.subr.bf16.mxu0 %v2322
    %2834 = vmatpush1.bf16.msra.mxu0 %v2321
    %2835 = vmatprep.subr.bf16.mxu0 %v2324
    %2836 = vmatpush1.bf16.msra.mxu0 %v2323
    %2837 = vmatprep.subr.bf16.mxu0 %v2326
    %2838 = vmatpush1.bf16.msra.mxu0 %v2325
    %2839 = vmatprep.subr.bf16.mxu0 %v2328
    %2840 = vmatpush1.bf16.msra.mxu0 %v2327
    %2841 = vmatprep.subr.bf16.mxu0 %v2330
    %2842 = vmatpush1.bf16.msra.mxu0 %v2329
    %2843 = vmatprep.subr.bf16.mxu0 %v2332
    %2844 = vmatpush1.bf16.msra.mxu0 %v2331
    %2845 = vmatprep.subr.bf16.mxu0 %v2334
    %2846 = vmatpush1.bf16.msra.mxu0 %v2333
    %2847 = vmatprep.subr.bf16.mxu0 %v2336
    %2848 = vmatpush1.bf16.msra.mxu0 %v2335
    %2849 = vmatprep.mubr.bf16.mxu0 %v1254
    %2850 = vmatmul.mubr.bf16.gmra.mrb[0].mxu0 %v1253
    %v2851 = vpop.f32.mrb[0].mxu0
    %v2852 = vadd.f32 %v1530, %v2851
    %v2853 = vpop.f32.mrb[0].mxu0
    %v2854 = vadd.f32 %v1534, %v2853
    %v2855 = vpop.f32.mrb[0].mxu0
    %v2856 = vpop.f32.mrb[0].mxu0
    %2857 = vdwg.mxu0
    %2858 = vmatprep.subr.bf16.mxu0 %v2338
    %2859 = vmatpush1.bf16.msra.mxu0 %v2337
    %2860 = vmatprep.subr.bf16.mxu0 %v2340
    %2861 = vmatpush1.bf16.msra.mxu0 %v2339
    %2862 = vmatprep.subr.bf16.mxu0 %v2342
    %2863 = vmatpush1.bf16.msra.mxu0 %v2341
    %2864 = vmatprep.subr.bf16.mxu0 %v2344
    %2865 = vmatpush1.bf16.msra.mxu0 %v2343
    %2866 = vmatprep.subr.bf16.mxu0 %v2346
    %2867 = vmatpush1.bf16.msra.mxu0 %v2345
    %2868 = vmatprep.subr.bf16.mxu0 %v2348
    %2869 = vmatpush1.bf16.msra.mxu0 %v2347
    %2870 = vmatprep.subr.bf16.mxu0 %v2350
    %2871 = vmatpush1.bf16.msra.mxu0 %v2349
    %2872 = vmatprep.subr.bf16.mxu0 %v2352
    %2873 = vmatpush1.bf16.msra.mxu0 %v2351
    %2874 = vmatprep.subr.bf16.mxu0 %v2354
    %2875 = vmatpush1.bf16.msra.mxu0 %v2353
    %2876 = vmatprep.subr.bf16.mxu0 %v2356
    %2877 = vmatpush1.bf16.msra.mxu0 %v2355
    %2878 = vmatprep.subr.bf16.mxu0 %v2358
    %2879 = vmatpush1.bf16.msra.mxu0 %v2357
    %2880 = vmatprep.subr.bf16.mxu0 %v2360
    %2881 = vmatpush1.bf16.msra.mxu0 %v2359
    %2882 = vmatprep.subr.bf16.mxu0 %v2362
    %2883 = vmatpush1.bf16.msra.mxu0 %v2361
    %2884 = vmatprep.subr.bf16.mxu0 %v2364
    %2885 = vmatpush1.bf16.msra.mxu0 %v2363
    %2886 = vmatprep.subr.bf16.mxu0 %v2366
    %2887 = vmatpush1.bf16.msra.mxu0 %v2365
    %2888 = vmatprep.subr.bf16.mxu0 %v2368
    %2889 = vmatpush1.bf16.msra.mxu0 %v2367
    %2890 = vmatprep.mubr.bf16.mxu0 %v1256
    %2891 = vmatmul.mubr.bf16.gmra.mrb[0].mxu0 %v1255
    %v2892 = vpop.f32.mrb[0].mxu0
    %v2893 = vadd.f32 %v2852, %v2892
    %v2894 = vpop.f32.mrb[0].mxu0
    %v2895 = vadd.f32 %v2854, %v2894
    %v2896 = vpop.f32.mrb[0].mxu0
    %v2897 = vpop.f32.mrb[0].mxu0
    %2898 = vdwg.mxu0
    %2899 = vmatprep.subr.bf16.mxu0 %v2370
    %2900 = vmatpush1.bf16.msra.mxu0 %v2369
    %2901 = vmatprep.subr.bf16.mxu0 %v2372
    %2902 = vmatpush1.bf16.msra.mxu0 %v2371
    %2903 = vmatprep.subr.bf16.mxu0 %v2374
    %2904 = vmatpush1.bf16.msra.mxu0 %v2373
    %2905 = vmatprep.subr.bf16.mxu0 %v2376
    %2906 = vmatpush1.bf16.msra.mxu0 %v2375
    %2907 = vmatprep.subr.bf16.mxu0 %v2378
    %2908 = vmatpush1.bf16.msra.mxu0 %v2377
    %2909 = vmatprep.subr.bf16.mxu0 %v2380
    %2910 = vmatpush1.bf16.msra.mxu0 %v2379
    %2911 = vmatprep.subr.bf16.mxu0 %v2382
    %2912 = vmatpush1.bf16.msra.mxu0 %v2381
    %2913 = vmatprep.subr.bf16.mxu0 %v2384
    %2914 = vmatpush1.bf16.msra.mxu0 %v2383
    %2915 = vmatprep.subr.bf16.mxu0 %v2386
    %2916 = vmatpush1.bf16.msra.mxu0 %v2385
    %2917 = vmatprep.subr.bf16.mxu0 %v2388
    %2918 = vmatpush1.bf16.msra.mxu0 %v2387
    %2919 = vmatprep.subr.bf16.mxu0 %v2390
    %2920 = vmatpush1.bf16.msra.mxu0 %v2389
    %2921 = vmatprep.subr.bf16.mxu0 %v2392
    %2922 = vmatpush1.bf16.msra.mxu0 %v2391
    %2923 = vmatprep.subr.bf16.mxu0 %v2394
    %2924 = vmatpush1.bf16.msra.mxu0 %v2393
    %2925 = vmatprep.subr.bf16.mxu0 %v2396
    %2926 = vmatpush1.bf16.msra.mxu0 %v2395
    %2927 = vmatprep.subr.bf16.mxu0 %v2398
    %2928 = vmatpush1.bf16.msra.mxu0 %v2397
    %2929 = vmatprep.subr.bf16.mxu0 %v2400
    %2930 = vmatpush1.bf16.msra.mxu0 %v2399
    %2931 = vmatprep.mubr.bf16.mxu0 %v1258
    %2932 = vmatmul.mubr.bf16.gmra.mrb[0].mxu0 %v1257
    %v2933 = vpop.f32.mrb[0].mxu0
    %v2934 = vadd.f32 %v2893, %v2933
    %v2935 = vpop.f32.mrb[0].mxu0
    %v2936 = vadd.f32 %v2895, %v2935
    %v2937 = vpop.f32.mrb[0].mxu0
    %v2938 = vpop.f32.mrb[0].mxu0
    %2939 = vdwg.mxu0
    %2940 = vmatprep.subr.bf16.mxu0 %v2402
    %2941 = vmatpush1.bf16.msra.mxu0 %v2401
    %2942 = vmatprep.subr.bf16.mxu0 %v2404
    %2943 = vmatpush1.bf16.msra.mxu0 %v2403
    %2944 = vmatprep.subr.bf16.mxu0 %v2406
    %2945 = vmatpush1.bf16.msra.mxu0 %v2405
    %2946 = vmatprep.subr.bf16.mxu0 %v2408
    %2947 = vmatpush1.bf16.msra.mxu0 %v2407
    %2948 = vmatprep.subr.bf16.mxu0 %v2410
    %2949 = vmatpush1.bf16.msra.mxu0 %v2409
    %2950 = vmatprep.subr.bf16.mxu0 %v2412
    %2951 = vmatpush1.bf16.msra.mxu0 %v2411
    %2952 = vmatprep.subr.bf16.mxu0 %v2414
    %2953 = vmatpush1.bf16.msra.mxu0 %v2413
    %2954 = vmatprep.subr.bf16.mxu0 %v2416
    %2955 = vmatpush1.bf16.msra.mxu0 %v2415
    %2956 = vmatprep.subr.bf16.mxu0 %v2418
    %2957 = vmatpush1.bf16.msra.mxu0 %v2417
    %2958 = vmatprep.subr.bf16.mxu0 %v2420
    %2959 = vmatpush1.bf16.msra.mxu0 %v2419
    %2960 = vmatprep.subr.bf16.mxu0 %v2422
    %2961 = vmatpush1.bf16.msra.mxu0 %v2421
    %2962 = vmatprep.subr.bf16.mxu0 %v2424
    %2963 = vmatpush1.bf16.msra.mxu0 %v2423
    %2964 = vmatprep.subr.bf16.mxu0 %v2426
    %2965 = vmatpush1.bf16.msra.mxu0 %v2425
    %2966 = vmatprep.subr.bf16.mxu0 %v2428
    %2967 = vmatpush1.bf16.msra.mxu0 %v2427
    %2968 = vmatprep.subr.bf16.mxu0 %v2430
    %2969 = vmatpush1.bf16.msra.mxu0 %v2429
    %2970 = vmatprep.subr.bf16.mxu0 %v2432
    %2971 = vmatpush1.bf16.msra.mxu0 %v2431
    %2972 = vmatprep.mubr.bf16.mxu0 %v1260
    %2973 = vmatmul.mubr.bf16.gmra.mrb[0].mxu0 %v1259
    %v2974 = vpop.f32.mrb[0].mxu0
    %v2975 = vadd.f32 %v2934, %v2974
    %v2976 = vpop.f32.mrb[0].mxu0
    %v2977 = vadd.f32 %v2936, %v2976
    %v2978 = vpop.f32.mrb[0].mxu0
    %v2979 = vpop.f32.mrb[0].mxu0
    %2980 = vdwg.mxu0
    %2981 = vmatprep.subr.bf16.mxu0 %v2434
    %2982 = vmatpush1.bf16.msra.mxu0 %v2433
    %2983 = vmatprep.subr.bf16.mxu0 %v2436
    %2984 = vmatpush1.bf16.msra.mxu0 %v2435
    %2985 = vmatprep.subr.bf16.mxu0 %v2438
    %2986 = vmatpush1.bf16.msra.mxu0 %v2437
    %2987 = vmatprep.subr.bf16.mxu0 %v2440
    %2988 = vmatpush1.bf16.msra.mxu0 %v2439
    %2989 = vmatprep.subr.bf16.mxu0 %v2442
    %2990 = vmatpush1.bf16.msra.mxu0 %v2441
    %2991 = vmatprep.subr.bf16.mxu0 %v2444
    %2992 = vmatpush1.bf16.msra.mxu0 %v2443
    %2993 = vmatprep.subr.bf16.mxu0 %v2446
    %2994 = vmatpush1.bf16.msra.mxu0 %v2445
    %2995 = vmatprep.subr.bf16.mxu0 %v2448
    %2996 = vmatpush1.bf16.msra.mxu0 %v2447
    %2997 = vmatprep.subr.bf16.mxu0 %v2450
    %2998 = vmatpush1.bf16.msra.mxu0 %v2449
    %2999 = vmatprep.subr.bf16.mxu0 %v2452
    %3000 = vmatpush1.bf16.msra.mxu0 %v2451
    %3001 = vmatprep.subr.bf16.mxu0 %v2454
    %3002 = vmatpush1.bf16.msra.mxu0 %v2453
    %3003 = vmatprep.subr.bf16.mxu0 %v2456
    %3004 = vmatpush1.bf16.msra.mxu0 %v2455
    %3005 = vmatprep.subr.bf16.mxu0 %v2458
    %3006 = vmatpush1.bf16.msra.mxu0 %v2457
    %3007 = vmatprep.subr.bf16.mxu0 %v2460
    %3008 = vmatpush1.bf16.msra.mxu0 %v2459
    %3009 = vmatprep.subr.bf16.mxu0 %v2462
    %3010 = vmatpush1.bf16.msra.mxu0 %v2461
    %3011 = vmatprep.subr.bf16.mxu0 %v2464
    %3012 = vmatpush1.bf16.msra.mxu0 %v2463
    %3013 = vmatprep.mubr.bf16.mxu0 %v1262
    %3014 = vmatmul.mubr.bf16.gmra.mrb[0].mxu0 %v1261
    %v3015 = vpop.f32.mrb[0].mxu0
    %v3016 = vadd.f32 %v2975, %v3015
    %v3017 = vpop.f32.mrb[0].mxu0
    %v3018 = vadd.f32 %v2977, %v3017
    %v3019 = vpop.f32.mrb[0].mxu0
    %v3020 = vpop.f32.mrb[0].mxu0
    %3021 = vdwg.mxu0
    %3022 = vmatprep.subr.bf16.mxu0 %v2466
    %3023 = vmatpush1.bf16.msra.mxu0 %v2465
    %3024 = vmatprep.subr.bf16.mxu0 %v2468
    %3025 = vmatpush1.bf16.msra.mxu0 %v2467
    %3026 = vmatprep.subr.bf16.mxu0 %v2470
    %3027 = vmatpush1.bf16.msra.mxu0 %v2469
    %3028 = vmatprep.subr.bf16.mxu0 %v2472
    %3029 = vmatpush1.bf16.msra.mxu0 %v2471
    %3030 = vmatprep.subr.bf16.mxu0 %v2474
    %3031 = vmatpush1.bf16.msra.mxu0 %v2473
    %3032 = vmatprep.subr.bf16.mxu0 %v2476
    %3033 = vmatpush1.bf16.msra.mxu0 %v2475
    %3034 = vmatprep.subr.bf16.mxu0 %v2478
    %3035 = vmatpush1.bf16.msra.mxu0 %v2477
    %3036 = vmatprep.subr.bf16.mxu0 %v2480
    %3037 = vmatpush1.bf16.msra.mxu0 %v2479
    %3038 = vmatprep.subr.bf16.mxu0 %v2482
    %3039 = vmatpush1.bf16.msra.mxu0 %v2481
    %3040 = vmatprep.subr.bf16.mxu0 %v2484
    %3041 = vmatpush1.bf16.msra.mxu0 %v2483
    %3042 = vmatprep.subr.bf16.mxu0 %v2486
    %3043 = vmatpush1.bf16.msra.mxu0 %v2485
    %3044 = vmatprep.subr.bf16.mxu0 %v2488
    %3045 = vmatpush1.bf16.msra.mxu0 %v2487
    %3046 = vmatprep.subr.bf16.mxu0 %v2490
    %3047 = vmatpush1.bf16.msra.mxu0 %v2489
    %3048 = vmatprep.subr.bf16.mxu0 %v2492
    %3049 = vmatpush1.bf16.msra.mxu0 %v2491
    %3050 = vmatprep.subr.bf16.mxu0 %v2494
    %3051 = vmatpush1.bf16.msra.mxu0 %v2493
    %3052 = vmatprep.subr.bf16.mxu0 %v2496
    %3053 = vmatpush1.bf16.msra.mxu0 %v2495
    %3054 = vmatprep.mubr.bf16.mxu0 %v1264
    %3055 = vmatmul.mubr.bf16.gmra.mrb[0].mxu0 %v1263
    %v3056 = vpop.f32.mrb[0].mxu0
    %v3057 = vadd.f32 %v3016, %v3056
    %v3058 = vpop.f32.mrb[0].mxu0
    %v3059 = vadd.f32 %v3018, %v3058
    %v3060 = vpop.f32.mrb[0].mxu0
    %v3061 = vpop.f32.mrb[0].mxu0
    %3062 = vdwg.mxu0
    %3063 = vmatprep.subr.bf16.mxu0 %v2498
    %3064 = vmatpush1.bf16.msra.mxu0 %v2497
    %3065 = vmatprep.subr.bf16.mxu0 %v2500
    %3066 = vmatpush1.bf16.msra.mxu0 %v2499
    %3067 = vmatprep.subr.bf16.mxu0 %v2502
    %3068 = vmatpush1.bf16.msra.mxu0 %v2501
    %3069 = vmatprep.subr.bf16.mxu0 %v2504
    %3070 = vmatpush1.bf16.msra.mxu0 %v2503
    %3071 = vmatprep.subr.bf16.mxu0 %v2506
    %3072 = vmatpush1.bf16.msra.mxu0 %v2505
    %3073 = vmatprep.subr.bf16.mxu0 %v2508
    %3074 = vmatpush1.bf16.msra.mxu0 %v2507
    %3075 = vmatprep.subr.bf16.mxu0 %v2510
    %3076 = vmatpush1.bf16.msra.mxu0 %v2509
    %3077 = vmatprep.subr.bf16.mxu0 %v2512
    %3078 = vmatpush1.bf16.msra.mxu0 %v2511
    %3079 = vmatprep.subr.bf16.mxu0 %v2514
    %3080 = vmatpush1.bf16.msra.mxu0 %v2513
    %3081 = vmatprep.subr.bf16.mxu0 %v2516
    %3082 = vmatpush1.bf16.msra.mxu0 %v2515
    %3083 = vmatprep.subr.bf16.mxu0 %v2518
    %3084 = vmatpush1.bf16.msra.mxu0 %v2517
    %3085 = vmatprep.subr.bf16.mxu0 %v2520
    %3086 = vmatpush1.bf16.msra.mxu0 %v2519
    %3087 = vmatprep.subr.bf16.mxu0 %v2522
    %3088 = vmatpush1.bf16.msra.mxu0 %v2521
    %3089 = vmatprep.subr.bf16.mxu0 %v2524
    %3090 = vmatpush1.bf16.msra.mxu0 %v2523
    %3091 = vmatprep.subr.bf16.mxu0 %v2526
    %3092 = vmatpush1.bf16.msra.mxu0 %v2525
    %3093 = vmatprep.subr.bf16.mxu0 %v2528
    %3094 = vmatpush1.bf16.msra.mxu0 %v2527
    %3095 = vmatprep.mubr.bf16.mxu0 %v1266
    %3096 = vmatmul.mubr.bf16.gmra.mrb[0].mxu0 %v1265
    %v3097 = vpop.f32.mrb[0].mxu0
    %v3098 = vadd.f32 %v3057, %v3097
    %v3099 = vpop.f32.mrb[0].mxu0
    %v3100 = vadd.f32 %v3059, %v3099
    %v3101 = vpop.f32.mrb[0].mxu0
    %v3102 = vpop.f32.mrb[0].mxu0
    %3103 = vdwg.mxu0
    %3104 = vmatprep.subr.bf16.mxu0 %v2530
    %3105 = vmatpush1.bf16.msra.mxu0 %v2529
    %3106 = vmatprep.subr.bf16.mxu0 %v2532
    %3107 = vmatpush1.bf16.msra.mxu0 %v2531
    %3108 = vmatprep.subr.bf16.mxu0 %v2534
    %3109 = vmatpush1.bf16.msra.mxu0 %v2533
    %3110 = vmatprep.subr.bf16.mxu0 %v2536
    %3111 = vmatpush1.bf16.msra.mxu0 %v2535
    %3112 = vmatprep.subr.bf16.mxu0 %v2538
    %3113 = vmatpush1.bf16.msra.mxu0 %v2537
    %3114 = vmatprep.subr.bf16.mxu0 %v2540
    %3115 = vmatpush1.bf16.msra.mxu0 %v2539
    %3116 = vmatprep.subr.bf16.mxu0 %v2542
    %3117 = vmatpush1.bf16.msra.mxu0 %v2541
    %3118 = vmatprep.subr.bf16.mxu0 %v2544
    %3119 = vmatpush1.bf16.msra.mxu0 %v2543
    %3120 = vmatprep.subr.bf16.mxu0 %v2546
    %3121 = vmatpush1.bf16.msra.mxu0 %v2545
    %3122 = vmatprep.subr.bf16.mxu0 %v2548
    %3123 = vmatpush1.bf16.msra.mxu0 %v2547
    %3124 = vmatprep.subr.bf16.mxu0 %v2550
    %3125 = vmatpush1.bf16.msra.mxu0 %v2549
    %3126 = vmatprep.subr.bf16.mxu0 %v2552
    %3127 = vmatpush1.bf16.msra.mxu0 %v2551
    %3128 = vmatprep.subr.bf16.mxu0 %v2554
    %3129 = vmatpush1.bf16.msra.mxu0 %v2553
    %3130 = vmatprep.subr.bf16.mxu0 %v2556
    %3131 = vmatpush1.bf16.msra.mxu0 %v2555
    %3132 = vmatprep.subr.bf16.mxu0 %v2558
    %3133 = vmatpush1.bf16.msra.mxu0 %v2557
    %3134 = vmatprep.subr.bf16.mxu0 %v2560
    %3135 = vmatpush1.bf16.msra.mxu0 %v2559
    %3136 = vmatprep.mubr.bf16.mxu0 %v1268
    %3137 = vmatmul.mubr.bf16.gmra.mrb[0].mxu0 %v1267
    %v3138 = vpop.f32.mrb[0].mxu0
    %v3139 = vadd.f32 %v3098, %v3138
    %v3140 = vpop.f32.mrb[0].mxu0
    %v3141 = vadd.f32 %v3100, %v3140
    %v3142 = vpop.f32.mrb[0].mxu0
    %v3143 = vpop.f32.mrb[0].mxu0
    %3144 = vdwg.mxu0
    %3145 = vst [vmem:[%s5] sm:$0xff] %v3139
    %3146 = vst [vmem:[%s5 + $0x8] sm:$0xff] %v3141
    // Predicated region
    $region38: #{generator_forward.5} parent=1 // pred_check
      _
    $region39: #{generator_forward.5} parent=1 // pred_check_branch
      %3148 = sbr.rel (0) target = $region41
    $region40: #{generator_forward.5} parent=1 // pred_region
      _
    $region41: #{generator_forward.5} parent=1 // pred_fallthru
      _
    // Predicated region
    $region42: #{generator_forward.5} parent=1 // pred_check
      _
    $region43: #{generator_forward.5} parent=1 // pred_check_branch
      %3150 = sbr.rel (0) target = $region45
    $region44: #{generator_forward.5} parent=1 // pred_region
      _
    $region45: #{generator_forward.5} parent=1 // pred_fallthru
      _
    %3151 = vsyncpa [#allocation3], 1
    %3152 = vsyncpa [#allocation5], 1
    %3153 = vsyncpa [#allocation8], 1

// kernel: generator_forward.7
$region0: #{generator_forward.7}
  #allocation0 [shape = 'u32[]', space=smem, size = 0x4, offset = 0x4, fixed_abs, tag = 'smem constant byte address 0x4 - core index']
  #allocation1 [shape = 'u32[144,128]{1,0:T(1,128)}', space=vmem, size = 0x12000, scoped, tag = 'internal scratch']
  %s0 = inlined_call_operand.vmem [shape: bf16[56,128], index: 0, kind: input, shape index: {}]
  %s1 = inlined_call_operand.vmem [shape: bf16[128,128], index: 1, kind: input, shape index: {}]
  %s2 = inlined_call_operand.vmem [shape: f32[1,128], index: 2, kind: input, shape index: {}]
  %s3 = inlined_call_operand.vmem [shape: bf16[56,128], index: 3, kind: output, shape index: {}]
  %s4 = sld [smem:[#allocation0]]
  $region22: #{generator_forward.7} parent=0
    _
  %s6 = ssub.s32 1, %s4
  %s7 = scalar_select 0, %s6, %s4
  // Predicated region
  $region2: #{generator_forward.7} parent=0 // pred_check
    _
  $region3: #{generator_forward.7} parent=0 // pred_check_branch
    %9 = sbr.rel (0) target = $region5
  $region4: #{generator_forward.7} parent=0 // pred_region
    _
  $region5: #{generator_forward.7} parent=0 // pred_fallthru
    _
  // Predicated region
  $region6: #{generator_forward.7} parent=0 // pred_check
    _
  $region7: #{generator_forward.7} parent=0 // pred_check_branch
    %11 = sbr.rel (0) target = $region9
  $region8: #{generator_forward.7} parent=0 // pred_region
    _
  $region9: #{generator_forward.7} parent=0 // pred_fallthru
    _
  // Predicated region
  $region10: #{generator_forward.7} parent=0 // pred_check
    _
  $region11: #{generator_forward.7} parent=0 // pred_check_branch
    %13 = sbr.rel (0) target = $region13
  $region12: #{generator_forward.7} parent=0 // pred_region
    _
  $region13: #{generator_forward.7} parent=0 // pred_fallthru
    _
  %v15 = vld [vmem:[%s0] sm:$0xf]
  %v16 = vld [vmem:[%s0 + $0x4] sm:$0xf]
  %v17 = vld [vmem:[%s0 + $0x8] sm:$0xf]
  %v18 = vld [vmem:[%s0 + $0xc] sm:$0xf]
  %v19 = vld [vmem:[%s0 + $0x10] sm:$0xf]
  %v20 = vld [vmem:[%s0 + $0x14] sm:$0xf]
  %v21 = vld [vmem:[%s0 + $0x18] sm:$0xf]
  %v22 = vld [vmem:[%s1] sm:$0xf]
  %v23 = vld [vmem:[%s1 + $0x4] sm:$0xf]
  %v24 = vld [vmem:[%s1 + $0x8] sm:$0xf]
  %v25 = vld [vmem:[%s1 + $0xc] sm:$0xf]
  %v26 = vld [vmem:[%s1 + $0x10] sm:$0xf]
  %v27 = vld [vmem:[%s1 + $0x14] sm:$0xf]
  %v28 = vld [vmem:[%s1 + $0x18] sm:$0xf]
  %v29 = vld [vmem:[%s1 + $0x1c] sm:$0xf]
  %v30 = vld [vmem:[%s1 + $0x20] sm:$0xf]
  %v31 = vld [vmem:[%s1 + $0x24] sm:$0xf]
  %v32 = vld [vmem:[%s1 + $0x28] sm:$0xf]
  %v33 = vld [vmem:[%s1 + $0x2c] sm:$0xf]
  %v34 = vld [vmem:[%s1 + $0x30] sm:$0xf]
  %v35 = vld [vmem:[%s1 + $0x34] sm:$0xf]
  %v36 = vld [vmem:[%s1 + $0x38] sm:$0xf]
  %v37 = vld [vmem:[%s1 + $0x3c] sm:$0xf]
  %v38 = vld [vmem:[%s2] sm:$0x1]
  %v40 = vlaneseq
  %v41 = vshrl.u32 %v40, 7
  %v42 = vsub.s32 0, %v41
  %v43 = vrot.slane %v38, %v42
  %v52 = vunpack.c.l.b16 %v15
  %v53 = vunpack.c.l.b16 %v16
  %v54 = vunpack.c.l.b16 %v17
  %v55 = vunpack.c.l.b16 %v18
  %v56 = vunpack.c.l.b16 %v19
  %v57 = vunpack.c.l.b16 %v20
  %v58 = vunpack.c.l.b16 %v21
  %v59 = vpack.c.b16 %v53, %v52
  %v60 = vpack.c.b16 %v55, %v54
  %v61 = vpack.c.b16 %v57, %v56
  %v62 = vpack.c.b16 %v58, %v58
  %v83 = vunpack.c.l.b16 %v22
  %v84 = vunpack.c.l.b16 %v23
  %v85 = vunpack.c.l.b16 %v24
  %v86 = vunpack.c.l.b16 %v25
  %v87 = vunpack.c.l.b16 %v26
  %v88 = vunpack.c.l.b16 %v27
  %v89 = vunpack.c.l.b16 %v28
  %v90 = vunpack.c.l.b16 %v29
  %v91 = vunpack.c.l.b16 %v30
  %v92 = vunpack.c.l.b16 %v31
  %v93 = vunpack.c.l.b16 %v32
  %v94 = vunpack.c.l.b16 %v33
  %v95 = vunpack.c.l.b16 %v34
  %v96 = vunpack.c.l.b16 %v35
  %v97 = vunpack.c.l.b16 %v36
  %v98 = vunpack.c.l.b16 %v37
  %v99 = vpack.c.b16 %v84, %v83
  %v100 = vpack.c.b16 %v86, %v85
  %v101 = vpack.c.b16 %v88, %v87
  %v102 = vpack.c.b16 %v90, %v89
  %v103 = vpack.c.b16 %v92, %v91
  %v104 = vpack.c.b16 %v94, %v93
  %v105 = vpack.c.b16 %v96, %v95
  %v106 = vpack.c.b16 %v98, %v97
  %115 = vmatprep.subr.bf16.mxu0 0
  %116 = vmatpush1.bf16.msra.mxu0 %v99
  %117 = vmatprep.subr.bf16.mxu0 0
  %118 = vmatpush1.bf16.msra.mxu0 %v100
  %119 = vmatprep.subr.bf16.mxu0 0
  %120 = vmatpush1.bf16.msra.mxu0 %v101
  %121 = vmatprep.subr.bf16.mxu0 0
  %122 = vmatpush1.bf16.msra.mxu0 %v102
  %123 = vmatprep.subr.bf16.mxu0 0
  %124 = vmatpush1.bf16.msra.mxu0 %v103
  %125 = vmatprep.subr.bf16.mxu0 0
  %126 = vmatpush1.bf16.msra.mxu0 %v104
  %127 = vmatprep.subr.bf16.mxu0 0
  %128 = vmatpush1.bf16.msra.mxu0 %v105
  %129 = vmatprep.subr.bf16.mxu0 0
  %130 = vmatpush1.bf16.msra.mxu0 %v106
  %131 = vmatprep.subr.bf16.mxu0 0
  %132 = vmatpush1.bf16.msra.mxu0 0
  %133 = vmatprep.subr.bf16.mxu0 0
  %134 = vmatpush1.bf16.msra.mxu0 0
  %135 = vmatprep.subr.bf16.mxu0 0
  %136 = vmatpush1.bf16.msra.mxu0 0
  %137 = vmatprep.subr.bf16.mxu0 0
  %138 = vmatpush1.bf16.msra.mxu0 0
  %139 = vmatprep.subr.bf16.mxu0 0
  %140 = vmatpush1.bf16.msra.mxu0 0
  %141 = vmatprep.subr.bf16.mxu0 0
  %142 = vmatpush1.bf16.msra.mxu0 0
  %143 = vmatprep.subr.bf16.mxu0 0
  %144 = vmatpush1.bf16.msra.mxu0 0
  %145 = vmatprep.subr.bf16.mxu0 0
  %146 = vmatpush1.bf16.msra.mxu0 0
  %147 = vmatprep.mubr.bf16.mxu0 0
  %148 = vmatmul.mubr.bf16.gmra.mrb[0].mxu0 %v59
  %v149 = vpop.f32.mrb[0].mxu0
  %v150 = vadd.f32 %v43, %v149
  %v151 = vpop.f32.mrb[0].mxu0
  %v152 = vpop.f32.mrb[0].mxu0
  %v153 = vadd.f32 %v43, %v152
  %v154 = vpop.f32.mrb[0].mxu0
  %155 = vmatprep.mubr.bf16.mxu0 0
  %156 = vmatmul.mubr.bf16.gmra.mrb[0].mxu0 %v60
  %v157 = vpop.f32.mrb[0].mxu0
  %v158 = vadd.f32 %v43, %v157
  %v159 = vpop.f32.mrb[0].mxu0
  %v160 = vpop.f32.mrb[0].mxu0
  %v161 = vadd.f32 %v43, %v160
  %v162 = vpop.f32.mrb[0].mxu0
  %163 = vmatprep.mubr.bf16.mxu0 0
  %164 = vmatmul.mubr.bf16.gmra.mrb[0].mxu0 %v61
  %v165 = vpop.f32.mrb[0].mxu0
  %v166 = vadd.f32 %v43, %v165
  %v167 = vpop.f32.mrb[0].mxu0
  %v168 = vpop.f32.mrb[0].mxu0
  %v169 = vadd.f32 %v43, %v168
  %v170 = vpop.f32.mrb[0].mxu0
  %171 = vmatprep.mubr.bf16.mxu0 0
  %172 = vmatmul.mubr.bf16.gmra.mrb[0].mxu0 %v62
  %v173 = vpop.f32.mrb[0].mxu0
  %v174 = vadd.f32 %v43, %v173
  %v175 = vpop.f32.mrb[0].mxu0
  %v176 = vpop.f32.mrb[0].mxu0
  %v177 = vpop.f32.mrb[0].mxu0
  %178 = vdwg.mxu0
  %v179 = vmax.f32 %v150, 0.0
  %v180 = vmax.f32 %v153, 0.0
  %v181 = vmax.f32 %v158, 0.0
  %v182 = vmax.f32 %v161, 0.0
  %v183 = vmax.f32 %v166, 0.0
  %v184 = vmax.f32 %v169, 0.0
  %v185 = vmax.f32 %v174, 0.0
  %v186 = vpack.c.bf16 %v180, %v179
  %v187 = vpack.c.bf16 %v182, %v181
  %v188 = vpack.c.bf16 %v184, %v183
  %v189 = vpack.c.bf16 %v185, %v185
  %v194 = vunpack.c.l.b16 %v186
  %v195 = vunpack.c.h.b16 %v186
  %v196 = vunpack.c.l.b16 %v187
  %v197 = vunpack.c.h.b16 %v187
  %v198 = vunpack.c.l.b16 %v188
  %v199 = vunpack.c.h.b16 %v188
  %v200 = vunpack.c.l.b16 %v189
  %v201 = vpack.c.b16 %v194, %v194
  %v202 = vpack.c.b16 %v195, %v195
  %v203 = vpack.c.b16 %v196, %v196
  %v204 = vpack.c.b16 %v197, %v197
  %v205 = vpack.c.b16 %v198, %v198
  %v206 = vpack.c.b16 %v199, %v199
  %v207 = vpack.c.b16 %v200, %v200
  %215 = vst [vmem:[%s3] sm:$0xf] %v201
  %216 = vst [vmem:[%s3 + $0x4] sm:$0xf] %v202
  %217 = vst [vmem:[%s3 + $0x8] sm:$0xf] %v203
  %218 = vst [vmem:[%s3 + $0xc] sm:$0xf] %v204
  %219 = vst [vmem:[%s3 + $0x10] sm:$0xf] %v205
  %220 = vst [vmem:[%s3 + $0x14] sm:$0xf] %v206
  %221 = vst [vmem:[%s3 + $0x18] sm:$0xf] %v207
  // Predicated region
  $region14: #{generator_forward.7} parent=0 // pred_check
    _
  $region15: #{generator_forward.7} parent=0 // pred_check_branch
    %223 = sbr.rel (0) target = $region17
  $region16: #{generator_forward.7} parent=0 // pred_region
    _
  $region17: #{generator_forward.7} parent=0 // pred_fallthru
    _
  // Predicated region
  $region18: #{generator_forward.7} parent=0 // pred_check
    _
  $region19: #{generator_forward.7} parent=0 // pred_check_branch
    %225 = sbr.rel (0) target = $region21
  $region20: #{generator_forward.7} parent=0 // pred_region
    _
  $region21: #{generator_forward.7} parent=0 // pred_fallthru
    _

// kernel: generator_forward.8
$region0: #{generator_forward.8}
  #allocation0 [shape = 'u32[]', space=smem, size = 0x4, offset = 0x4, fixed_abs, tag = 'smem constant byte address 0x4 - core index']
  #allocation1 [shape = 'u32[144,128]{1,0:T(1,128)}', space=vmem, size = 0x12000, scoped, tag = 'internal scratch']
  %s0 = inlined_call_operand.vmem [shape: bf16[168,128], index: 0, kind: input, shape index: {}]
  %s1 = inlined_call_operand.vmem [shape: bf16[128,128], index: 1, kind: input, shape index: {}]
  %s2 = inlined_call_operand.vmem [shape: f32[1,128], index: 2, kind: input, shape index: {}]
  %s3 = inlined_call_operand.vmem [shape: bf16[168,128], index: 3, kind: output, shape index: {}]
  %s4 = sld [smem:[#allocation0]]
  $region22: #{generator_forward.8} parent=0
    _
  %s6 = ssub.s32 1, %s4
  %s7 = scalar_select 0, %s6, %s4
  // Predicated region
  $region2: #{generator_forward.8} parent=0 // pred_check
    _
  $region3: #{generator_forward.8} parent=0 // pred_check_branch
    %9 = sbr.rel (0) target = $region5
  $region4: #{generator_forward.8} parent=0 // pred_region
    _
  $region5: #{generator_forward.8} parent=0 // pred_fallthru
    _
  // Predicated region
  $region6: #{generator_forward.8} parent=0 // pred_check
    _
  $region7: #{generator_forward.8} parent=0 // pred_check_branch
    %11 = sbr.rel (0) target = $region9
  $region8: #{generator_forward.8} parent=0 // pred_region
    _
  $region9: #{generator_forward.8} parent=0 // pred_fallthru
    _
  // Predicated region
  $region10: #{generator_forward.8} parent=0 // pred_check
    _
  $region11: #{generator_forward.8} parent=0 // pred_check_branch
    %13 = sbr.rel (0) target = $region13
  $region12: #{generator_forward.8} parent=0 // pred_region
    _
  $region13: #{generator_forward.8} parent=0 // pred_fallthru
    _
  %v15 = vld [vmem:[%s0] sm:$0xf]
  %v16 = vld [vmem:[%s0 + $0x4] sm:$0xf]
  %v17 = vld [vmem:[%s0 + $0x8] sm:$0xf]
  %v18 = vld [vmem:[%s0 + $0xc] sm:$0xf]
  %v19 = vld [vmem:[%s0 + $0x10] sm:$0xf]
  %v20 = vld [vmem:[%s0 + $0x14] sm:$0xf]
  %v21 = vld [vmem:[%s0 + $0x18] sm:$0xf]
  %v22 = vld [vmem:[%s0 + $0x1c] sm:$0xf]
  %v23 = vld [vmem:[%s0 + $0x20] sm:$0xf]
  %v24 = vld [vmem:[%s0 + $0x24] sm:$0xf]
  %v25 = vld [vmem:[%s0 + $0x28] sm:$0xf]
  %v26 = vld [vmem:[%s0 + $0x2c] sm:$0xf]
  %v27 = vld [vmem:[%s0 + $0x30] sm:$0xf]
  %v28 = vld [vmem:[%s0 + $0x34] sm:$0xf]
  %v29 = vld [vmem:[%s0 + $0x38] sm:$0xf]
  %v30 = vld [vmem:[%s0 + $0x3c] sm:$0xf]
  %v31 = vld [vmem:[%s0 + $0x40] sm:$0xf]
  %v32 = vld [vmem:[%s0 + $0x44] sm:$0xf]
  %v33 = vld [vmem:[%s0 + $0x48] sm:$0xf]
  %v34 = vld [vmem:[%s0 + $0x4c] sm:$0xf]
  %v35 = vld [vmem:[%s0 + $0x50] sm:$0xf]
  %v36 = vld [vmem:[%s1] sm:$0xf]
  %v37 = vld [vmem:[%s1 + $0x4] sm:$0xf]
  %v38 = vld [vmem:[%s1 + $0x8] sm:$0xf]
  %v39 = vld [vmem:[%s1 + $0xc] sm:$0xf]
  %v40 = vld [vmem:[%s1 + $0x10] sm:$0xf]
  %v41 = vld [vmem:[%s1 + $0x14] sm:$0xf]
  %v42 = vld [vmem:[%s1 + $0x18] sm:$0xf]
  %v43 = vld [vmem:[%s1 + $0x1c] sm:$0xf]
  %v44 = vld [vmem:[%s1 + $0x20] sm:$0xf]
  %v45 = vld [vmem:[%s1 + $0x24] sm:$0xf]
  %v46 = vld [vmem:[%s1 + $0x28] sm:$0xf]
  %v47 = vld [vmem:[%s1 + $0x2c] sm:$0xf]
  %v48 = vld [vmem:[%s1 + $0x30] sm:$0xf]
  %v49 = vld [vmem:[%s1 + $0x34] sm:$0xf]
  %v50 = vld [vmem:[%s1 + $0x38] sm:$0xf]
  %v51 = vld [vmem:[%s1 + $0x3c] sm:$0xf]
  %v52 = vld [vmem:[%s2] sm:$0x1]
  %v54 = vlaneseq
  %v55 = vshrl.u32 %v54, 7
  %v56 = vsub.s32 0, %v55
  %v57 = vrot.slane %v52, %v56
  %v80 = vunpack.c.l.b16 %v15
  %v81 = vunpack.c.l.b16 %v16
  %v82 = vunpack.c.l.b16 %v17
  %v83 = vunpack.c.l.b16 %v18
  %v84 = vunpack.c.l.b16 %v19
  %v85 = vunpack.c.l.b16 %v20
  %v86 = vunpack.c.l.b16 %v21
  %v87 = vunpack.c.l.b16 %v22
  %v88 = vunpack.c.l.b16 %v23
  %v89 = vunpack.c.l.b16 %v24
  %v90 = vunpack.c.l.b16 %v25
  %v91 = vunpack.c.l.b16 %v26
  %v92 = vunpack.c.l.b16 %v27
  %v93 = vunpack.c.l.b16 %v28
  %v94 = vunpack.c.l.b16 %v29
  %v95 = vunpack.c.l.b16 %v30
  %v96 = vunpack.c.l.b16 %v31
  %v97 = vunpack.c.l.b16 %v32
  %v98 = vunpack.c.l.b16 %v33
  %v99 = vunpack.c.l.b16 %v34
  %v100 = vunpack.c.l.b16 %v35
  %v101 = vpack.c.b16 %v81, %v80
  %v102 = vpack.c.b16 %v83, %v82
  %v103 = vpack.c.b16 %v85, %v84
  %v104 = vpack.c.b16 %v87, %v86
  %v105 = vpack.c.b16 %v89, %v88
  %v106 = vpack.c.b16 %v91, %v90
  %v107 = vpack.c.b16 %v93, %v92
  %v108 = vpack.c.b16 %v95, %v94
  %v109 = vpack.c.b16 %v97, %v96
  %v110 = vpack.c.b16 %v99, %v98
  %v111 = vpack.c.b16 %v100, %v100
  %v139 = vunpack.c.l.b16 %v36
  %v140 = vunpack.c.l.b16 %v37
  %v141 = vunpack.c.l.b16 %v38
  %v142 = vunpack.c.l.b16 %v39
  %v143 = vunpack.c.l.b16 %v40
  %v144 = vunpack.c.l.b16 %v41
  %v145 = vunpack.c.l.b16 %v42
  %v146 = vunpack.c.l.b16 %v43
  %v147 = vunpack.c.l.b16 %v44
  %v148 = vunpack.c.l.b16 %v45
  %v149 = vunpack.c.l.b16 %v46
  %v150 = vunpack.c.l.b16 %v47
  %v151 = vunpack.c.l.b16 %v48
  %v152 = vunpack.c.l.b16 %v49
  %v153 = vunpack.c.l.b16 %v50
  %v154 = vunpack.c.l.b16 %v51
  %v155 = vpack.c.b16 %v140, %v139
  %v156 = vpack.c.b16 %v142, %v141
  %v157 = vpack.c.b16 %v144, %v143
  %v158 = vpack.c.b16 %v146, %v145
  %v159 = vpack.c.b16 %v148, %v147
  %v160 = vpack.c.b16 %v150, %v149
  %v161 = vpack.c.b16 %v152, %v151
  %v162 = vpack.c.b16 %v154, %v153
  %171 = vmatprep.subr.bf16.mxu0 0
  %172 = vmatpush1.bf16.msra.mxu0 %v155
  %173 = vmatprep.subr.bf16.mxu0 0
  %174 = vmatpush1.bf16.msra.mxu0 %v156
  %175 = vmatprep.subr.bf16.mxu0 0
  %176 = vmatpush1.bf16.msra.mxu0 %v157
  %177 = vmatprep.subr.bf16.mxu0 0
  %178 = vmatpush1.bf16.msra.mxu0 %v158
  %179 = vmatprep.subr.bf16.mxu0 0
  %180 = vmatpush1.bf16.msra.mxu0 %v159
  %181 = vmatprep.subr.bf16.mxu0 0
  %182 = vmatpush1.bf16.msra.mxu0 %v160
  %183 = vmatprep.subr.bf16.mxu0 0
  %184 = vmatpush1.bf16.msra.mxu0 %v161
  %185 = vmatprep.subr.bf16.mxu0 0
  %186 = vmatpush1.bf16.msra.mxu0 %v162
  %187 = vmatprep.subr.bf16.mxu0 0
  %188 = vmatpush1.bf16.msra.mxu0 0
  %189 = vmatprep.subr.bf16.mxu0 0
  %190 = vmatpush1.bf16.msra.mxu0 0
  %191 = vmatprep.subr.bf16.mxu0 0
  %192 = vmatpush1.bf16.msra.mxu0 0
  %193 = vmatprep.subr.bf16.mxu0 0
  %194 = vmatpush1.bf16.msra.mxu0 0
  %195 = vmatprep.subr.bf16.mxu0 0
  %196 = vmatpush1.bf16.msra.mxu0 0
  %197 = vmatprep.subr.bf16.mxu0 0
  %198 = vmatpush1.bf16.msra.mxu0 0
  %199 = vmatprep.subr.bf16.mxu0 0
  %200 = vmatpush1.bf16.msra.mxu0 0
  %201 = vmatprep.subr.bf16.mxu0 0
  %202 = vmatpush1.bf16.msra.mxu0 0
  %203 = vmatprep.mubr.bf16.mxu0 0
  %204 = vmatmul.mubr.bf16.gmra.mrb[0].mxu0 %v101
  %v205 = vpop.f32.mrb[0].mxu0
  %v206 = vadd.f32 %v57, %v205
  %v207 = vpop.f32.mrb[0].mxu0
  %v208 = vpop.f32.mrb[0].mxu0
  %v209 = vadd.f32 %v57, %v208
  %v210 = vpop.f32.mrb[0].mxu0
  %211 = vmatprep.mubr.bf16.mxu0 0
  %212 = vmatmul.mubr.bf16.gmra.mrb[0].mxu0 %v102
  %v213 = vpop.f32.mrb[0].mxu0
  %v214 = vadd.f32 %v57, %v213
  %v215 = vpop.f32.mrb[0].mxu0
  %v216 = vpop.f32.mrb[0].mxu0
  %v217 = vadd.f32 %v57, %v216
  %v218 = vpop.f32.mrb[0].mxu0
  %219 = vmatprep.mubr.bf16.mxu0 0
  %220 = vmatmul.mubr.bf16.gmra.mrb[0].mxu0 %v103
  %v221 = vpop.f32.mrb[0].mxu0
  %v222 = vadd.f32 %v57, %v221
  %v223 = vpop.f32.mrb[0].mxu0
  %v224 = vpop.f32.mrb[0].mxu0
  %v225 = vadd.f32 %v57, %v224
  %v226 = vpop.f32.mrb[0].mxu0
  %227 = vmatprep.mubr.bf16.mxu0 0
  %228 = vmatmul.mubr.bf16.gmra.mrb[0].mxu0 %v104
  %v229 = vpop.f32.mrb[0].mxu0
  %v230 = vadd.f32 %v57, %v229
  %v231 = vpop.f32.mrb[0].mxu0
  %v232 = vpop.f32.mrb[0].mxu0
  %v233 = vadd.f32 %v57, %v232
  %v234 = vpop.f32.mrb[0].mxu0
  %235 = vmatprep.mubr.bf16.mxu0 0
  %236 = vmatmul.mubr.bf16.gmra.mrb[0].mxu0 %v105
  %v237 = vpop.f32.mrb[0].mxu0
  %v238 = vadd.f32 %v57, %v237
  %v239 = vpop.f32.mrb[0].mxu0
  %v240 = vpop.f32.mrb[0].mxu0
  %v241 = vadd.f32 %v57, %v240
  %v242 = vpop.f32.mrb[0].mxu0
  %243 = vmatprep.mubr.bf16.mxu0 0
  %244 = vmatmul.mubr.bf16.gmra.mrb[0].mxu0 %v106
  %v245 = vpop.f32.mrb[0].mxu0
  %v246 = vadd.f32 %v57, %v245
  %v247 = vpop.f32.mrb[0].mxu0
  %v248 = vpop.f32.mrb[0].mxu0
  %v249 = vadd.f32 %v57, %v248
  %v250 = vpop.f32.mrb[0].mxu0
  %251 = vmatprep.mubr.bf16.mxu0 0
  %252 = vmatmul.mubr.bf16.gmra.mrb[0].mxu0 %v107
  %v253 = vpop.f32.mrb[0].mxu0
  %v254 = vadd.f32 %v57, %v253
  %v255 = vpop.f32.mrb[0].mxu0
  %v256 = vpop.f32.mrb[0].mxu0
  %v257 = vadd.f32 %v57, %v256
  %v258 = vpop.f32.mrb[0].mxu0
  %259 = vmatprep.mubr.bf16.mxu0 0
  %260 = vmatmul.mubr.bf16.gmra.mrb[0].mxu0 %v108
  %v261 = vpop.f32.mrb[0].mxu0
  %v262 = vadd.f32 %v57, %v261
  %v263 = vpop.f32.mrb[0].mxu0
  %v264 = vpop.f32.mrb[0].mxu0
  %v265 = vadd.f32 %v57, %v264
  %v266 = vpop.f32.mrb[0].mxu0
  %267 = vmatprep.mubr.bf16.mxu0 0
  %268 = vmatmul.mubr.bf16.gmra.mrb[0].mxu0 %v109
  %v269 = vpop.f32.mrb[0].mxu0
  %v270 = vadd.f32 %v57, %v269
  %v271 = vpop.f32.mrb[0].mxu0
  %v272 = vpop.f32.mrb[0].mxu0
  %v273 = vadd.f32 %v57, %v272
  %v274 = vpop.f32.mrb[0].mxu0
  %275 = vmatprep.mubr.bf16.mxu0 0
  %276 = vmatmul.mubr.bf16.gmra.mrb[0].mxu0 %v110
  %v277 = vpop.f32.mrb[0].mxu0
  %v278 = vadd.f32 %v57, %v277
  %v279 = vpop.f32.mrb[0].mxu0
  %v280 = vpop.f32.mrb[0].mxu0
  %v281 = vadd.f32 %v57, %v280
  %v282 = vpop.f32.mrb[0].mxu0
  %283 = vmatprep.mubr.bf16.mxu0 0
  %284 = vmatmul.mubr.bf16.gmra.mrb[0].mxu0 %v111
  %v285 = vpop.f32.mrb[0].mxu0
  %v286 = vadd.f32 %v57, %v285
  %v287 = vpop.f32.mrb[0].mxu0
  %v288 = vpop.f32.mrb[0].mxu0
  %v289 = vpop.f32.mrb[0].mxu0
  %290 = vdwg.mxu0
  %v291 = vmax.f32 %v206, 0.0
  %v292 = vmax.f32 %v209, 0.0
  %v293 = vmax.f32 %v214, 0.0
  %v294 = vmax.f32 %v217, 0.0
  %v295 = vmax.f32 %v222, 0.0
  %v296 = vmax.f32 %v225, 0.0
  %v297 = vmax.f32 %v230, 0.0
  %v298 = vmax.f32 %v233, 0.0
  %v299 = vmax.f32 %v238, 0.0
  %v300 = vmax.f32 %v241, 0.0
  %v301 = vmax.f32 %v246, 0.0
  %v302 = vmax.f32 %v249, 0.0
  %v303 = vmax.f32 %v254, 0.0
  %v304 = vmax.f32 %v257, 0.0
  %v305 = vmax.f32 %v262, 0.0
  %v306 = vmax.f32 %v265, 0.0
  %v307 = vmax.f32 %v270, 0.0
  %v308 = vmax.f32 %v273, 0.0
  %v309 = vmax.f32 %v278, 0.0
  %v310 = vmax.f32 %v281, 0.0
  %v311 = vmax.f32 %v286, 0.0
  %v312 = vpack.c.bf16 %v292, %v291
  %v313 = vpack.c.bf16 %v294, %v293
  %v314 = vpack.c.bf16 %v296, %v295
  %v315 = vpack.c.bf16 %v298, %v297
  %v316 = vpack.c.bf16 %v300, %v299
  %v317 = vpack.c.bf16 %v302, %v301
  %v318 = vpack.c.bf16 %v304, %v303
  %v319 = vpack.c.bf16 %v306, %v305
  %v320 = vpack.c.bf16 %v308, %v307
  %v321 = vpack.c.bf16 %v310, %v309
  %v322 = vpack.c.bf16 %v311, %v311
  %v334 = vunpack.c.l.b16 %v312
  %v335 = vunpack.c.h.b16 %v312
  %v336 = vunpack.c.l.b16 %v313
  %v337 = vunpack.c.h.b16 %v313
  %v338 = vunpack.c.l.b16 %v314
  %v339 = vunpack.c.h.b16 %v314
  %v340 = vunpack.c.l.b16 %v315
  %v341 = vunpack.c.h.b16 %v315
  %v342 = vunpack.c.l.b16 %v316
  %v343 = vunpack.c.h.b16 %v316
  %v344 = vunpack.c.l.b16 %v317
  %v345 = vunpack.c.h.b16 %v317
  %v346 = vunpack.c.l.b16 %v318
  %v347 = vunpack.c.h.b16 %v318
  %v348 = vunpack.c.l.b16 %v319
  %v349 = vunpack.c.h.b16 %v319
  %v350 = vunpack.c.l.b16 %v320
  %v351 = vunpack.c.h.b16 %v320
  %v352 = vunpack.c.l.b16 %v321
  %v353 = vunpack.c.h.b16 %v321
  %v354 = vunpack.c.l.b16 %v322
  %v355 = vpack.c.b16 %v334, %v334
  %v356 = vpack.c.b16 %v335, %v335
  %v357 = vpack.c.b16 %v336, %v336
  %v358 = vpack.c.b16 %v337, %v337
  %v359 = vpack.c.b16 %v338, %v338
  %v360 = vpack.c.b16 %v339, %v339
  %v361 = vpack.c.b16 %v340, %v340
  %v362 = vpack.c.b16 %v341, %v341
  %v363 = vpack.c.b16 %v342, %v342
  %v364 = vpack.c.b16 %v343, %v343
  %v365 = vpack.c.b16 %v344, %v344
  %v366 = vpack.c.b16 %v345, %v345
  %v367 = vpack.c.b16 %v346, %v346
  %v368 = vpack.c.b16 %v347, %v347
  %v369 = vpack.c.b16 %v348, %v348
  %v370 = vpack.c.b16 %v349, %v349
  %v371 = vpack.c.b16 %v350, %v350
  %v372 = vpack.c.b16 %v351, %v351
  %v373 = vpack.c.b16 %v352, %v352
  %v374 = vpack.c.b16 %v353, %v353
  %v375 = vpack.c.b16 %v354, %v354
  %397 = vst [vmem:[%s3] sm:$0xf] %v355
  %398 = vst [vmem:[%s3 + $0x4] sm:$0xf] %v356
  %399 = vst [vmem:[%s3 + $0x8] sm:$0xf] %v357
  %400 = vst [vmem:[%s3 + $0xc] sm:$0xf] %v358
  %401 = vst [vmem:[%s3 + $0x10] sm:$0xf] %v359
  %402 = vst [vmem:[%s3 + $0x14] sm:$0xf] %v360
  %403 = vst [vmem:[%s3 + $0x18] sm:$0xf] %v361
  %404 = vst [vmem:[%s3 + $0x1c] sm:$0xf] %v362
  %405 = vst [vmem:[%s3 + $0x20] sm:$0xf] %v363
  %406 = vst [vmem:[%s3 + $0x24] sm:$0xf] %v364
  %407 = vst [vmem:[%s3 + $0x28] sm:$0xf] %v365
  %408 = vst [vmem:[%s3 + $0x2c] sm:$0xf] %v366
  %409 = vst [vmem:[%s3 + $0x30] sm:$0xf] %v367
  %410 = vst [vmem:[%s3 + $0x34] sm:$0xf] %v368
  %411 = vst [vmem:[%s3 + $0x38] sm:$0xf] %v369
  %412 = vst [vmem:[%s3 + $0x3c] sm:$0xf] %v370
  %413 = vst [vmem:[%s3 + $0x40] sm:$0xf] %v371
  %414 = vst [vmem:[%s3 + $0x44] sm:$0xf] %v372
  %415 = vst [vmem:[%s3 + $0x48] sm:$0xf] %v373
  %416 = vst [vmem:[%s3 + $0x4c] sm:$0xf] %v374
  %417 = vst [vmem:[%s3 + $0x50] sm:$0xf] %v375
  // Predicated region
  $region14: #{generator_forward.8} parent=0 // pred_check
    _
  $region15: #{generator_forward.8} parent=0 // pred_check_branch
    %419 = sbr.rel (0) target = $region17
  $region16: #{generator_forward.8} parent=0 // pred_region
    _
  $region17: #{generator_forward.8} parent=0 // pred_fallthru
    _
  // Predicated region
  $region18: #{generator_forward.8} parent=0 // pred_check
    _
  $region19: #{generator_forward.8} parent=0 // pred_check_branch
    %421 = sbr.rel (0) target = $region21
  $region20: #{generator_forward.8} parent=0 // pred_region
    _
  $region21: #{generator_forward.8} parent=0 // pred_fallthru
    _

// kernel: generator_forward.9
$region0: #{generator_forward.9}
  #allocation0 [shape = 'u32[]', space=smem, size = 0x4, offset = 0x4, fixed_abs, tag = 'smem constant byte address 0x4 - core index']
  #allocation1 [shape = 'u32[144,128]{1,0:T(1,128)}', space=vmem, size = 0x12000, scoped, tag = 'internal scratch']
  %s0 = inlined_call_operand.vmem [shape: bf16[592,128], index: 0, kind: input, shape index: {}]
  %s1 = inlined_call_operand.vmem [shape: bf16[128,128], index: 1, kind: input, shape index: {}]
  %s2 = inlined_call_operand.vmem [shape: f32[1,128], index: 2, kind: input, shape index: {}]
  %s3 = inlined_call_operand.vmem [shape: f32[592,128], index: 3, kind: output, shape index: {}]
  %s4 = sld [smem:[#allocation0]]
  $region45: #{generator_forward.9} parent=0
    _
  %s6 = ssub.s32 1, %s4
  %s7 = scalar_select 0, %s6, %s4
  loop: start=0, step=1, limit=4
  $region2: #{generator_forward.9} parent=0 // loop_pre_header
    _
  $region3: #{generator_forward.9} parent=0 // loop_header
    %s9 = sphi 0, %s13
    %p10 = scmp.ge.s32.totalorder %s9, 4
    %s19 = sphi 0, %s21
    %s22 = sphi 0, %s19
    %s23 = sphi 0, %s22
    %s39 = sphi 0, %s23
    %s43 = sphi 0, %s43
    %s45 = sphi 0, %s43
    %s46 = sphi 0, %s45
    %s60 = sphi 0, %s46
    %s64 = sphi 0, %s64
    %s66 = sphi 0, %s64
    %s67 = sphi 0, %s66
    %s81 = sphi 0, %s67
    %s87 = sphi 0, %s89
    %s90 = sphi 0, %s87
    %s91 = sphi 0, %s90
    %s107 = sphi 0, %s91
  $region4: #{generator_forward.9} parent=0 // loop_header_branch
    %12 = sbr.rel (%p10) target = $region8
  $region5: #{generator_forward.9} parent=0 // loop_body
    %s14 = ssub.s32 %s9, 1
    %s15 = ssub.s32 %s9, 2
    %s16 = sadd.s32 %s9, 1
    %s17 = ssub.s32 %s9, %s16
    %p18 = scmp.eq.s32.totalorder %s17, 0
    %s20 = sadd.s32 %s19, 1
    %s21 = scalar_select %p18, %s19, %s20
    %p24 = pneg %p18
    %p25 = scmp.eq.s32.totalorder %s9, 1
    %p26 = por %p24, %p25
    %p27 = scmp.ne.s32.totalorder %s19, %s22
    %p28 = scmp.eq.s32.totalorder %s9, 0
    %p29 = por %p27, %p28
    %p30 = scmp.ne.s32.totalorder %s19, %s22
    %p31 = scmp.eq.s32.totalorder %s14, 1
    %p32 = por %p30, %p31
    %p33 = scmp.ne.s32.totalorder %s22, %s23
    %p34 = scmp.eq.s32.totalorder %s14, 0
    %p35 = por %p33, %p34
    %p36 = scmp.ne.s32.totalorder %s22, %s23
    %p37 = scmp.eq.s32.totalorder %s15, 1
    %p38 = por %p36, %p37
    %p40 = scmp.ne.s32.totalorder %s23, %s39
    %p41 = scmp.eq.s32.totalorder %s15, 0
    %p42 = por %p40, %p41
    %s44 = sadd.s32 %s43, 1
    %p47 = scmp.eq.s32.totalorder %s9, 1
    %p48 = scmp.ne.s32.totalorder %s43, %s45
    %p49 = scmp.eq.s32.totalorder %s9, 0
    %p50 = por %p48, %p49
    %p51 = scmp.ne.s32.totalorder %s43, %s45
    %p52 = scmp.eq.s32.totalorder %s14, 1
    %p53 = por %p51, %p52
    %p54 = scmp.ne.s32.totalorder %s45, %s46
    %p55 = scmp.eq.s32.totalorder %s14, 0
    %p56 = por %p54, %p55
    %p57 = scmp.ne.s32.totalorder %s45, %s46
    %p58 = scmp.eq.s32.totalorder %s15, 1
    %p59 = por %p57, %p58
    %p61 = scmp.ne.s32.totalorder %s46, %s60
    %p62 = scmp.eq.s32.totalorder %s15, 0
    %p63 = por %p61, %p62
    %s65 = sadd.s32 %s64, 1
    %p68 = scmp.eq.s32.totalorder %s9, 1
    %p69 = scmp.ne.s32.totalorder %s64, %s66
    %p70 = scmp.eq.s32.totalorder %s9, 0
    %p71 = por %p69, %p70
    %p72 = scmp.ne.s32.totalorder %s64, %s66
    %p73 = scmp.eq.s32.totalorder %s14, 1
    %p74 = por %p72, %p73
    %p75 = scmp.ne.s32.totalorder %s66, %s67
    %p76 = scmp.eq.s32.totalorder %s14, 0
    %p77 = por %p75, %p76
    %p78 = scmp.ne.s32.totalorder %s66, %s67
    %p79 = scmp.eq.s32.totalorder %s15, 1
    %p80 = por %p78, %p79
    %p82 = scmp.ne.s32.totalorder %s67, %s81
    %p83 = scmp.eq.s32.totalorder %s15, 0
    %p84 = por %p82, %p83
    %s85 = ssub.s32 %s9, %s16
    %p86 = scmp.eq.s32.totalorder %s85, 0
    %s88 = sadd.s32 %s87, 1
    %s89 = scalar_select %p86, %s87, %s88
    %p92 = pneg %p86
    %p93 = scmp.eq.s32.totalorder %s9, 1
    %p94 = por %p92, %p93
    %p95 = scmp.ne.s32.totalorder %s87, %s90
    %p96 = scmp.eq.s32.totalorder %s9, 0
    %p97 = por %p95, %p96
    %p98 = scmp.ne.s32.totalorder %s87, %s90
    %p99 = scmp.eq.s32.totalorder %s14, 1
    %p100 = por %p98, %p99
    %p101 = scmp.ne.s32.totalorder %s90, %s91
    %p102 = scmp.eq.s32.totalorder %s14, 0
    %p103 = por %p101, %p102
    %p104 = scmp.ne.s32.totalorder %s90, %s91
    %p105 = scmp.eq.s32.totalorder %s15, 1
    %p106 = por %p104, %p105
    %p108 = scmp.ne.s32.totalorder %s91, %s107
    %p109 = scmp.eq.s32.totalorder %s15, 0
    %p110 = por %p108, %p109
    %p111 = scmp.le.s32.totalorder 1, %s9
    %p112 = scmp.lt.s32.totalorder %s9, 3
    %p113 = pnand %p111, %p112
    %p114 = pneg %p113
    // Predicated region
    $region9: #{generator_forward.9} parent=5 // pred_check
      _
    $region10: #{generator_forward.9} parent=5 // pred_check_branch
      %116 = sbr.rel (%p113) target = $region12
    $region11: #{generator_forward.9} parent=5 // pred_region
      %s117 = ssub.s32 %s9, 1
      // Predicated region
      $region13: #{generator_forward.9} parent=11 // pred_check
        %p118 = pneg %p56
      $region14: #{generator_forward.9} parent=11 // pred_check_branch
        %120 = sbr.rel (%p118) target = $region16
      $region15: #{generator_forward.9} parent=11 // pred_region
        _
      $region16: #{generator_forward.9} parent=11 // pred_fallthru
        _
      // Predicated region
      $region17: #{generator_forward.9} parent=11 // pred_check
        %p121 = pneg %p77
      $region18: #{generator_forward.9} parent=11 // pred_check_branch
        %123 = sbr.rel (%p121) target = $region20
      $region19: #{generator_forward.9} parent=11 // pred_region
        _
      $region20: #{generator_forward.9} parent=11 // pred_fallthru
        _
    $region12: #{generator_forward.9} parent=5 // pred_fallthru
      _
    %p124 = scmp.lt.s32.totalorder %s9, 2
    // Predicated region
    $region21: #{generator_forward.9} parent=5 // pred_check
      %p125 = pneg %p124
    $region22: #{generator_forward.9} parent=5 // pred_check_branch
      %127 = sbr.rel (%p125) target = $region24
    $region23: #{generator_forward.9} parent=5 // pred_region
      // Predicated region
      $region25: #{generator_forward.9} parent=23 // pred_check
        %p128 = pneg %p29
      $region26: #{generator_forward.9} parent=23 // pred_check_branch
        %130 = sbr.rel (%p128) target = $region28
      $region27: #{generator_forward.9} parent=23 // pred_region
        %s131 = smul.u32 37, %s9
        %p132 = scmp.lt.s32.totalorder %s131, 73
        %s133 = scalar_select %p132, %s131, 73
        %s134 = smul.addr %s133, 4
        %s135 = scalar_lea.vmem %s0, %s134
        %s136 = smul.u32 37, %s9
      $region28: #{generator_forward.9} parent=23 // pred_fallthru
        _
    $region24: #{generator_forward.9} parent=5 // pred_fallthru
      _
    %p137 = scmp.le.s32.totalorder 1, %s9
    %p138 = scmp.lt.s32.totalorder %s9, 3
    %p139 = pnand %p137, %p138
    %p140 = pneg %p139
    // Predicated region
    $region29: #{generator_forward.9} parent=5 // pred_check
      _
    $region30: #{generator_forward.9} parent=5 // pred_check_branch
      %142 = sbr.rel (%p139) target = $region32
    $region31: #{generator_forward.9} parent=5 // pred_region
      %s143 = ssub.s32 %s9, 1
      %s144 = smul.u32 37, %s14
      %p145 = scmp.lt.s32.totalorder %s144, 73
      %s146 = scalar_select %p145, %s144, 73
      %s147 = smul.addr %s146, 4
      %s148 = scalar_lea.vmem %s0, %s147
      %p149 = pneg %p35
      %p150 = pneg %p32
      %p151 = pneg %p56
      %p152 = pneg %p53
      %p153 = pneg %p77
      %p154 = pneg %p74
      %p155 = pneg %p103
      %p156 = pneg %p100
      %s157 = smul.u32 37, %s14
      %p158 = scmp.lt.s32.totalorder %s157, 73
      %s159 = scalar_select %p158, %s157, 73
      %s160 = smul.addr %s159, 8
      %s161 = scalar_lea.vmem %s3, %s160
      %s162 = smul.u32 37, %s14
      %p163 = scmp.lt.s32.totalorder %s162, 73
      %s164 = scalar_select %p163, %s162, 73
      %s165 = smul.addr %s164, 4
      %s166 = scalar_lea.vmem %s0, %s165
      %s167 = smul.u32 37, %s14
      %s168 = smul.u32 37, %s14
      %p169 = scmp.lt.s32.totalorder %s168, 73
      %s170 = scalar_select %p169, %s168, 73
      %s171 = smul.addr %s170, 8
      %s172 = scalar_lea.vmem %s3, %s171
      %s173 = smul.u32 37, %s14
      %v175 = vld [vmem:[%s166] sm:$0xf]
      %v176 = vld [vmem:[%s166 + $0x4] sm:$0xf]
      %v177 = vld [vmem:[%s166 + $0x8] sm:$0xf]
      %v178 = vld [vmem:[%s166 + $0xc] sm:$0xf]
      %v179 = vld [vmem:[%s166 + $0x10] sm:$0xf]
      %v180 = vld [vmem:[%s166 + $0x14] sm:$0xf]
      %v181 = vld [vmem:[%s166 + $0x18] sm:$0xf]
      %v182 = vld [vmem:[%s166 + $0x1c] sm:$0xf]
      %v183 = vld [vmem:[%s166 + $0x20] sm:$0xf]
      %v184 = vld [vmem:[%s166 + $0x24] sm:$0xf]
      %v185 = vld [vmem:[%s166 + $0x28] sm:$0xf]
      %v186 = vld [vmem:[%s166 + $0x2c] sm:$0xf]
      %v187 = vld [vmem:[%s166 + $0x30] sm:$0xf]
      %v188 = vld [vmem:[%s166 + $0x34] sm:$0xf]
      %v189 = vld [vmem:[%s166 + $0x38] sm:$0xf]
      %v190 = vld [vmem:[%s166 + $0x3c] sm:$0xf]
      %v191 = vld [vmem:[%s166 + $0x40] sm:$0xf]
      %v192 = vld [vmem:[%s166 + $0x44] sm:$0xf]
      %v193 = vld [vmem:[%s166 + $0x48] sm:$0xf]
      %v194 = vld [vmem:[%s166 + $0x4c] sm:$0xf]
      %v195 = vld [vmem:[%s166 + $0x50] sm:$0xf]
      %v196 = vld [vmem:[%s166 + $0x54] sm:$0xf]
      %v197 = vld [vmem:[%s166 + $0x58] sm:$0xf]
      %v198 = vld [vmem:[%s166 + $0x5c] sm:$0xf]
      %v199 = vld [vmem:[%s166 + $0x60] sm:$0xf]
      %v200 = vld [vmem:[%s166 + $0x64] sm:$0xf]
      %v201 = vld [vmem:[%s166 + $0x68] sm:$0xf]
      %v202 = vld [vmem:[%s166 + $0x6c] sm:$0xf]
      %v203 = vld [vmem:[%s166 + $0x70] sm:$0xf]
      %v204 = vld [vmem:[%s166 + $0x74] sm:$0xf]
      %v205 = vld [vmem:[%s166 + $0x78] sm:$0xf]
      %v206 = vld [vmem:[%s166 + $0x7c] sm:$0xf]
      %v207 = vld [vmem:[%s166 + $0x80] sm:$0xf]
      %v208 = vld [vmem:[%s166 + $0x84] sm:$0xf]
      %v209 = vld [vmem:[%s166 + $0x88] sm:$0xf]
      %v210 = vld [vmem:[%s166 + $0x8c] sm:$0xf]
      %v211 = vld [vmem:[%s166 + $0x90] sm:$0xf]
      %v212 = vld [vmem:[%s1] sm:$0xf]
      %v213 = vld [vmem:[%s1 + $0x4] sm:$0xf]
      %v214 = vld [vmem:[%s1 + $0x8] sm:$0xf]
      %v215 = vld [vmem:[%s1 + $0xc] sm:$0xf]
      %v216 = vld [vmem:[%s1 + $0x10] sm:$0xf]
      %v217 = vld [vmem:[%s1 + $0x14] sm:$0xf]
      %v218 = vld [vmem:[%s1 + $0x18] sm:$0xf]
      %v219 = vld [vmem:[%s1 + $0x1c] sm:$0xf]
      %v220 = vld [vmem:[%s1 + $0x20] sm:$0xf]
      %v221 = vld [vmem:[%s1 + $0x24] sm:$0xf]
      %v222 = vld [vmem:[%s1 + $0x28] sm:$0xf]
      %v223 = vld [vmem:[%s1 + $0x2c] sm:$0xf]
      %v224 = vld [vmem:[%s1 + $0x30] sm:$0xf]
      %v225 = vld [vmem:[%s1 + $0x34] sm:$0xf]
      %v226 = vld [vmem:[%s1 + $0x38] sm:$0xf]
      %v227 = vld [vmem:[%s1 + $0x3c] sm:$0xf]
      %v228 = vld [vmem:[%s2] sm:$0x1]
      %v230 = vlaneseq
      %v231 = vshrl.u32 %v230, 7
      %v232 = vsub.s32 0, %v231
      %v233 = vrot.slane %v228, %v232
      %v272 = vunpack.c.l.b16 %v175
      %v273 = vunpack.c.l.b16 %v176
      %v274 = vunpack.c.l.b16 %v177
      %v275 = vunpack.c.l.b16 %v178
      %v276 = vunpack.c.l.b16 %v179
      %v277 = vunpack.c.l.b16 %v180
      %v278 = vunpack.c.l.b16 %v181
      %v279 = vunpack.c.l.b16 %v182
      %v280 = vunpack.c.l.b16 %v183
      %v281 = vunpack.c.l.b16 %v184
      %v282 = vunpack.c.l.b16 %v185
      %v283 = vunpack.c.l.b16 %v186
      %v284 = vunpack.c.l.b16 %v187
      %v285 = vunpack.c.l.b16 %v188
      %v286 = vunpack.c.l.b16 %v189
      %v287 = vunpack.c.l.b16 %v190
      %v288 = vunpack.c.l.b16 %v191
      %v289 = vunpack.c.l.b16 %v192
      %v290 = vunpack.c.l.b16 %v193
      %v291 = vunpack.c.l.b16 %v194
      %v292 = vunpack.c.l.b16 %v195
      %v293 = vunpack.c.l.b16 %v196
      %v294 = vunpack.c.l.b16 %v197
      %v295 = vunpack.c.l.b16 %v198
      %v296 = vunpack.c.l.b16 %v199
      %v297 = vunpack.c.l.b16 %v200
      %v298 = vunpack.c.l.b16 %v201
      %v299 = vunpack.c.l.b16 %v202
      %v300 = vunpack.c.l.b16 %v203
      %v301 = vunpack.c.l.b16 %v204
      %v302 = vunpack.c.l.b16 %v205
      %v303 = vunpack.c.l.b16 %v206
      %v304 = vunpack.c.l.b16 %v207
      %v305 = vunpack.c.l.b16 %v208
      %v306 = vunpack.c.l.b16 %v209
      %v307 = vunpack.c.l.b16 %v210
      %v308 = vunpack.c.l.b16 %v211
      %v309 = vpack.c.b16 %v273, %v272
      %v310 = vpack.c.b16 %v275, %v274
      %v311 = vpack.c.b16 %v277, %v276
      %v312 = vpack.c.b16 %v279, %v278
      %v313 = vpack.c.b16 %v281, %v280
      %v314 = vpack.c.b16 %v283, %v282
      %v315 = vpack.c.b16 %v285, %v284
      %v316 = vpack.c.b16 %v287, %v286
      %v317 = vpack.c.b16 %v289, %v288
      %v318 = vpack.c.b16 %v291, %v290
      %v319 = vpack.c.b16 %v293, %v292
      %v320 = vpack.c.b16 %v295, %v294
      %v321 = vpack.c.b16 %v297, %v296
      %v322 = vpack.c.b16 %v299, %v298
      %v323 = vpack.c.b16 %v301, %v300
      %v324 = vpack.c.b16 %v303, %v302
      %v325 = vpack.c.b16 %v305, %v304
      %v326 = vpack.c.b16 %v307, %v306
      %v327 = vpack.c.b16 %v308, %v308
      %v363 = vunpack.c.l.b16 %v212
      %v364 = vunpack.c.l.b16 %v213
      %v365 = vunpack.c.l.b16 %v214
      %v366 = vunpack.c.l.b16 %v215
      %v367 = vunpack.c.l.b16 %v216
      %v368 = vunpack.c.l.b16 %v217
      %v369 = vunpack.c.l.b16 %v218
      %v370 = vunpack.c.l.b16 %v219
      %v371 = vunpack.c.l.b16 %v220
      %v372 = vunpack.c.l.b16 %v221
      %v373 = vunpack.c.l.b16 %v222
      %v374 = vunpack.c.l.b16 %v223
      %v375 = vunpack.c.l.b16 %v224
      %v376 = vunpack.c.l.b16 %v225
      %v377 = vunpack.c.l.b16 %v226
      %v378 = vunpack.c.l.b16 %v227
      %v379 = vpack.c.b16 %v364, %v363
      %v380 = vpack.c.b16 %v366, %v365
      %v381 = vpack.c.b16 %v368, %v367
      %v382 = vpack.c.b16 %v370, %v369
      %v383 = vpack.c.b16 %v372, %v371
      %v384 = vpack.c.b16 %v374, %v373
      %v385 = vpack.c.b16 %v376, %v375
      %v386 = vpack.c.b16 %v378, %v377
      %395 = vmatprep.subr.bf16.mxu0 0
      %396 = vmatpush1.bf16.msra.mxu0 %v379
      %397 = vmatprep.subr.bf16.mxu0 0
      %398 = vmatpush1.bf16.msra.mxu0 %v380
      %399 = vmatprep.subr.bf16.mxu0 0
      %400 = vmatpush1.bf16.msra.mxu0 %v381
      %401 = vmatprep.subr.bf16.mxu0 0
      %402 = vmatpush1.bf16.msra.mxu0 %v382
      %403 = vmatprep.subr.bf16.mxu0 0
      %404 = vmatpush1.bf16.msra.mxu0 %v383
      %405 = vmatprep.subr.bf16.mxu0 0
      %406 = vmatpush1.bf16.msra.mxu0 %v384
      %407 = vmatprep.subr.bf16.mxu0 0
      %408 = vmatpush1.bf16.msra.mxu0 %v385
      %409 = vmatprep.subr.bf16.mxu0 0
      %410 = vmatpush1.bf16.msra.mxu0 %v386
      %411 = vmatprep.subr.bf16.mxu0 0
      %412 = vmatpush1.bf16.msra.mxu0 0
      %413 = vmatprep.subr.bf16.mxu0 0
      %414 = vmatpush1.bf16.msra.mxu0 0
      %415 = vmatprep.subr.bf16.mxu0 0
      %416 = vmatpush1.bf16.msra.mxu0 0
      %417 = vmatprep.subr.bf16.mxu0 0
      %418 = vmatpush1.bf16.msra.mxu0 0
      %419 = vmatprep.subr.bf16.mxu0 0
      %420 = vmatpush1.bf16.msra.mxu0 0
      %421 = vmatprep.subr.bf16.mxu0 0
      %422 = vmatpush1.bf16.msra.mxu0 0
      %423 = vmatprep.subr.bf16.mxu0 0
      %424 = vmatpush1.bf16.msra.mxu0 0
      %425 = vmatprep.subr.bf16.mxu0 0
      %426 = vmatpush1.bf16.msra.mxu0 0
      %427 = vmatprep.mubr.bf16.mxu0 0
      %428 = vmatmul.mubr.bf16.gmra.mrb[0].mxu0 %v309
      %v429 = vpop.f32.mrb[0].mxu0
      %v430 = vadd.f32 %v233, %v429
      %v431 = vpop.f32.mrb[0].mxu0
      %v432 = vpop.f32.mrb[0].mxu0
      %v433 = vadd.f32 %v233, %v432
      %v434 = vpop.f32.mrb[0].mxu0
      %435 = vmatprep.mubr.bf16.mxu0 0
      %436 = vmatmul.mubr.bf16.gmra.mrb[0].mxu0 %v310
      %v437 = vpop.f32.mrb[0].mxu0
      %v438 = vadd.f32 %v233, %v437
      %v439 = vpop.f32.mrb[0].mxu0
      %v440 = vpop.f32.mrb[0].mxu0
      %v441 = vadd.f32 %v233, %v440
      %v442 = vpop.f32.mrb[0].mxu0
      %443 = vmatprep.mubr.bf16.mxu0 0
      %444 = vmatmul.mubr.bf16.gmra.mrb[0].mxu0 %v311
      %v445 = vpop.f32.mrb[0].mxu0
      %v446 = vadd.f32 %v233, %v445
      %v447 = vpop.f32.mrb[0].mxu0
      %v448 = vpop.f32.mrb[0].mxu0
      %v449 = vadd.f32 %v233, %v448
      %v450 = vpop.f32.mrb[0].mxu0
      %451 = vmatprep.mubr.bf16.mxu0 0
      %452 = vmatmul.mubr.bf16.gmra.mrb[0].mxu0 %v312
      %v453 = vpop.f32.mrb[0].mxu0
      %v454 = vadd.f32 %v233, %v453
      %v455 = vpop.f32.mrb[0].mxu0
      %v456 = vpop.f32.mrb[0].mxu0
      %v457 = vadd.f32 %v233, %v456
      %v458 = vpop.f32.mrb[0].mxu0
      %459 = vmatprep.mubr.bf16.mxu0 0
      %460 = vmatmul.mubr.bf16.gmra.mrb[0].mxu0 %v313
      %v461 = vpop.f32.mrb[0].mxu0
      %v462 = vadd.f32 %v233, %v461
      %v463 = vpop.f32.mrb[0].mxu0
      %v464 = vpop.f32.mrb[0].mxu0
      %v465 = vadd.f32 %v233, %v464
      %v466 = vpop.f32.mrb[0].mxu0
      %467 = vmatprep.mubr.bf16.mxu0 0
      %468 = vmatmul.mubr.bf16.gmra.mrb[0].mxu0 %v314
      %v469 = vpop.f32.mrb[0].mxu0
      %v470 = vadd.f32 %v233, %v469
      %v471 = vpop.f32.mrb[0].mxu0
      %v472 = vpop.f32.mrb[0].mxu0
      %v473 = vadd.f32 %v233, %v472
      %v474 = vpop.f32.mrb[0].mxu0
      %475 = vmatprep.mubr.bf16.mxu0 0
      %476 = vmatmul.mubr.bf16.gmra.mrb[0].mxu0 %v315
      %v477 = vpop.f32.mrb[0].mxu0
      %v478 = vadd.f32 %v233, %v477
      %v479 = vpop.f32.mrb[0].mxu0
      %v480 = vpop.f32.mrb[0].mxu0
      %v481 = vadd.f32 %v233, %v480
      %v482 = vpop.f32.mrb[0].mxu0
      %483 = vmatprep.mubr.bf16.mxu0 0
      %484 = vmatmul.mubr.bf16.gmra.mrb[0].mxu0 %v316
      %v485 = vpop.f32.mrb[0].mxu0
      %v486 = vadd.f32 %v233, %v485
      %v487 = vpop.f32.mrb[0].mxu0
      %v488 = vpop.f32.mrb[0].mxu0
      %v489 = vadd.f32 %v233, %v488
      %v490 = vpop.f32.mrb[0].mxu0
      %491 = vmatprep.mubr.bf16.mxu0 0
      %492 = vmatmul.mubr.bf16.gmra.mrb[0].mxu0 %v317
      %v493 = vpop.f32.mrb[0].mxu0
      %v494 = vadd.f32 %v233, %v493
      %v495 = vpop.f32.mrb[0].mxu0
      %v496 = vpop.f32.mrb[0].mxu0
      %v497 = vadd.f32 %v233, %v496
      %v498 = vpop.f32.mrb[0].mxu0
      %499 = vmatprep.mubr.bf16.mxu0 0
      %500 = vmatmul.mubr.bf16.gmra.mrb[0].mxu0 %v318
      %v501 = vpop.f32.mrb[0].mxu0
      %v502 = vadd.f32 %v233, %v501
      %v503 = vpop.f32.mrb[0].mxu0
      %v504 = vpop.f32.mrb[0].mxu0
      %v505 = vadd.f32 %v233, %v504
      %v506 = vpop.f32.mrb[0].mxu0
      %507 = vmatprep.mubr.bf16.mxu0 0
      %508 = vmatmul.mubr.bf16.gmra.mrb[0].mxu0 %v319
      %v509 = vpop.f32.mrb[0].mxu0
      %v510 = vadd.f32 %v233, %v509
      %v511 = vpop.f32.mrb[0].mxu0
      %v512 = vpop.f32.mrb[0].mxu0
      %v513 = vadd.f32 %v233, %v512
      %v514 = vpop.f32.mrb[0].mxu0
      %515 = vmatprep.mubr.bf16.mxu0 0
      %516 = vmatmul.mubr.bf16.gmra.mrb[0].mxu0 %v320
      %v517 = vpop.f32.mrb[0].mxu0
      %v518 = vadd.f32 %v233, %v517
      %v519 = vpop.f32.mrb[0].mxu0
      %v520 = vpop.f32.mrb[0].mxu0
      %v521 = vadd.f32 %v233, %v520
      %v522 = vpop.f32.mrb[0].mxu0
      %523 = vmatprep.mubr.bf16.mxu0 0
      %524 = vmatmul.mubr.bf16.gmra.mrb[0].mxu0 %v321
      %v525 = vpop.f32.mrb[0].mxu0
      %v526 = vadd.f32 %v233, %v525
      %v527 = vpop.f32.mrb[0].mxu0
      %v528 = vpop.f32.mrb[0].mxu0
      %v529 = vadd.f32 %v233, %v528
      %v530 = vpop.f32.mrb[0].mxu0
      %531 = vmatprep.mubr.bf16.mxu0 0
      %532 = vmatmul.mubr.bf16.gmra.mrb[0].mxu0 %v322
      %v533 = vpop.f32.mrb[0].mxu0
      %v534 = vadd.f32 %v233, %v533
      %v535 = vpop.f32.mrb[0].mxu0
      %v536 = vpop.f32.mrb[0].mxu0
      %v537 = vadd.f32 %v233, %v536
      %v538 = vpop.f32.mrb[0].mxu0
      %539 = vmatprep.mubr.bf16.mxu0 0
      %540 = vmatmul.mubr.bf16.gmra.mrb[0].mxu0 %v323
      %v541 = vpop.f32.mrb[0].mxu0
      %v542 = vadd.f32 %v233, %v541
      %v543 = vpop.f32.mrb[0].mxu0
      %v544 = vpop.f32.mrb[0].mxu0
      %v545 = vadd.f32 %v233, %v544
      %v546 = vpop.f32.mrb[0].mxu0
      %547 = vmatprep.mubr.bf16.mxu0 0
      %548 = vmatmul.mubr.bf16.gmra.mrb[0].mxu0 %v324
      %v549 = vpop.f32.mrb[0].mxu0
      %v550 = vadd.f32 %v233, %v549
      %v551 = vpop.f32.mrb[0].mxu0
      %v552 = vpop.f32.mrb[0].mxu0
      %v553 = vadd.f32 %v233, %v552
      %v554 = vpop.f32.mrb[0].mxu0
      %555 = vmatprep.mubr.bf16.mxu0 0
      %556 = vmatmul.mubr.bf16.gmra.mrb[0].mxu0 %v325
      %v557 = vpop.f32.mrb[0].mxu0
      %v558 = vadd.f32 %v233, %v557
      %v559 = vpop.f32.mrb[0].mxu0
      %v560 = vpop.f32.mrb[0].mxu0
      %v561 = vadd.f32 %v233, %v560
      %v562 = vpop.f32.mrb[0].mxu0
      %563 = vmatprep.mubr.bf16.mxu0 0
      %564 = vmatmul.mubr.bf16.gmra.mrb[0].mxu0 %v326
      %v565 = vpop.f32.mrb[0].mxu0
      %v566 = vadd.f32 %v233, %v565
      %v567 = vpop.f32.mrb[0].mxu0
      %v568 = vpop.f32.mrb[0].mxu0
      %v569 = vadd.f32 %v233, %v568
      %v570 = vpop.f32.mrb[0].mxu0
      %571 = vmatprep.mubr.bf16.mxu0 0
      %572 = vmatmul.mubr.bf16.gmra.mrb[0].mxu0 %v327
      %v573 = vpop.f32.mrb[0].mxu0
      %v574 = vadd.f32 %v233, %v573
      %v575 = vpop.f32.mrb[0].mxu0
      %v576 = vpop.f32.mrb[0].mxu0
      %v577 = vpop.f32.mrb[0].mxu0
      %578 = vdwg.mxu0
      %579 = vst [vmem:[%s172] sm:$0xff] %v430
      %580 = vst [vmem:[%s172 + $0x8] sm:$0xff] %v433
      %581 = vst [vmem:[%s172 + $0x10] sm:$0xff] %v438
      %582 = vst [vmem:[%s172 + $0x18] sm:$0xff] %v441
      %583 = vst [vmem:[%s172 + $0x20] sm:$0xff] %v446
      %584 = vst [vmem:[%s172 + $0x28] sm:$0xff] %v449
      %585 = vst [vmem:[%s172 + $0x30] sm:$0xff] %v454
      %586 = vst [vmem:[%s172 + $0x38] sm:$0xff] %v457
      %587 = vst [vmem:[%s172 + $0x40] sm:$0xff] %v462
      %588 = vst [vmem:[%s172 + $0x48] sm:$0xff] %v465
      %589 = vst [vmem:[%s172 + $0x50] sm:$0xff] %v470
      %590 = vst [vmem:[%s172 + $0x58] sm:$0xff] %v473
      %591 = vst [vmem:[%s172 + $0x60] sm:$0xff] %v478
      %592 = vst [vmem:[%s172 + $0x68] sm:$0xff] %v481
      %593 = vst [vmem:[%s172 + $0x70] sm:$0xff] %v486
      %594 = vst [vmem:[%s172 + $0x78] sm:$0xff] %v489
      %595 = vst [vmem:[%s172 + $0x80] sm:$0xff] %v494
      %596 = vst [vmem:[%s172 + $0x88] sm:$0xff] %v497
      %597 = vst [vmem:[%s172 + $0x90] sm:$0xff] %v502
      %598 = vst [vmem:[%s172 + $0x98] sm:$0xff] %v505
      %599 = vst [vmem:[%s172 + $0xa0] sm:$0xff] %v510
      %600 = vst [vmem:[%s172 + $0xa8] sm:$0xff] %v513
      %601 = vst [vmem:[%s172 + $0xb0] sm:$0xff] %v518
      %602 = vst [vmem:[%s172 + $0xb8] sm:$0xff] %v521
      %603 = vst [vmem:[%s172 + $0xc0] sm:$0xff] %v526
      %604 = vst [vmem:[%s172 + $0xc8] sm:$0xff] %v529
      %605 = vst [vmem:[%s172 + $0xd0] sm:$0xff] %v534
      %606 = vst [vmem:[%s172 + $0xd8] sm:$0xff] %v537
      %607 = vst [vmem:[%s172 + $0xe0] sm:$0xff] %v542
      %608 = vst [vmem:[%s172 + $0xe8] sm:$0xff] %v545
      %609 = vst [vmem:[%s172 + $0xf0] sm:$0xff] %v550
      %610 = vst [vmem:[%s172 + $0xf8] sm:$0xff] %v553
      %611 = vst [vmem:[%s172 + $0x100] sm:$0xff] %v558
      %612 = vst [vmem:[%s172 + $0x108] sm:$0xff] %v561
      %613 = vst [vmem:[%s172 + $0x110] sm:$0xff] %v566
      %614 = vst [vmem:[%s172 + $0x118] sm:$0xff] %v569
      %615 = vst [vmem:[%s172 + $0x120] sm:$0xff] %v574
      %s616 = smul.u32 37, %s14
      %p617 = scmp.lt.s32.totalorder %s616, 73
      %s618 = scalar_select %p617, %s616, 73
      %s619 = smul.addr %s618, 8
      %s620 = scalar_lea.vmem %s3, %s619
      // Predicated region
      $region33: #{generator_forward.9} parent=31 // pred_check
        %p621 = pneg %p100
      $region34: #{generator_forward.9} parent=31 // pred_check_branch
        %623 = sbr.rel (%p621) target = $region36
      $region35: #{generator_forward.9} parent=31 // pred_region
        %s624 = smul.u32 37, %s14
      $region36: #{generator_forward.9} parent=31 // pred_fallthru
        _
    $region32: #{generator_forward.9} parent=5 // pred_fallthru
      _
    %p625 = scmp.le.s32.totalorder 2, %s9
    // Predicated region
    $region37: #{generator_forward.9} parent=5 // pred_check
      %p626 = pneg %p625
    $region38: #{generator_forward.9} parent=5 // pred_check_branch
      %628 = sbr.rel (%p626) target = $region40
    $region39: #{generator_forward.9} parent=5 // pred_region
      %s629 = ssub.s32 %s9, 2
      // Predicated region
      $region41: #{generator_forward.9} parent=39 // pred_check
        %p630 = pneg %p106
      $region42: #{generator_forward.9} parent=39 // pred_check_branch
        %632 = sbr.rel (%p630) target = $region44
      $region43: #{generator_forward.9} parent=39 // pred_region
        %s633 = smul.u32 37, %s15
        %p634 = scmp.lt.s32.totalorder %s633, 73
        %s635 = scalar_select %p634, %s633, 73
        %s636 = smul.addr %s635, 8
        %s637 = scalar_lea.vmem %s3, %s636
      $region44: #{generator_forward.9} parent=39 // pred_fallthru
        _
    $region40: #{generator_forward.9} parent=5 // pred_fallthru
      _
  $region6: #{generator_forward.9} parent=0 // loop_footer
    %s13 = sadd.s32 1, %s9
  $region7: #{generator_forward.9} parent=0 // loop_footer_branch
    %8 = sbr.rel target = $region3
  $region8: #{generator_forward.9} parent=0 // loop_exit
    _

</llo_original>
